<compile_context>
chip_gen: v7x
topology: tpu7x:2x2x1
jax: 0.10.0
libtpu: 0.0.40
codegen_flags: <defaults>
</compile_context>

<pallas_src>
import functools
import math

import jax
import jax.numpy as jnp
from jax import lax
from jax.experimental import pallas as pl
from jax.experimental.pallas import tpu as pltpu


_LN_EPS = 1e-5
_NEG_INF = -1e30
# Scoped VMEM limit: large enough for 512-row tiles with bf16 weights, with headroom
# below v7x's 64 MiB physical VMEM (v5e/v6e have 128 MiB).
_VMEM_LIMIT = 48 * 1024 * 1024


def _row_tile(m, target=512):
    """Row-block size: full extent when small, fixed multiple-of-8 tile otherwise."""
    return m if m <= target else target


def _cparams(sem):
    return pltpu.CompilerParams(dimension_semantics=sem,
                                vmem_limit_bytes=_VMEM_LIMIT)


def _layernorm(y, g, b):
    mu = jnp.mean(y, axis=-1, keepdims=True)
    var = jnp.mean((y - mu) ** 2, axis=-1, keepdims=True)
    return (y - mu) * lax.rsqrt(var + _LN_EPS) * g + b


# ---------------------------------------------------------------------------
# Kernel bodies
# ---------------------------------------------------------------------------

def _kv_proj_kernel(x_ref, wk_ref, bk_ref, wv_ref, bv_ref, k_ref, v_ref, *, n_head):
    """Head-major K/V projection: x (t, D) -> K (H, t, d_k), V (H, t, d_v), bf16."""
    x = x_ref[0].astype(jnp.bfloat16)                      # (t, D)
    for h in range(n_head):                                # static unroll, heads few
        kh = jnp.dot(x, wk_ref[h], preferred_element_type=jnp.float32) + bk_ref[h]
        vh = jnp.dot(x, wv_ref[h], preferred_element_type=jnp.float32) + bv_ref[h]
        k_ref[0, h] = kh.astype(jnp.bfloat16)
        v_ref[0, h] = vh.astype(jnp.bfloat16)


def _attn_kernel(xq_ref, k_ref, v_ref, wq_ref, bq_ref, wo_ref, bo_ref,
                 gamma_ref, beta_ref, o_ref, *, n_head, scale, causal, sq_total):
    """Fused per-(batch, q-block): Q-proj -> attention -> out-proj + residual + LN."""
    x = xq_ref[0]                                          # (tq, D) f32, residual
    xb = x.astype(jnp.bfloat16)
    tq = x.shape[0]
    sk = k_ref.shape[2]

    if causal:
        qi = pl.program_id(1)
        row = lax.broadcasted_iota(jnp.int32, (tq, sk), 0) + qi * tq
        col = lax.broadcasted_iota(jnp.int32, (tq, sk), 1)
        mask_add = jnp.where(col <= row + (sk - sq_total), 0.0, _NEG_INF)

    # Accumulate out-projection per head directly into the residual (f32); the head
    # permutation is folded into the head-major Wo rows, so no concat / column stores.
    y = x + bo_ref[...]                                    # (tq, D) f32
    for h in range(n_head):                                # static unroll
        qh = (jnp.dot(xb, wq_ref[h], preferred_element_type=jnp.float32)
              + bq_ref[h]) * scale                         # (tq, d_k) f32
        kh = k_ref[0, h]                                   # (sk, d_k) bf16
        vh = v_ref[0, h]                                   # (sk, d_v) bf16
        # 'qd,kd->qk' without an explicit K transpose.
        s = lax.dot_general(qh.astype(jnp.bfloat16), kh,
                            (((1,), (1,)), ((), ())),
                            preferred_element_type=jnp.float32)   # (tq, sk)
        if causal:
            s = s + mask_add
        m = jnp.max(s, axis=-1, keepdims=True)
        p = jnp.exp(s - m)
        denom = jnp.sum(p, axis=-1, keepdims=True)
        p = p * pl.reciprocal(denom, approx=True)          # EUP slot
        ctx = jnp.dot(p.astype(jnp.bfloat16), vh,
                      preferred_element_type=jnp.float32)  # (tq, d_v)
        y = y + jnp.dot(ctx.astype(jnp.bfloat16), wo_ref[h],
                        preferred_element_type=jnp.float32)
    o_ref[0] = _layernorm(y, gamma_ref[...], beta_ref[...])
    # TODO(synk): for very long Sk replace the full-K softmax with an online-softmax
    #             (flash) loop over KV tiles with an accumulator scratch.


def _ffn_kernel(x_ref, w1_ref, b1_ref, w2_ref, b2_ref, gamma_ref, beta_ref, o_ref):
    """Fused: x @ W1 + b1 -> relu -> @ W2 + b2 -> + residual(x) -> LayerNorm."""
    x = x_ref[...]                                         # (tm, D) f32
    h = jnp.dot(x.astype(jnp.bfloat16), w1_ref[...],
                preferred_element_type=jnp.float32) + b1_ref[...]
    h = jnp.maximum(h, 0.0)
    y = jnp.dot(h.astype(jnp.bfloat16), w2_ref[...],
                preferred_element_type=jnp.float32) + b2_ref[...] + x
    o_ref[...] = _layernorm(y, gamma_ref[...], beta_ref[...])
    # TODO(synk): for large dim_inner, tile the hidden dim with a K-axis grid and an
    #             f32 accumulator scratch instead of holding W1, W2 and h at once.


# ---------------------------------------------------------------------------
# pallas_call wrappers
# ---------------------------------------------------------------------------

def kv_project(x, p):
    """x: (B, S, D) f32 -> K: (B, H, S, d_k) bf16, V: (B, H, S, d_v) bf16."""
    B, S, D = x.shape
    H, _, dk = p["wk"].shape
    dv = p["wv"].shape[2]
    t = _row_tile(S)
    kernel = functools.partial(_kv_proj_kernel, n_head=H)
    return pl.pallas_call(
        kernel,
        out_shape=(jax.ShapeDtypeStruct((B, H, S, dk), jnp.bfloat16),
                   jax.ShapeDtypeStruct((B, H, S, dv), jnp.bfloat16)),
        grid=(B, pl.cdiv(S, t)),
        in_specs=[
            pl.BlockSpec((1, t, D), lambda b, i: (b, i, 0)),
            pl.BlockSpec((H, D, dk), lambda b, i: (0, 0, 0)),
            pl.BlockSpec((H, 1, dk), lambda b, i: (0, 0, 0)),
            pl.BlockSpec((H, D, dv), lambda b, i: (0, 0, 0)),
            pl.BlockSpec((H, 1, dv), lambda b, i: (0, 0, 0)),
        ],
        out_specs=(
            pl.BlockSpec((1, H, t, dk), lambda b, i: (b, 0, i, 0)),
            pl.BlockSpec((1, H, t, dv), lambda b, i: (b, 0, i, 0)),
        ),
        compiler_params=_cparams(("parallel", "parallel")),
    )(x, p["wk"], p["bk"], p["wv"], p["bv"])


def fused_attention(xq, k, v, p, *, causal):
    """Fused Q-proj + attention + out-proj + residual + LayerNorm, grid=(B, Sq//tq)."""
    B, Sq, D = xq.shape
    H, _, dk = p["wq"].shape
    Sk = k.shape[2]
    dv = v.shape[3]
    tq = _row_tile(Sq, target=256)
    kernel = functools.partial(_attn_kernel, n_head=H, scale=1.0 / math.sqrt(dk),
                               causal=causal, sq_total=Sq)
    return pl.pallas_call(
        kernel,
        out_shape=jax.ShapeDtypeStruct((B, Sq, D), jnp.float32),
        grid=(B, pl.cdiv(Sq, tq)),
        in_specs=[
            pl.BlockSpec((1, tq, D), lambda b, i: (b, i, 0)),
            pl.BlockSpec((1, H, Sk, dk), lambda b, i: (b, 0, 0, 0)),
            pl.BlockSpec((1, H, Sk, dv), lambda b, i: (b, 0, 0, 0)),
            pl.BlockSpec((H, D, dk), lambda b, i: (0, 0, 0)),
            pl.BlockSpec((H, 1, dk), lambda b, i: (0, 0, 0)),
            pl.BlockSpec((H, dv, D), lambda b, i: (0, 0, 0)),
            pl.BlockSpec((1, D), lambda b, i: (0, 0)),
            pl.BlockSpec((1, D), lambda b, i: (0, 0)),
            pl.BlockSpec((1, D), lambda b, i: (0, 0)),
        ],
        out_specs=pl.BlockSpec((1, tq, D), lambda b, i: (b, i, 0)),
        compiler_params=_cparams(("parallel", "parallel")),
    )(xq, k, v, p["wq"], p["bq"], p["wo"], p["bo"], p["ln_g"], p["ln_b"])


def ffn_residual_layernorm(x, p):
    M, D = x.shape
    Hin = p["w1"].shape[1]
    tm = _row_tile(M)
    return pl.pallas_call(
        _ffn_kernel,
        out_shape=jax.ShapeDtypeStruct((M, D), jnp.float32),
        grid=(pl.cdiv(M, tm),),
        in_specs=[
            pl.BlockSpec((tm, D), lambda i: (i, 0)),
            pl.BlockSpec((D, Hin), lambda i: (0, 0)),
            pl.BlockSpec((1, Hin), lambda i: (0, 0)),
            pl.BlockSpec((Hin, D), lambda i: (0, 0)),
            pl.BlockSpec((1, D), lambda i: (0, 0)),
            pl.BlockSpec((1, D), lambda i: (0, 0)),
            pl.BlockSpec((1, D), lambda i: (0, 0)),
        ],
        out_specs=pl.BlockSpec((tm, D), lambda i: (i, 0)),
        compiler_params=_cparams(("parallel",)),
    )(x, p["w1"], p["b1"], p["w2"], p["b2"], p["ln_g"], p["ln_b"])


# ---------------------------------------------------------------------------
# Module composition
# ---------------------------------------------------------------------------

def multihead_attention(kv_src, q_src, p, *, causal):
    """Assumed (k, v, q) call order; key source == value source in this layer."""
    k, v = kv_project(kv_src, p)
    return fused_attention(q_src, k, v, p, causal=causal)


def decoder_layer(dec_in, enc_out, packed_params, *, dec_atten_mask=True,
                  coder_mask=None):
    if coder_mask is not None:
        # TODO(synk): key-padding-mask semantics for coder_mask are not implemented.
        raise NotImplementedError("coder_mask (padding mask) is not supported")
    B, S, D = dec_in.shape
    # atten1: self-attention over dec_in (causal mask when dec_atten_mask=True)
    dec_out = multihead_attention(dec_in, dec_in, packed_params["atten1"],
                                  causal=bool(dec_atten_mask))
    # atten2: cross-attention, k = v = enc_out, q = dec_out, no mask (coder_mask=None)
    dec_out = multihead_attention(enc_out, dec_out, packed_params["atten2"],
                                  causal=False)
    # FFN (fused with residual + LayerNorm)
    out = ffn_residual_layernorm(dec_out.reshape(B * S, D), packed_params["FFN"])
    return out.reshape(B, S, D)


# ---------------------------------------------------------------------------
# Deterministic parameter initialization + one-time repacking
# ---------------------------------------------------------------------------

def _lin_init(key, d_in, d_out):
    w = jax.random.normal(key, (d_in, d_out), jnp.float32) / jnp.sqrt(
        jnp.float32(d_in))
    b = jnp.zeros((d_out,), jnp.float32)
    return w, b


def init_params(key, dim_model, dim_inner, n_head, d_k, d_v):
    ks = jax.random.split(key, 12)

    def attn_params(k4):
        k0, k1, k2, k3 = k4
        wq, bq = _lin_init(k0, dim_model, n_head * d_k)
        wk, bk = _lin_init(k1, dim_model, n_head * d_k)
        wv, bv = _lin_init(k2, dim_model, n_head * d_v)
        wo, bo = _lin_init(k3, n_head * d_v, dim_model)
        return dict(
            wq=wq, bq=bq, wk=wk, bk=bk, wv=wv, bv=bv, wo=wo, bo=bo,
            ln_g=jnp.ones((dim_model,), jnp.float32),
            ln_b=jnp.zeros((dim_model,), jnp.float32),
        )

    w1, b1 = _lin_init(ks[8], dim_model, dim_inner)
    w2, b2 = _lin_init(ks[9], dim_inner, dim_model)
    return {
        "atten1": attn_params(ks[0:4]),
        "atten2": attn_params(ks[4:8]),
        "FFN": dict(
            w1=w1, b1=b1, w2=w2, b2=b2,
            ln_g=jnp.ones((dim_model,), jnp.float32),
            ln_b=jnp.zeros((dim_model,), jnp.float32),
        ),
    }


def pack_params(params, *, dim_model, n_head, d_k, d_v):
    """One-time repack (outside the per-step path): head-major bf16 weight layouts,
    2-D biases / LayerNorm params.  No per-call weight concat/reshape remains."""
    D, H = dim_model, n_head

    def pack_attn(p):
        return dict(
            wq=p["wq"].reshape(D, H, d_k).transpose(1, 0, 2).astype(jnp.bfloat16),
            bq=p["bq"].reshape(H, 1, d_k),
            wk=p["wk"].reshape(D, H, d_k).transpose(1, 0, 2).astype(jnp.bfloat16),
            bk=p["bk"].reshape(H, 1, d_k),
            wv=p["wv"].reshape(D, H, d_v).transpose(1, 0, 2).astype(jnp.bfloat16),
            bv=p["bv"].reshape(H, 1, d_v),
            wo=p["wo"].reshape(H, d_v, D).astype(jnp.bfloat16),
            bo=p["bo"].reshape(1, D),
            ln_g=p["ln_g"].reshape(1, D),
            ln_b=p["ln_b"].reshape(1, D),
        )

    pf = params["FFN"]
    Hin = pf["w1"].shape[1]
    return dict(
        atten1=pack_attn(params["atten1"]),
        atten2=pack_attn(params["atten2"]),
        FFN=dict(
            w1=pf["w1"].astype(jnp.bfloat16), b1=pf["b1"].reshape(1, Hin),
            w2=pf["w2"].astype(jnp.bfloat16), b2=pf["b2"].reshape(1, D),
            ln_g=pf["ln_g"].reshape(1, D), ln_b=pf["ln_b"].reshape(1, D),
        ),
    )


# ---------------------------------------------------------------------------
# Main
# ---------------------------------------------------------------------------

if __name__ == "__main__":
    B, S = 2, 8
    dim_model, dim_inner = 32, 64
    n_head, d_k, d_v = 4, 8, 8

    root = jax.random.PRNGKey(0)
    k_params, k_dec, k_enc = jax.random.split(root, 3)

    params = init_params(k_params, dim_model, dim_inner, n_head, d_k, d_v)
    packed = pack_params(params, dim_model=dim_model, n_head=n_head,
                         d_k=d_k, d_v=d_v)

    dec_in = jax.random.normal(k_dec, (B, S, dim_model), jnp.float32)
    enc_out = jax.random.normal(k_enc, (B, S, dim_model), jnp.float32)

    fwd = jax.jit(functools.partial(decoder_layer, dec_atten_mask=True))
    out = jax.block_until_ready(fwd(dec_in, enc_out, packed))

    assert out.shape == (B, S, dim_model), out.shape
    assert out.dtype == jnp.float32
    assert bool(jnp.all(jnp.isfinite(out)))
    print("KERNEL_OK")
</pallas_src>

<mosaic_0001>
module attributes {stable_mosaic.version = 11 : i64} {
  func.func @_kv_proj_kernel(%arg0: i32, %arg1: i32, %arg2: memref<1x8x32xf32, #tpu.memory_space<vmem>>, %arg3: memref<4x32x8xbf16, #tpu.memory_space<vmem>>, %arg4: memref<4x1x8xf32, #tpu.memory_space<vmem>>, %arg5: memref<4x32x8xbf16, #tpu.memory_space<vmem>>, %arg6: memref<4x1x8xf32, #tpu.memory_space<vmem>>, %arg7: memref<1x4x8x8xbf16, #tpu.memory_space<vmem>>, %arg8: memref<1x4x8x8xbf16, #tpu.memory_space<vmem>>) attributes {dimension_semantics = [#tpu.dimension_semantics<parallel>, #tpu.dimension_semantics<parallel>], iteration_bounds = array<i64: 2, 1>, scalar_prefetch = 0 : i64, scratch_operands = 0 : i64, tpu.core_type = #tpu.core_type<tc>, window_params = [{transform_indices = @transform_0, window_bounds = array<i64: 1, 8, 32>}, {pipeline_mode = #tpu.pipeline_mode<synchronous>, transform_indices = @transform_1, window_bounds = array<i64: 4, 32, 8>}, {pipeline_mode = #tpu.pipeline_mode<synchronous>, transform_indices = @transform_2, window_bounds = array<i64: 4, 1, 8>}, {pipeline_mode = #tpu.pipeline_mode<synchronous>, transform_indices = @transform_3, window_bounds = array<i64: 4, 32, 8>}, {pipeline_mode = #tpu.pipeline_mode<synchronous>, transform_indices = @transform_4, window_bounds = array<i64: 4, 1, 8>}, {transform_indices = @transform_5, window_bounds = array<i64: 1, 4, 8, 8>}, {transform_indices = @transform_6, window_bounds = array<i64: 1, 4, 8, 8>}]} {
    %c0 = arith.constant 0 : index
    %c0_0 = arith.constant 0 : index
    %c0_1 = arith.constant 0 : index
    %0 = vector.load %arg2[%c0, %c0_0, %c0_1] : memref<1x8x32xf32, #tpu.memory_space<vmem>>, vector<1x8x32xf32>
    %1 = vector.shape_cast %0 : vector<1x8x32xf32> to vector<8x32xf32>
    %2 = arith.truncf %1 : vector<8x32xf32> to vector<8x32xbf16>
    %c0_2 = arith.constant 0 : index
    %c0_3 = arith.constant 0 : index
    %c0_4 = arith.constant 0 : index
    %3 = vector.load %arg3[%c0_2, %c0_3, %c0_4] : memref<4x32x8xbf16, #tpu.memory_space<vmem>>, vector<1x32x8xbf16>
    %4 = vector.shape_cast %3 : vector<1x32x8xbf16> to vector<32x8xbf16>
    %cst = arith.constant dense<0.000000e+00> : vector<8x8xf32>
    %5 = tpu.matmul %2, %4, %cst {dimension_numbers = #tpu.dot_dimension_numbers<[1], [0], [0], [1], [0, 0, 1, 1], [], []>} : vector<8x32xbf16>, vector<32x8xbf16>, vector<8x8xf32> -> vector<8x8xf32>
    %c0_5 = arith.constant 0 : index
    %c0_6 = arith.constant 0 : index
    %c0_7 = arith.constant 0 : index
    %6 = vector.load %arg4[%c0_5, %c0_6, %c0_7] : memref<4x1x8xf32, #tpu.memory_space<vmem>>, vector<1x1x8xf32>
    %7 = vector.shape_cast %6 : vector<1x1x8xf32> to vector<1x8xf32>
    %8 = vector.broadcast %7 : vector<1x8xf32> to vector<8x8xf32>
    %9 = arith.addf %5, %8 : vector<8x8xf32>
    %c0_8 = arith.constant 0 : index
    %c0_9 = arith.constant 0 : index
    %c0_10 = arith.constant 0 : index
    %10 = vector.load %arg5[%c0_8, %c0_9, %c0_10] : memref<4x32x8xbf16, #tpu.memory_space<vmem>>, vector<1x32x8xbf16>
    %11 = vector.shape_cast %10 : vector<1x32x8xbf16> to vector<32x8xbf16>
    %cst_11 = arith.constant dense<0.000000e+00> : vector<8x8xf32>
    %12 = tpu.matmul %2, %11, %cst_11 {dimension_numbers = #tpu.dot_dimension_numbers<[1], [0], [0], [1], [0, 0, 1, 1], [], []>} : vector<8x32xbf16>, vector<32x8xbf16>, vector<8x8xf32> -> vector<8x8xf32>
    %c0_12 = arith.constant 0 : index
    %c0_13 = arith.constant 0 : index
    %c0_14 = arith.constant 0 : index
    %13 = vector.load %arg6[%c0_12, %c0_13, %c0_14] : memref<4x1x8xf32, #tpu.memory_space<vmem>>, vector<1x1x8xf32>
    %14 = vector.shape_cast %13 : vector<1x1x8xf32> to vector<1x8xf32>
    %15 = vector.broadcast %14 : vector<1x8xf32> to vector<8x8xf32>
    %16 = arith.addf %12, %15 : vector<8x8xf32>
    %17 = arith.truncf %9 : vector<8x8xf32> to vector<8x8xbf16>
    %c0_15 = arith.constant 0 : index
    %c0_16 = arith.constant 0 : index
    %c0_17 = arith.constant 0 : index
    %c0_18 = arith.constant 0 : index
    %18 = vector.load %arg7[%c0_15, %c0_16, %c0_17, %c0_18] : memref<1x4x8x8xbf16, #tpu.memory_space<vmem>>, vector<1x1x8x8xbf16>
    %19 = vector.shape_cast %18 : vector<1x1x8x8xbf16> to vector<8x8xbf16>
    %20 = vector.shape_cast %17 : vector<8x8xbf16> to vector<1x1x8x8xbf16>
    tpu.vector_store %arg7[%c0_15, %c0_16, %c0_17, %c0_18], %20 {strides = array<i32>} : memref<1x4x8x8xbf16, #tpu.memory_space<vmem>>, vector<1x1x8x8xbf16>,
    %21 = arith.truncf %16 : vector<8x8xf32> to vector<8x8xbf16>
    %c0_19 = arith.constant 0 : index
    %c0_20 = arith.constant 0 : index
    %c0_21 = arith.constant 0 : index
    %c0_22 = arith.constant 0 : index
    %22 = vector.load %arg8[%c0_19, %c0_20, %c0_21, %c0_22] : memref<1x4x8x8xbf16, #tpu.memory_space<vmem>>, vector<1x1x8x8xbf16>
    %23 = vector.shape_cast %22 : vector<1x1x8x8xbf16> to vector<8x8xbf16>
    %24 = vector.shape_cast %21 : vector<8x8xbf16> to vector<1x1x8x8xbf16>
    tpu.vector_store %arg8[%c0_19, %c0_20, %c0_21, %c0_22], %24 {strides = array<i32>} : memref<1x4x8x8xbf16, #tpu.memory_space<vmem>>, vector<1x1x8x8xbf16>,
    %c1 = arith.constant 1 : index
    %c0_23 = arith.constant 0 : index
    %c0_24 = arith.constant 0 : index
    %25 = vector.load %arg3[%c1, %c0_23, %c0_24] : memref<4x32x8xbf16, #tpu.memory_space<vmem>>, vector<1x32x8xbf16>
    %26 = vector.shape_cast %25 : vector<1x32x8xbf16> to vector<32x8xbf16>
    %cst_25 = arith.constant dense<0.000000e+00> : vector<8x8xf32>
    %27 = tpu.matmul %2, %26, %cst_25 {dimension_numbers = #tpu.dot_dimension_numbers<[1], [0], [0], [1], [0, 0, 1, 1], [], []>} : vector<8x32xbf16>, vector<32x8xbf16>, vector<8x8xf32> -> vector<8x8xf32>
    %c1_26 = arith.constant 1 : index
    %c0_27 = arith.constant 0 : index
    %c0_28 = arith.constant 0 : index
    %28 = vector.load %arg4[%c1_26, %c0_27, %c0_28] : memref<4x1x8xf32, #tpu.memory_space<vmem>>, vector<1x1x8xf32>
    %29 = vector.shape_cast %28 : vector<1x1x8xf32> to vector<1x8xf32>
    %30 = vector.broadcast %29 : vector<1x8xf32> to vector<8x8xf32>
    %31 = arith.addf %27, %30 : vector<8x8xf32>
    %c1_29 = arith.constant 1 : index
    %c0_30 = arith.constant 0 : index
    %c0_31 = arith.constant 0 : index
    %32 = vector.load %arg5[%c1_29, %c0_30, %c0_31] : memref<4x32x8xbf16, #tpu.memory_space<vmem>>, vector<1x32x8xbf16>
    %33 = vector.shape_cast %32 : vector<1x32x8xbf16> to vector<32x8xbf16>
    %cst_32 = arith.constant dense<0.000000e+00> : vector<8x8xf32>
    %34 = tpu.matmul %2, %33, %cst_32 {dimension_numbers = #tpu.dot_dimension_numbers<[1], [0], [0], [1], [0, 0, 1, 1], [], []>} : vector<8x32xbf16>, vector<32x8xbf16>, vector<8x8xf32> -> vector<8x8xf32>
    %c1_33 = arith.constant 1 : index
    %c0_34 = arith.constant 0 : index
    %c0_35 = arith.constant 0 : index
    %35 = vector.load %arg6[%c1_33, %c0_34, %c0_35] : memref<4x1x8xf32, #tpu.memory_space<vmem>>, vector<1x1x8xf32>
    %36 = vector.shape_cast %35 : vector<1x1x8xf32> to vector<1x8xf32>
    %37 = vector.broadcast %36 : vector<1x8xf32> to vector<8x8xf32>
    %38 = arith.addf %34, %37 : vector<8x8xf32>
    %39 = arith.truncf %31 : vector<8x8xf32> to vector<8x8xbf16>
    %c0_36 = arith.constant 0 : index
    %c1_37 = arith.constant 1 : index
    %c0_38 = arith.constant 0 : index
    %c0_39 = arith.constant 0 : index
    %40 = vector.load %arg7[%c0_36, %c1_37, %c0_38, %c0_39] : memref<1x4x8x8xbf16, #tpu.memory_space<vmem>>, vector<1x1x8x8xbf16>
    %41 = vector.shape_cast %40 : vector<1x1x8x8xbf16> to vector<8x8xbf16>
    %42 = vector.shape_cast %39 : vector<8x8xbf16> to vector<1x1x8x8xbf16>
    tpu.vector_store %arg7[%c0_36, %c1_37, %c0_38, %c0_39], %42 {strides = array<i32>} : memref<1x4x8x8xbf16, #tpu.memory_space<vmem>>, vector<1x1x8x8xbf16>,
    %43 = arith.truncf %38 : vector<8x8xf32> to vector<8x8xbf16>
    %c0_40 = arith.constant 0 : index
    %c1_41 = arith.constant 1 : index
    %c0_42 = arith.constant 0 : index
    %c0_43 = arith.constant 0 : index
    %44 = vector.load %arg8[%c0_40, %c1_41, %c0_42, %c0_43] : memref<1x4x8x8xbf16, #tpu.memory_space<vmem>>, vector<1x1x8x8xbf16>
    %45 = vector.shape_cast %44 : vector<1x1x8x8xbf16> to vector<8x8xbf16>
    %46 = vector.shape_cast %43 : vector<8x8xbf16> to vector<1x1x8x8xbf16>
    tpu.vector_store %arg8[%c0_40, %c1_41, %c0_42, %c0_43], %46 {strides = array<i32>} : memref<1x4x8x8xbf16, #tpu.memory_space<vmem>>, vector<1x1x8x8xbf16>,
    %c2 = arith.constant 2 : index
    %c0_44 = arith.constant 0 : index
    %c0_45 = arith.constant 0 : index
    %47 = vector.load %arg3[%c2, %c0_44, %c0_45] : memref<4x32x8xbf16, #tpu.memory_space<vmem>>, vector<1x32x8xbf16>
    %48 = vector.shape_cast %47 : vector<1x32x8xbf16> to vector<32x8xbf16>
    %cst_46 = arith.constant dense<0.000000e+00> : vector<8x8xf32>
    %49 = tpu.matmul %2, %48, %cst_46 {dimension_numbers = #tpu.dot_dimension_numbers<[1], [0], [0], [1], [0, 0, 1, 1], [], []>} : vector<8x32xbf16>, vector<32x8xbf16>, vector<8x8xf32> -> vector<8x8xf32>
    %c2_47 = arith.constant 2 : index
    %c0_48 = arith.constant 0 : index
    %c0_49 = arith.constant 0 : index
    %50 = vector.load %arg4[%c2_47, %c0_48, %c0_49] : memref<4x1x8xf32, #tpu.memory_space<vmem>>, vector<1x1x8xf32>
    %51 = vector.shape_cast %50 : vector<1x1x8xf32> to vector<1x8xf32>
    %52 = vector.broadcast %51 : vector<1x8xf32> to vector<8x8xf32>
    %53 = arith.addf %49, %52 : vector<8x8xf32>
    %c2_50 = arith.constant 2 : index
    %c0_51 = arith.constant 0 : index
    %c0_52 = arith.constant 0 : index
    %54 = vector.load %arg5[%c2_50, %c0_51, %c0_52] : memref<4x32x8xbf16, #tpu.memory_space<vmem>>, vector<1x32x8xbf16>
    %55 = vector.shape_cast %54 : vector<1x32x8xbf16> to vector<32x8xbf16>
    %cst_53 = arith.constant dense<0.000000e+00> : vector<8x8xf32>
    %56 = tpu.matmul %2, %55, %cst_53 {dimension_numbers = #tpu.dot_dimension_numbers<[1], [0], [0], [1], [0, 0, 1, 1], [], []>} : vector<8x32xbf16>, vector<32x8xbf16>, vector<8x8xf32> -> vector<8x8xf32>
    %c2_54 = arith.constant 2 : index
    %c0_55 = arith.constant 0 : index
    %c0_56 = arith.constant 0 : index
    %57 = vector.load %arg6[%c2_54, %c0_55, %c0_56] : memref<4x1x8xf32, #tpu.memory_space<vmem>>, vector<1x1x8xf32>
    %58 = vector.shape_cast %57 : vector<1x1x8xf32> to vector<1x8xf32>
    %59 = vector.broadcast %58 : vector<1x8xf32> to vector<8x8xf32>
    %60 = arith.addf %56, %59 : vector<8x8xf32>
    %61 = arith.truncf %53 : vector<8x8xf32> to vector<8x8xbf16>
    %c0_57 = arith.constant 0 : index
    %c2_58 = arith.constant 2 : index
    %c0_59 = arith.constant 0 : index
    %c0_60 = arith.constant 0 : index
    %62 = vector.load %arg7[%c0_57, %c2_58, %c0_59, %c0_60] : memref<1x4x8x8xbf16, #tpu.memory_space<vmem>>, vector<1x1x8x8xbf16>
    %63 = vector.shape_cast %62 : vector<1x1x8x8xbf16> to vector<8x8xbf16>
    %64 = vector.shape_cast %61 : vector<8x8xbf16> to vector<1x1x8x8xbf16>
    tpu.vector_store %arg7[%c0_57, %c2_58, %c0_59, %c0_60], %64 {strides = array<i32>} : memref<1x4x8x8xbf16, #tpu.memory_space<vmem>>, vector<1x1x8x8xbf16>,
    %65 = arith.truncf %60 : vector<8x8xf32> to vector<8x8xbf16>
    %c0_61 = arith.constant 0 : index
    %c2_62 = arith.constant 2 : index
    %c0_63 = arith.constant 0 : index
    %c0_64 = arith.constant 0 : index
    %66 = vector.load %arg8[%c0_61, %c2_62, %c0_63, %c0_64] : memref<1x4x8x8xbf16, #tpu.memory_space<vmem>>, vector<1x1x8x8xbf16>
    %67 = vector.shape_cast %66 : vector<1x1x8x8xbf16> to vector<8x8xbf16>
    %68 = vector.shape_cast %65 : vector<8x8xbf16> to vector<1x1x8x8xbf16>
    tpu.vector_store %arg8[%c0_61, %c2_62, %c0_63, %c0_64], %68 {strides = array<i32>} : memref<1x4x8x8xbf16, #tpu.memory_space<vmem>>, vector<1x1x8x8xbf16>,
    %c3 = arith.constant 3 : index
    %c0_65 = arith.constant 0 : index
    %c0_66 = arith.constant 0 : index
    %69 = vector.load %arg3[%c3, %c0_65, %c0_66] : memref<4x32x8xbf16, #tpu.memory_space<vmem>>, vector<1x32x8xbf16>
    %70 = vector.shape_cast %69 : vector<1x32x8xbf16> to vector<32x8xbf16>
    %cst_67 = arith.constant dense<0.000000e+00> : vector<8x8xf32>
    %71 = tpu.matmul %2, %70, %cst_67 {dimension_numbers = #tpu.dot_dimension_numbers<[1], [0], [0], [1], [0, 0, 1, 1], [], []>} : vector<8x32xbf16>, vector<32x8xbf16>, vector<8x8xf32> -> vector<8x8xf32>
    %c3_68 = arith.constant 3 : index
    %c0_69 = arith.constant 0 : index
    %c0_70 = arith.constant 0 : index
    %72 = vector.load %arg4[%c3_68, %c0_69, %c0_70] : memref<4x1x8xf32, #tpu.memory_space<vmem>>, vector<1x1x8xf32>
    %73 = vector.shape_cast %72 : vector<1x1x8xf32> to vector<1x8xf32>
    %74 = vector.broadcast %73 : vector<1x8xf32> to vector<8x8xf32>
    %75 = arith.addf %71, %74 : vector<8x8xf32>
    %c3_71 = arith.constant 3 : index
    %c0_72 = arith.constant 0 : index
    %c0_73 = arith.constant 0 : index
    %76 = vector.load %arg5[%c3_71, %c0_72, %c0_73] : memref<4x32x8xbf16, #tpu.memory_space<vmem>>, vector<1x32x8xbf16>
    %77 = vector.shape_cast %76 : vector<1x32x8xbf16> to vector<32x8xbf16>
    %cst_74 = arith.constant dense<0.000000e+00> : vector<8x8xf32>
    %78 = tpu.matmul %2, %77, %cst_74 {dimension_numbers = #tpu.dot_dimension_numbers<[1], [0], [0], [1], [0, 0, 1, 1], [], []>} : vector<8x32xbf16>, vector<32x8xbf16>, vector<8x8xf32> -> vector<8x8xf32>
    %c3_75 = arith.constant 3 : index
    %c0_76 = arith.constant 0 : index
    %c0_77 = arith.constant 0 : index
    %79 = vector.load %arg6[%c3_75, %c0_76, %c0_77] : memref<4x1x8xf32, #tpu.memory_space<vmem>>, vector<1x1x8xf32>
    %80 = vector.shape_cast %79 : vector<1x1x8xf32> to vector<1x8xf32>
    %81 = vector.broadcast %80 : vector<1x8xf32> to vector<8x8xf32>
    %82 = arith.addf %78, %81 : vector<8x8xf32>
    %83 = arith.truncf %75 : vector<8x8xf32> to vector<8x8xbf16>
    %c0_78 = arith.constant 0 : index
    %c3_79 = arith.constant 3 : index
    %c0_80 = arith.constant 0 : index
    %c0_81 = arith.constant 0 : index
    %84 = vector.load %arg7[%c0_78, %c3_79, %c0_80, %c0_81] : memref<1x4x8x8xbf16, #tpu.memory_space<vmem>>, vector<1x1x8x8xbf16>
    %85 = vector.shape_cast %84 : vector<1x1x8x8xbf16> to vector<8x8xbf16>
    %86 = vector.shape_cast %83 : vector<8x8xbf16> to vector<1x1x8x8xbf16>
    tpu.vector_store %arg7[%c0_78, %c3_79, %c0_80, %c0_81], %86 {strides = array<i32>} : memref<1x4x8x8xbf16, #tpu.memory_space<vmem>>, vector<1x1x8x8xbf16>,
    %87 = arith.truncf %82 : vector<8x8xf32> to vector<8x8xbf16>
    %c0_82 = arith.constant 0 : index
    %c3_83 = arith.constant 3 : index
    %c0_84 = arith.constant 0 : index
    %c0_85 = arith.constant 0 : index
    %88 = vector.load %arg8[%c0_82, %c3_83, %c0_84, %c0_85] : memref<1x4x8x8xbf16, #tpu.memory_space<vmem>>, vector<1x1x8x8xbf16>
    %89 = vector.shape_cast %88 : vector<1x1x8x8xbf16> to vector<8x8xbf16>
    %90 = vector.shape_cast %87 : vector<8x8xbf16> to vector<1x1x8x8xbf16>
    tpu.vector_store %arg8[%c0_82, %c3_83, %c0_84, %c0_85], %90 {strides = array<i32>} : memref<1x4x8x8xbf16, #tpu.memory_space<vmem>>, vector<1x1x8x8xbf16>,
    return
  }
  func.func @transform_0(%arg0: i32, %arg1: i32) -> (i32, i32, i32) {
    %c0_i32 = arith.constant 0 : i32
    %c0_i32_0 = arith.constant 0 : i32
    return %arg0, %arg1, %c0_i32 : i32, i32, i32
  }
  func.func @transform_1(%arg0: i32, %arg1: i32) -> (i32, i32, i32) {
    %c0_i32 = arith.constant 0 : i32
    %c0_i32_0 = arith.constant 0 : i32
    %c0_i32_1 = arith.constant 0 : i32
    %c0_i32_2 = arith.constant 0 : i32
    return %c0_i32, %c0_i32_0, %c0_i32_1 : i32, i32, i32
  }
  func.func @transform_2(%arg0: i32, %arg1: i32) -> (i32, i32, i32) {
    %c0_i32 = arith.constant 0 : i32
    %c0_i32_0 = arith.constant 0 : i32
    %c0_i32_1 = arith.constant 0 : i32
    %c0_i32_2 = arith.constant 0 : i32
    return %c0_i32, %c0_i32_0, %c0_i32_1 : i32, i32, i32
  }
  func.func @transform_3(%arg0: i32, %arg1: i32) -> (i32, i32, i32) {
    %c0_i32 = arith.constant 0 : i32
    %c0_i32_0 = arith.constant 0 : i32
    %c0_i32_1 = arith.constant 0 : i32
    %c0_i32_2 = arith.constant 0 : i32
    return %c0_i32, %c0_i32_0, %c0_i32_1 : i32, i32, i32
  }
  func.func @transform_4(%arg0: i32, %arg1: i32) -> (i32, i32, i32) {
    %c0_i32 = arith.constant 0 : i32
    %c0_i32_0 = arith.constant 0 : i32
    %c0_i32_1 = arith.constant 0 : i32
    %c0_i32_2 = arith.constant 0 : i32
    return %c0_i32, %c0_i32_0, %c0_i32_1 : i32, i32, i32
  }
  func.func @transform_5(%arg0: i32, %arg1: i32) -> (i32, i32, i32, i32) {
    %c0_i32 = arith.constant 0 : i32
    %c0_i32_0 = arith.constant 0 : i32
    %c0_i32_1 = arith.constant 0 : i32
    return %arg0, %c0_i32, %arg1, %c0_i32_0 : i32, i32, i32, i32
  }
  func.func @transform_6(%arg0: i32, %arg1: i32) -> (i32, i32, i32, i32) {
    %c0_i32 = arith.constant 0 : i32
    %c0_i32_0 = arith.constant 0 : i32
    %c0_i32_1 = arith.constant 0 : i32
    return %arg0, %c0_i32, %arg1, %c0_i32_0 : i32, i32, i32, i32
  }
}

module attributes {stable_mosaic.version = 11 : i64} {
  func.func @_attn_kernel(%arg0: i32, %arg1: i32, %arg2: memref<1x8x32xf32, #tpu.memory_space<vmem>>, %arg3: memref<1x4x8x8xbf16, #tpu.memory_space<vmem>>, %arg4: memref<1x4x8x8xbf16, #tpu.memory_space<vmem>>, %arg5: memref<4x32x8xbf16, #tpu.memory_space<vmem>>, %arg6: memref<4x1x8xf32, #tpu.memory_space<vmem>>, %arg7: memref<4x8x32xbf16, #tpu.memory_space<vmem>>, %arg8: memref<1x32xf32, #tpu.memory_space<vmem>>, %arg9: memref<1x32xf32, #tpu.memory_space<vmem>>, %arg10: memref<1x32xf32, #tpu.memory_space<vmem>>, %arg11: memref<1x8x32xf32, #tpu.memory_space<vmem>>) attributes {dimension_semantics = [#tpu.dimension_semantics<parallel>, #tpu.dimension_semantics<parallel>], iteration_bounds = array<i64: 2, 1>, scalar_prefetch = 0 : i64, scratch_operands = 0 : i64, tpu.core_type = #tpu.core_type<tc>, window_params = [{transform_indices = @transform_0, window_bounds = array<i64: 1, 8, 32>}, {transform_indices = @transform_1, window_bounds = array<i64: 1, 4, 8, 8>}, {transform_indices = @transform_2, window_bounds = array<i64: 1, 4, 8, 8>}, {pipeline_mode = #tpu.pipeline_mode<synchronous>, transform_indices = @transform_3, window_bounds = array<i64: 4, 32, 8>}, {pipeline_mode = #tpu.pipeline_mode<synchronous>, transform_indices = @transform_4, window_bounds = array<i64: 4, 1, 8>}, {pipeline_mode = #tpu.pipeline_mode<synchronous>, transform_indices = @transform_5, window_bounds = array<i64: 4, 8, 32>}, {pipeline_mode = #tpu.pipeline_mode<synchronous>, transform_indices = @transform_6, window_bounds = array<i64: 1, 32>}, {pipeline_mode = #tpu.pipeline_mode<synchronous>, transform_indices = @transform_7, window_bounds = array<i64: 1, 32>}, {pipeline_mode = #tpu.pipeline_mode<synchronous>, transform_indices = @transform_8, window_bounds = array<i64: 1, 32>}, {transform_indices = @transform_9, window_bounds = array<i64: 1, 8, 32>}]} {
    %c0 = arith.constant 0 : index
    %c0_0 = arith.constant 0 : index
    %c0_1 = arith.constant 0 : index
    %0 = vector.load %arg2[%c0, %c0_0, %c0_1] : memref<1x8x32xf32, #tpu.memory_space<vmem>>, vector<1x8x32xf32>
    %1 = vector.shape_cast %0 : vector<1x8x32xf32> to vector<8x32xf32>
    %2 = arith.truncf %1 : vector<8x32xf32> to vector<8x32xbf16>
    %c0_2 = arith.constant 0 : index
    %c0_3 = arith.constant 0 : index
    %3 = vector.load %arg8[%c0_2, %c0_3] : memref<1x32xf32, #tpu.memory_space<vmem>>, vector<1x32xf32>
    %4 = vector.broadcast %3 : vector<1x32xf32> to vector<8x32xf32>
    %5 = arith.addf %1, %4 : vector<8x32xf32>
    %c0_4 = arith.constant 0 : index
    %c0_5 = arith.constant 0 : index
    %c0_6 = arith.constant 0 : index
    %6 = vector.load %arg5[%c0_4, %c0_5, %c0_6] : memref<4x32x8xbf16, #tpu.memory_space<vmem>>, vector<1x32x8xbf16>
    %7 = vector.shape_cast %6 : vector<1x32x8xbf16> to vector<32x8xbf16>
    %cst = arith.constant dense<0.000000e+00> : vector<8x8xf32>
    %8 = tpu.matmul %2, %7, %cst {dimension_numbers = #tpu.dot_dimension_numbers<[1], [0], [0], [1], [0, 0, 1, 1], [], []>} : vector<8x32xbf16>, vector<32x8xbf16>, vector<8x8xf32> -> vector<8x8xf32>
    %c0_7 = arith.constant 0 : index
    %c0_8 = arith.constant 0 : index
    %c0_9 = arith.constant 0 : index
    %9 = vector.load %arg6[%c0_7, %c0_8, %c0_9] : memref<4x1x8xf32, #tpu.memory_space<vmem>>, vector<1x1x8xf32>
    %10 = vector.shape_cast %9 : vector<1x1x8xf32> to vector<1x8xf32>
    %11 = vector.broadcast %10 : vector<1x8xf32> to vector<8x8xf32>
    %12 = arith.addf %8, %11 : vector<8x8xf32>
    %cst_10 = arith.constant 0.353553385 : f32
    %13 = vector.broadcast %cst_10 : f32 to vector<8x8xf32>
    %14 = arith.mulf %12, %13 : vector<8x8xf32>
    %c0_11 = arith.constant 0 : index
    %c0_12 = arith.constant 0 : index
    %c0_13 = arith.constant 0 : index
    %c0_14 = arith.constant 0 : index
    %15 = vector.load %arg3[%c0_11, %c0_12, %c0_13, %c0_14] : memref<1x4x8x8xbf16, #tpu.memory_space<vmem>>, vector<1x1x8x8xbf16>
    %16 = vector.shape_cast %15 : vector<1x1x8x8xbf16> to vector<8x8xbf16>
    %c0_15 = arith.constant 0 : index
    %c0_16 = arith.constant 0 : index
    %c0_17 = arith.constant 0 : index
    %c0_18 = arith.constant 0 : index
    %17 = vector.load %arg4[%c0_15, %c0_16, %c0_17, %c0_18] : memref<1x4x8x8xbf16, #tpu.memory_space<vmem>>, vector<1x1x8x8xbf16>
    %18 = vector.shape_cast %17 : vector<1x1x8x8xbf16> to vector<8x8xbf16>
    %19 = arith.truncf %14 : vector<8x8xf32> to vector<8x8xbf16>
    %cst_19 = arith.constant dense<0.000000e+00> : vector<8x8xf32>
    %20 = tpu.matmul %19, %16, %cst_19 {dimension_numbers = #tpu.dot_dimension_numbers<[1], [1], [0], [0], [0, 0, 1, 0], [], []>} : vector<8x8xbf16>, vector<8x8xbf16>, vector<8x8xf32> -> vector<8x8xf32>
    %cst_20 = arith.constant dense<0xFF800000> : vector<8xf32>
    %21 = vector.multi_reduction <maximumf>, %20, %cst_20 [1] : vector<8x8xf32> to vector<8xf32>
    %22 = vector.shape_cast %21 : vector<8xf32> to vector<8x1xf32>
    %23 = vector.broadcast %22 : vector<8x1xf32> to vector<8x8xf32>
    %24 = arith.subf %20, %23 : vector<8x8xf32>
    %25 = math.exp %24 : vector<8x8xf32>
    %cst_21 = arith.constant dense<0.000000e+00> : vector<8xf32>
    %26 = vector.multi_reduction <add>, %25, %cst_21 [1] : vector<8x8xf32> to vector<8xf32>
    %27 = vector.shape_cast %26 : vector<8xf32> to vector<8x1xf32>
    %28 = tpu.reciprocal %27 {approx = true} : vector<8x1xf32> -> vector<8x1xf32>
    %29 = vector.broadcast %28 : vector<8x1xf32> to vector<8x8xf32>
    %30 = arith.mulf %25, %29 : vector<8x8xf32>
    %31 = arith.truncf %30 : vector<8x8xf32> to vector<8x8xbf16>
    %cst_22 = arith.constant dense<0.000000e+00> : vector<8x8xf32>
    %32 = tpu.matmul %31, %18, %cst_22 {dimension_numbers = #tpu.dot_dimension_numbers<[1], [0], [0], [1], [0, 0, 1, 1], [], []>} : vector<8x8xbf16>, vector<8x8xbf16>, vector<8x8xf32> -> vector<8x8xf32>
    %33 = arith.truncf %32 : vector<8x8xf32> to vector<8x8xbf16>
    %c0_23 = arith.constant 0 : index
    %c0_24 = arith.constant 0 : index
    %c0_25 = arith.constant 0 : index
    %34 = vector.load %arg7[%c0_23, %c0_24, %c0_25] : memref<4x8x32xbf16, #tpu.memory_space<vmem>>, vector<1x8x32xbf16>
    %35 = vector.shape_cast %34 : vector<1x8x32xbf16> to vector<8x32xbf16>
    %cst_26 = arith.constant dense<0.000000e+00> : vector<8x32xf32>
    %36 = tpu.matmul %33, %35, %cst_26 {dimension_numbers = #tpu.dot_dimension_numbers<[1], [0], [0], [1], [0, 0, 1, 1], [], []>} : vector<8x8xbf16>, vector<8x32xbf16>, vector<8x32xf32> -> vector<8x32xf32>
    %37 = arith.addf %5, %36 : vector<8x32xf32>
    %c1 = arith.constant 1 : index
    %c0_27 = arith.constant 0 : index
    %c0_28 = arith.constant 0 : index
    %38 = vector.load %arg5[%c1, %c0_27, %c0_28] : memref<4x32x8xbf16, #tpu.memory_space<vmem>>, vector<1x32x8xbf16>
    %39 = vector.shape_cast %38 : vector<1x32x8xbf16> to vector<32x8xbf16>
    %cst_29 = arith.constant dense<0.000000e+00> : vector<8x8xf32>
    %40 = tpu.matmul %2, %39, %cst_29 {dimension_numbers = #tpu.dot_dimension_numbers<[1], [0], [0], [1], [0, 0, 1, 1], [], []>} : vector<8x32xbf16>, vector<32x8xbf16>, vector<8x8xf32> -> vector<8x8xf32>
    %c1_30 = arith.constant 1 : index
    %c0_31 = arith.constant 0 : index
    %c0_32 = arith.constant 0 : index
    %41 = vector.load %arg6[%c1_30, %c0_31, %c0_32] : memref<4x1x8xf32, #tpu.memory_space<vmem>>, vector<1x1x8xf32>
    %42 = vector.shape_cast %41 : vector<1x1x8xf32> to vector<1x8xf32>
    %43 = vector.broadcast %42 : vector<1x8xf32> to vector<8x8xf32>
    %44 = arith.addf %40, %43 : vector<8x8xf32>
    %cst_33 = arith.constant 0.353553385 : f32
    %45 = vector.broadcast %cst_33 : f32 to vector<8x8xf32>
    %46 = arith.mulf %44, %45 : vector<8x8xf32>
    %c0_34 = arith.constant 0 : index
    %c1_35 = arith.constant 1 : index
    %c0_36 = arith.constant 0 : index
    %c0_37 = arith.constant 0 : index
    %47 = vector.load %arg3[%c0_34, %c1_35, %c0_36, %c0_37] : memref<1x4x8x8xbf16, #tpu.memory_space<vmem>>, vector<1x1x8x8xbf16>
    %48 = vector.shape_cast %47 : vector<1x1x8x8xbf16> to vector<8x8xbf16>
    %c0_38 = arith.constant 0 : index
    %c1_39 = arith.constant 1 : index
    %c0_40 = arith.constant 0 : index
    %c0_41 = arith.constant 0 : index
    %49 = vector.load %arg4[%c0_38, %c1_39, %c0_40, %c0_41] : memref<1x4x8x8xbf16, #tpu.memory_space<vmem>>, vector<1x1x8x8xbf16>
    %50 = vector.shape_cast %49 : vector<1x1x8x8xbf16> to vector<8x8xbf16>
    %51 = arith.truncf %46 : vector<8x8xf32> to vector<8x8xbf16>
    %cst_42 = arith.constant dense<0.000000e+00> : vector<8x8xf32>
    %52 = tpu.matmul %51, %48, %cst_42 {dimension_numbers = #tpu.dot_dimension_numbers<[1], [1], [0], [0], [0, 0, 1, 0], [], []>} : vector<8x8xbf16>, vector<8x8xbf16>, vector<8x8xf32> -> vector<8x8xf32>
    %cst_43 = arith.constant dense<0xFF800000> : vector<8xf32>
    %53 = vector.multi_reduction <maximumf>, %52, %cst_43 [1] : vector<8x8xf32> to vector<8xf32>
    %54 = vector.shape_cast %53 : vector<8xf32> to vector<8x1xf32>
    %55 = vector.broadcast %54 : vector<8x1xf32> to vector<8x8xf32>
    %56 = arith.subf %52, %55 : vector<8x8xf32>
    %57 = math.exp %56 : vector<8x8xf32>
    %cst_44 = arith.constant dense<0.000000e+00> : vector<8xf32>
    %58 = vector.multi_reduction <add>, %57, %cst_44 [1] : vector<8x8xf32> to vector<8xf32>
    %59 = vector.shape_cast %58 : vector<8xf32> to vector<8x1xf32>
    %60 = tpu.reciprocal %59 {approx = true} : vector<8x1xf32> -> vector<8x1xf32>
    %61 = vector.broadcast %60 : vector<8x1xf32> to vector<8x8xf32>
    %62 = arith.mulf %57, %61 : vector<8x8xf32>
    %63 = arith.truncf %62 : vector<8x8xf32> to vector<8x8xbf16>
    %cst_45 = arith.constant dense<0.000000e+00> : vector<8x8xf32>
    %64 = tpu.matmul %63, %50, %cst_45 {dimension_numbers = #tpu.dot_dimension_numbers<[1], [0], [0], [1], [0, 0, 1, 1], [], []>} : vector<8x8xbf16>, vector<8x8xbf16>, vector<8x8xf32> -> vector<8x8xf32>
    %65 = arith.truncf %64 : vector<8x8xf32> to vector<8x8xbf16>
    %c1_46 = arith.constant 1 : index
    %c0_47 = arith.constant 0 : index
    %c0_48 = arith.constant 0 : index
    %66 = vector.load %arg7[%c1_46, %c0_47, %c0_48] : memref<4x8x32xbf16, #tpu.memory_space<vmem>>, vector<1x8x32xbf16>
    %67 = vector.shape_cast %66 : vector<1x8x32xbf16> to vector<8x32xbf16>
    %cst_49 = arith.constant dense<0.000000e+00> : vector<8x32xf32>
    %68 = tpu.matmul %65, %67, %cst_49 {dimension_numbers = #tpu.dot_dimension_numbers<[1], [0], [0], [1], [0, 0, 1, 1], [], []>} : vector<8x8xbf16>, vector<8x32xbf16>, vector<8x32xf32> -> vector<8x32xf32>
    %69 = arith.addf %37, %68 : vector<8x32xf32>
    %c2 = arith.constant 2 : index
    %c0_50 = arith.constant 0 : index
    %c0_51 = arith.constant 0 : index
    %70 = vector.load %arg5[%c2, %c0_50, %c0_51] : memref<4x32x8xbf16, #tpu.memory_space<vmem>>, vector<1x32x8xbf16>
    %71 = vector.shape_cast %70 : vector<1x32x8xbf16> to vector<32x8xbf16>
    %cst_52 = arith.constant dense<0.000000e+00> : vector<8x8xf32>
    %72 = tpu.matmul %2, %71, %cst_52 {dimension_numbers = #tpu.dot_dimension_numbers<[1], [0], [0], [1], [0, 0, 1, 1], [], []>} : vector<8x32xbf16>, vector<32x8xbf16>, vector<8x8xf32> -> vector<8x8xf32>
    %c2_53 = arith.constant 2 : index
    %c0_54 = arith.constant 0 : index
    %c0_55 = arith.constant 0 : index
    %73 = vector.load %arg6[%c2_53, %c0_54, %c0_55] : memref<4x1x8xf32, #tpu.memory_space<vmem>>, vector<1x1x8xf32>
    %74 = vector.shape_cast %73 : vector<1x1x8xf32> to vector<1x8xf32>
    %75 = vector.broadcast %74 : vector<1x8xf32> to vector<8x8xf32>
    %76 = arith.addf %72, %75 : vector<8x8xf32>
    %cst_56 = arith.constant 0.353553385 : f32
    %77 = vector.broadcast %cst_56 : f32 to vector<8x8xf32>
    %78 = arith.mulf %76, %77 : vector<8x8xf32>
    %c0_57 = arith.constant 0 : index
    %c2_58 = arith.constant 2 : index
    %c0_59 = arith.constant 0 : index
    %c0_60 = arith.constant 0 : index
    %79 = vector.load %arg3[%c0_57, %c2_58, %c0_59, %c0_60] : memref<1x4x8x8xbf16, #tpu.memory_space<vmem>>, vector<1x1x8x8xbf16>
    %80 = vector.shape_cast %79 : vector<1x1x8x8xbf16> to vector<8x8xbf16>
    %c0_61 = arith.constant 0 : index
    %c2_62 = arith.constant 2 : index
    %c0_63 = arith.constant 0 : index
    %c0_64 = arith.constant 0 : index
    %81 = vector.load %arg4[%c0_61, %c2_62, %c0_63, %c0_64] : memref<1x4x8x8xbf16, #tpu.memory_space<vmem>>, vector<1x1x8x8xbf16>
    %82 = vector.shape_cast %81 : vector<1x1x8x8xbf16> to vector<8x8xbf16>
    %83 = arith.truncf %78 : vector<8x8xf32> to vector<8x8xbf16>
    %cst_65 = arith.constant dense<0.000000e+00> : vector<8x8xf32>
    %84 = tpu.matmul %83, %80, %cst_65 {dimension_numbers = #tpu.dot_dimension_numbers<[1], [1], [0], [0], [0, 0, 1, 0], [], []>} : vector<8x8xbf16>, vector<8x8xbf16>, vector<8x8xf32> -> vector<8x8xf32>
    %cst_66 = arith.constant dense<0xFF800000> : vector<8xf32>
    %85 = vector.multi_reduction <maximumf>, %84, %cst_66 [1] : vector<8x8xf32> to vector<8xf32>
    %86 = vector.shape_cast %85 : vector<8xf32> to vector<8x1xf32>
    %87 = vector.broadcast %86 : vector<8x1xf32> to vector<8x8xf32>
    %88 = arith.subf %84, %87 : vector<8x8xf32>
    %89 = math.exp %88 : vector<8x8xf32>
    %cst_67 = arith.constant dense<0.000000e+00> : vector<8xf32>
    %90 = vector.multi_reduction <add>, %89, %cst_67 [1] : vector<8x8xf32> to vector<8xf32>
    %91 = vector.shape_cast %90 : vector<8xf32> to vector<8x1xf32>
    %92 = tpu.reciprocal %91 {approx = true} : vector<8x1xf32> -> vector<8x1xf32>
    %93 = vector.broadcast %92 : vector<8x1xf32> to vector<8x8xf32>
    %94 = arith.mulf %89, %93 : vector<8x8xf32>
    %95 = arith.truncf %94 : vector<8x8xf32> to vector<8x8xbf16>
    %cst_68 = arith.constant dense<0.000000e+00> : vector<8x8xf32>
    %96 = tpu.matmul %95, %82, %cst_68 {dimension_numbers = #tpu.dot_dimension_numbers<[1], [0], [0], [1], [0, 0, 1, 1], [], []>} : vector<8x8xbf16>, vector<8x8xbf16>, vector<8x8xf32> -> vector<8x8xf32>
    %97 = arith.truncf %96 : vector<8x8xf32> to vector<8x8xbf16>
    %c2_69 = arith.constant 2 : index
    %c0_70 = arith.constant 0 : index
    %c0_71 = arith.constant 0 : index
    %98 = vector.load %arg7[%c2_69, %c0_70, %c0_71] : memref<4x8x32xbf16, #tpu.memory_space<vmem>>, vector<1x8x32xbf16>
    %99 = vector.shape_cast %98 : vector<1x8x32xbf16> to vector<8x32xbf16>
    %cst_72 = arith.constant dense<0.000000e+00> : vector<8x32xf32>
    %100 = tpu.matmul %97, %99, %cst_72 {dimension_numbers = #tpu.dot_dimension_numbers<[1], [0], [0], [1], [0, 0, 1, 1], [], []>} : vector<8x8xbf16>, vector<8x32xbf16>, vector<8x32xf32> -> vector<8x32xf32>
    %101 = arith.addf %69, %100 : vector<8x32xf32>
    %c3 = arith.constant 3 : index
    %c0_73 = arith.constant 0 : index
    %c0_74 = arith.constant 0 : index
    %102 = vector.load %arg5[%c3, %c0_73, %c0_74] : memref<4x32x8xbf16, #tpu.memory_space<vmem>>, vector<1x32x8xbf16>
    %103 = vector.shape_cast %102 : vector<1x32x8xbf16> to vector<32x8xbf16>
    %cst_75 = arith.constant dense<0.000000e+00> : vector<8x8xf32>
    %104 = tpu.matmul %2, %103, %cst_75 {dimension_numbers = #tpu.dot_dimension_numbers<[1], [0], [0], [1], [0, 0, 1, 1], [], []>} : vector<8x32xbf16>, vector<32x8xbf16>, vector<8x8xf32> -> vector<8x8xf32>
    %c3_76 = arith.constant 3 : index
    %c0_77 = arith.constant 0 : index
    %c0_78 = arith.constant 0 : index
    %105 = vector.load %arg6[%c3_76, %c0_77, %c0_78] : memref<4x1x8xf32, #tpu.memory_space<vmem>>, vector<1x1x8xf32>
    %106 = vector.shape_cast %105 : vector<1x1x8xf32> to vector<1x8xf32>
    %107 = vector.broadcast %106 : vector<1x8xf32> to vector<8x8xf32>
    %108 = arith.addf %104, %107 : vector<8x8xf32>
    %cst_79 = arith.constant 0.353553385 : f32
    %109 = vector.broadcast %cst_79 : f32 to vector<8x8xf32>
    %110 = arith.mulf %108, %109 : vector<8x8xf32>
    %c0_80 = arith.constant 0 : index
    %c3_81 = arith.constant 3 : index
    %c0_82 = arith.constant 0 : index
    %c0_83 = arith.constant 0 : index
    %111 = vector.load %arg3[%c0_80, %c3_81, %c0_82, %c0_83] : memref<1x4x8x8xbf16, #tpu.memory_space<vmem>>, vector<1x1x8x8xbf16>
    %112 = vector.shape_cast %111 : vector<1x1x8x8xbf16> to vector<8x8xbf16>
    %c0_84 = arith.constant 0 : index
    %c3_85 = arith.constant 3 : index
    %c0_86 = arith.constant 0 : index
    %c0_87 = arith.constant 0 : index
    %113 = vector.load %arg4[%c0_84, %c3_85, %c0_86, %c0_87] : memref<1x4x8x8xbf16, #tpu.memory_space<vmem>>, vector<1x1x8x8xbf16>
    %114 = vector.shape_cast %113 : vector<1x1x8x8xbf16> to vector<8x8xbf16>
    %115 = arith.truncf %110 : vector<8x8xf32> to vector<8x8xbf16>
    %cst_88 = arith.constant dense<0.000000e+00> : vector<8x8xf32>
    %116 = tpu.matmul %115, %112, %cst_88 {dimension_numbers = #tpu.dot_dimension_numbers<[1], [1], [0], [0], [0, 0, 1, 0], [], []>} : vector<8x8xbf16>, vector<8x8xbf16>, vector<8x8xf32> -> vector<8x8xf32>
    %cst_89 = arith.constant dense<0xFF800000> : vector<8xf32>
    %117 = vector.multi_reduction <maximumf>, %116, %cst_89 [1] : vector<8x8xf32> to vector<8xf32>
    %118 = vector.shape_cast %117 : vector<8xf32> to vector<8x1xf32>
    %119 = vector.broadcast %118 : vector<8x1xf32> to vector<8x8xf32>
    %120 = arith.subf %116, %119 : vector<8x8xf32>
    %121 = math.exp %120 : vector<8x8xf32>
    %cst_90 = arith.constant dense<0.000000e+00> : vector<8xf32>
    %122 = vector.multi_reduction <add>, %121, %cst_90 [1] : vector<8x8xf32> to vector<8xf32>
    %123 = vector.shape_cast %122 : vector<8xf32> to vector<8x1xf32>
    %124 = tpu.reciprocal %123 {approx = true} : vector<8x1xf32> -> vector<8x1xf32>
    %125 = vector.broadcast %124 : vector<8x1xf32> to vector<8x8xf32>
    %126 = arith.mulf %121, %125 : vector<8x8xf32>
    %127 = arith.truncf %126 : vector<8x8xf32> to vector<8x8xbf16>
    %cst_91 = arith.constant dense<0.000000e+00> : vector<8x8xf32>
    %128 = tpu.matmul %127, %114, %cst_91 {dimension_numbers = #tpu.dot_dimension_numbers<[1], [0], [0], [1], [0, 0, 1, 1], [], []>} : vector<8x8xbf16>, vector<8x8xbf16>, vector<8x8xf32> -> vector<8x8xf32>
    %129 = arith.truncf %128 : vector<8x8xf32> to vector<8x8xbf16>
    %c3_92 = arith.constant 3 : index
    %c0_93 = arith.constant 0 : index
    %c0_94 = arith.constant 0 : index
    %130 = vector.load %arg7[%c3_92, %c0_93, %c0_94] : memref<4x8x32xbf16, #tpu.memory_space<vmem>>, vector<1x8x32xbf16>
    %131 = vector.shape_cast %130 : vector<1x8x32xbf16> to vector<8x32xbf16>
    %cst_95 = arith.constant dense<0.000000e+00> : vector<8x32xf32>
    %132 = tpu.matmul %129, %131, %cst_95 {dimension_numbers = #tpu.dot_dimension_numbers<[1], [0], [0], [1], [0, 0, 1, 1], [], []>} : vector<8x8xbf16>, vector<8x32xbf16>, vector<8x32xf32> -> vector<8x32xf32>
    %133 = arith.addf %101, %132 : vector<8x32xf32>
    %c0_96 = arith.constant 0 : index
    %c0_97 = arith.constant 0 : index
    %134 = vector.load %arg9[%c0_96, %c0_97] : memref<1x32xf32, #tpu.memory_space<vmem>>, vector<1x32xf32>
    %c0_98 = arith.constant 0 : index
    %c0_99 = arith.constant 0 : index
    %135 = vector.load %arg10[%c0_98, %c0_99] : memref<1x32xf32, #tpu.memory_space<vmem>>, vector<1x32xf32>
    %cst_100 = arith.constant dense<0.000000e+00> : vector<8xf32>
    %136 = vector.multi_reduction <add>, %133, %cst_100 [1] : vector<8x32xf32> to vector<8xf32>
    %137 = vector.shape_cast %136 : vector<8xf32> to vector<8x1xf32>
    %cst_101 = arith.constant 3.200000e+01 : f32
    %138 = vector.broadcast %cst_101 : f32 to vector<8x1xf32>
    %139 = arith.divf %137, %138 : vector<8x1xf32>
    %140 = vector.broadcast %139 : vector<8x1xf32> to vector<8x32xf32>
    %141 = arith.subf %133, %140 : vector<8x32xf32>
    %142 = arith.mulf %141, %141 : vector<8x32xf32>
    %cst_102 = arith.constant dense<0.000000e+00> : vector<8xf32>
    %143 = vector.multi_reduction <add>, %142, %cst_102 [1] : vector<8x32xf32> to vector<8xf32>
    %144 = vector.shape_cast %143 : vector<8xf32> to vector<8x1xf32>
    %cst_103 = arith.constant 3.200000e+01 : f32
    %145 = vector.broadcast %cst_103 : f32 to vector<8x1xf32>
    %146 = arith.divf %144, %145 : vector<8x1xf32>
    %147 = vector.broadcast %139 : vector<8x1xf32> to vector<8x32xf32>
    %148 = arith.subf %133, %147 : vector<8x32xf32>
    %cst_104 = arith.constant 9.99999974E-6 : f32
    %149 = vector.broadcast %cst_104 : f32 to vector<8x1xf32>
    %150 = arith.addf %146, %149 : vector<8x1xf32>
    %151 = math.rsqrt %150 : vector<8x1xf32>
    %152 = vector.broadcast %151 : vector<8x1xf32> to vector<8x32xf32>
    %153 = arith.mulf %148, %152 : vector<8x32xf32>
    %154 = vector.broadcast %134 : vector<1x32xf32> to vector<8x32xf32>
    %155 = arith.mulf %153, %154 : vector<8x32xf32>
    %156 = vector.broadcast %135 : vector<1x32xf32> to vector<8x32xf32>
    %157 = arith.addf %155, %156 : vector<8x32xf32>
    %c0_105 = arith.constant 0 : index
    %c0_106 = arith.constant 0 : index
    %c0_107 = arith.constant 0 : index
    %158 = vector.load %arg11[%c0_105, %c0_106, %c0_107] : memref<1x8x32xf32, #tpu.memory_space<vmem>>, vector<1x8x32xf32>
    %159 = vector.shape_cast %158 : vector<1x8x32xf32> to vector<8x32xf32>
    %160 = vector.shape_cast %157 : vector<8x32xf32> to vector<1x8x32xf32>
    tpu.vector_store %arg11[%c0_105, %c0_106, %c0_107], %160 {strides = array<i32>} : memref<1x8x32xf32, #tpu.memory_space<vmem>>, vector<1x8x32xf32>,
    return
  }
  func.func @transform_0(%arg0: i32, %arg1: i32) -> (i32, i32, i32) {
    %c0_i32 = arith.constant 0 : i32
    %c0_i32_0 = arith.constant 0 : i32
    return %arg0, %arg1, %c0_i32 : i32, i32, i32
  }
  func.func @transform_1(%arg0: i32, %arg1: i32) -> (i32, i32, i32, i32) {
    %c0_i32 = arith.constant 0 : i32
    %c0_i32_0 = arith.constant 0 : i32
    %c0_i32_1 = arith.constant 0 : i32
    %c0_i32_2 = arith.constant 0 : i32
    return %arg0, %c0_i32, %c0_i32_0, %c0_i32_1 : i32, i32, i32, i32
  }
  func.func @transform_2(%arg0: i32, %arg1: i32) -> (i32, i32, i32, i32) {
    %c0_i32 = arith.constant 0 : i32
    %c0_i32_0 = arith.constant 0 : i32
    %c0_i32_1 = arith.constant 0 : i32
    %c0_i32_2 = arith.constant 0 : i32
    return %arg0, %c0_i32, %c0_i32_0, %c0_i32_1 : i32, i32, i32, i32
  }
  func.func @transform_3(%arg0: i32, %arg1: i32) -> (i32, i32, i32) {
    %c0_i32 = arith.constant 0 : i32
    %c0_i32_0 = arith.constant 0 : i32
    %c0_i32_1 = arith.constant 0 : i32
    %c0_i32_2 = arith.constant 0 : i32
    return %c0_i32, %c0_i32_0, %c0_i32_1 : i32, i32, i32
  }
  func.func @transform_4(%arg0: i32, %arg1: i32) -> (i32, i32, i32) {
    %c0_i32 = arith.constant 0 : i32
    %c0_i32_0 = arith.constant 0 : i32
    %c0_i32_1 = arith.constant 0 : i32
    %c0_i32_2 = arith.constant 0 : i32
    return %c0_i32, %c0_i32_0, %c0_i32_1 : i32, i32, i32
  }
  func.func @transform_5(%arg0: i32, %arg1: i32) -> (i32, i32, i32) {
    %c0_i32 = arith.constant 0 : i32
    %c0_i32_0 = arith.constant 0 : i32
    %c0_i32_1 = arith.constant 0 : i32
    %c0_i32_2 = arith.constant 0 : i32
    return %c0_i32, %c0_i32_0, %c0_i32_1 : i32, i32, i32
  }
  func.func @transform_6(%arg0: i32, %arg1: i32) -> (i32, i32) {
    %c0_i32 = arith.constant 0 : i32
    %c0_i32_0 = arith.constant 0 : i32
    %c0_i32_1 = arith.constant 0 : i32
    return %c0_i32, %c0_i32_0 : i32, i32
  }
  func.func @transform_7(%arg0: i32, %arg1: i32) -> (i32, i32) {
    %c0_i32 = arith.constant 0 : i32
    %c0_i32_0 = arith.constant 0 : i32
    %c0_i32_1 = arith.constant 0 : i32
    return %c0_i32, %c0_i32_0 : i32, i32
  }
  func.func @transform_8(%arg0: i32, %arg1: i32) -> (i32, i32) {
    %c0_i32 = arith.constant 0 : i32
    %c0_i32_0 = arith.constant 0 : i32
    %c0_i32_1 = arith.constant 0 : i32
    return %c0_i32, %c0_i32_0 : i32, i32
  }
  func.func @transform_9(%arg0: i32, %arg1: i32) -> (i32, i32, i32) {
    %c0_i32 = arith.constant 0 : i32
    %c0_i32_0 = arith.constant 0 : i32
    return %arg0, %arg1, %c0_i32 : i32, i32, i32
  }
}

module attributes {stable_mosaic.version = 11 : i64} {
  func.func @_attn_kernel(%arg0: i32, %arg1: i32, %arg2: memref<1x8x32xf32, #tpu.memory_space<vmem>>, %arg3: memref<1x4x8x8xbf16, #tpu.memory_space<vmem>>, %arg4: memref<1x4x8x8xbf16, #tpu.memory_space<vmem>>, %arg5: memref<4x32x8xbf16, #tpu.memory_space<vmem>>, %arg6: memref<4x1x8xf32, #tpu.memory_space<vmem>>, %arg7: memref<4x8x32xbf16, #tpu.memory_space<vmem>>, %arg8: memref<1x32xf32, #tpu.memory_space<vmem>>, %arg9: memref<1x32xf32, #tpu.memory_space<vmem>>, %arg10: memref<1x32xf32, #tpu.memory_space<vmem>>, %arg11: memref<1x8x32xf32, #tpu.memory_space<vmem>>) attributes {dimension_semantics = [#tpu.dimension_semantics<parallel>, #tpu.dimension_semantics<parallel>], iteration_bounds = array<i64: 2, 1>, scalar_prefetch = 0 : i64, scratch_operands = 0 : i64, tpu.core_type = #tpu.core_type<tc>, window_params = [{transform_indices = @transform_0, window_bounds = array<i64: 1, 8, 32>}, {transform_indices = @transform_1, window_bounds = array<i64: 1, 4, 8, 8>}, {transform_indices = @transform_2, window_bounds = array<i64: 1, 4, 8, 8>}, {pipeline_mode = #tpu.pipeline_mode<synchronous>, transform_indices = @transform_3, window_bounds = array<i64: 4, 32, 8>}, {pipeline_mode = #tpu.pipeline_mode<synchronous>, transform_indices = @transform_4, window_bounds = array<i64: 4, 1, 8>}, {pipeline_mode = #tpu.pipeline_mode<synchronous>, transform_indices = @transform_5, window_bounds = array<i64: 4, 8, 32>}, {pipeline_mode = #tpu.pipeline_mode<synchronous>, transform_indices = @transform_6, window_bounds = array<i64: 1, 32>}, {pipeline_mode = #tpu.pipeline_mode<synchronous>, transform_indices = @transform_7, window_bounds = array<i64: 1, 32>}, {pipeline_mode = #tpu.pipeline_mode<synchronous>, transform_indices = @transform_8, window_bounds = array<i64: 1, 32>}, {transform_indices = @transform_9, window_bounds = array<i64: 1, 8, 32>}]} {
    %c0 = arith.constant 0 : index
    %c0_0 = arith.constant 0 : index
    %c0_1 = arith.constant 0 : index
    %0 = vector.load %arg2[%c0, %c0_0, %c0_1] : memref<1x8x32xf32, #tpu.memory_space<vmem>>, vector<1x8x32xf32>
    %1 = vector.shape_cast %0 : vector<1x8x32xf32> to vector<8x32xf32>
    %2 = arith.truncf %1 : vector<8x32xf32> to vector<8x32xbf16>
    %3 = tpu.iota {dimensions = array<i32: 0>} : vector<8x8xi32>
    %c8_i32 = arith.constant 8 : i32
    %4 = arith.muli %arg1, %c8_i32 : i32
    %5 = vector.broadcast %4 : i32 to vector<8x8xi32>
    %6 = arith.addi %3, %5 : vector<8x8xi32>
    %7 = tpu.iota {dimensions = array<i32: 1>} : vector<8x8xi32>
    %c0_i32 = arith.constant 0 : i32
    %8 = vector.broadcast %c0_i32 : i32 to vector<8x8xi32>
    %9 = arith.addi %6, %8 : vector<8x8xi32>
    %10 = arith.cmpi sle, %7, %9 : vector<8x8xi32>
    %cst = arith.constant 0.000000e+00 : f32
    %cst_2 = arith.constant -1.000000e+30 : f32
    %11 = vector.broadcast %cst : f32 to vector<8x8xf32>
    %12 = vector.broadcast %cst_2 : f32 to vector<8x8xf32>
    %13 = arith.select %10, %11, %12 : vector<8x8xi1>, vector<8x8xf32>
    %c0_3 = arith.constant 0 : index
    %c0_4 = arith.constant 0 : index
    %14 = vector.load %arg8[%c0_3, %c0_4] : memref<1x32xf32, #tpu.memory_space<vmem>>, vector<1x32xf32>
    %15 = vector.broadcast %14 : vector<1x32xf32> to vector<8x32xf32>
    %16 = arith.addf %1, %15 : vector<8x32xf32>
    %c0_5 = arith.constant 0 : index
    %c0_6 = arith.constant 0 : index
    %c0_7 = arith.constant 0 : index
    %17 = vector.load %arg5[%c0_5, %c0_6, %c0_7] : memref<4x32x8xbf16, #tpu.memory_space<vmem>>, vector<1x32x8xbf16>
    %18 = vector.shape_cast %17 : vector<1x32x8xbf16> to vector<32x8xbf16>
    %cst_8 = arith.constant dense<0.000000e+00> : vector<8x8xf32>
    %19 = tpu.matmul %2, %18, %cst_8 {dimension_numbers = #tpu.dot_dimension_numbers<[1], [0], [0], [1], [0, 0, 1, 1], [], []>} : vector<8x32xbf16>, vector<32x8xbf16>, vector<8x8xf32> -> vector<8x8xf32>
    %c0_9 = arith.constant 0 : index
    %c0_10 = arith.constant 0 : index
    %c0_11 = arith.constant 0 : index
    %20 = vector.load %arg6[%c0_9, %c0_10, %c0_11] : memref<4x1x8xf32, #tpu.memory_space<vmem>>, vector<1x1x8xf32>
    %21 = vector.shape_cast %20 : vector<1x1x8xf32> to vector<1x8xf32>
    %22 = vector.broadcast %21 : vector<1x8xf32> to vector<8x8xf32>
    %23 = arith.addf %19, %22 : vector<8x8xf32>
    %cst_12 = arith.constant 0.353553385 : f32
    %24 = vector.broadcast %cst_12 : f32 to vector<8x8xf32>
    %25 = arith.mulf %23, %24 : vector<8x8xf32>
    %c0_13 = arith.constant 0 : index
    %c0_14 = arith.constant 0 : index
    %c0_15 = arith.constant 0 : index
    %c0_16 = arith.constant 0 : index
    %26 = vector.load %arg3[%c0_13, %c0_14, %c0_15, %c0_16] : memref<1x4x8x8xbf16, #tpu.memory_space<vmem>>, vector<1x1x8x8xbf16>
    %27 = vector.shape_cast %26 : vector<1x1x8x8xbf16> to vector<8x8xbf16>
    %c0_17 = arith.constant 0 : index
    %c0_18 = arith.constant 0 : index
    %c0_19 = arith.constant 0 : index
    %c0_20 = arith.constant 0 : index
    %28 = vector.load %arg4[%c0_17, %c0_18, %c0_19, %c0_20] : memref<1x4x8x8xbf16, #tpu.memory_space<vmem>>, vector<1x1x8x8xbf16>
    %29 = vector.shape_cast %28 : vector<1x1x8x8xbf16> to vector<8x8xbf16>
    %30 = arith.truncf %25 : vector<8x8xf32> to vector<8x8xbf16>
    %cst_21 = arith.constant dense<0.000000e+00> : vector<8x8xf32>
    %31 = tpu.matmul %30, %27, %cst_21 {dimension_numbers = #tpu.dot_dimension_numbers<[1], [1], [0], [0], [0, 0, 1, 0], [], []>} : vector<8x8xbf16>, vector<8x8xbf16>, vector<8x8xf32> -> vector<8x8xf32>
    %32 = arith.addf %31, %13 : vector<8x8xf32>
    %cst_22 = arith.constant dense<0xFF800000> : vector<8xf32>
    %33 = vector.multi_reduction <maximumf>, %32, %cst_22 [1] : vector<8x8xf32> to vector<8xf32>
    %34 = vector.shape_cast %33 : vector<8xf32> to vector<8x1xf32>
    %35 = vector.broadcast %34 : vector<8x1xf32> to vector<8x8xf32>
    %36 = arith.subf %32, %35 : vector<8x8xf32>
    %37 = math.exp %36 : vector<8x8xf32>
    %cst_23 = arith.constant dense<0.000000e+00> : vector<8xf32>
    %38 = vector.multi_reduction <add>, %37, %cst_23 [1] : vector<8x8xf32> to vector<8xf32>
    %39 = vector.shape_cast %38 : vector<8xf32> to vector<8x1xf32>
    %40 = tpu.reciprocal %39 {approx = true} : vector<8x1xf32> -> vector<8x1xf32>
    %41 = vector.broadcast %40 : vector<8x1xf32> to vector<8x8xf32>
    %42 = arith.mulf %37, %41 : vector<8x8xf32>
    %43 = arith.truncf %42 : vector<8x8xf32> to vector<8x8xbf16>
    %cst_24 = arith.constant dense<0.000000e+00> : vector<8x8xf32>
    %44 = tpu.matmul %43, %29, %cst_24 {dimension_numbers = #tpu.dot_dimension_numbers<[1], [0], [0], [1], [0, 0, 1, 1], [], []>} : vector<8x8xbf16>, vector<8x8xbf16>, vector<8x8xf32> -> vector<8x8xf32>
    %45 = arith.truncf %44 : vector<8x8xf32> to vector<8x8xbf16>
    %c0_25 = arith.constant 0 : index
    %c0_26 = arith.constant 0 : index
    %c0_27 = arith.constant 0 : index
    %46 = vector.load %arg7[%c0_25, %c0_26, %c0_27] : memref<4x8x32xbf16, #tpu.memory_space<vmem>>, vector<1x8x32xbf16>
    %47 = vector.shape_cast %46 : vector<1x8x32xbf16> to vector<8x32xbf16>
    %cst_28 = arith.constant dense<0.000000e+00> : vector<8x32xf32>
    %48 = tpu.matmul %45, %47, %cst_28 {dimension_numbers = #tpu.dot_dimension_numbers<[1], [0], [0], [1], [0, 0, 1, 1], [], []>} : vector<8x8xbf16>, vector<8x32xbf16>, vector<8x32xf32> -> vector<8x32xf32>
    %49 = arith.addf %16, %48 : vector<8x32xf32>
    %c1 = arith.constant 1 : index
    %c0_29 = arith.constant 0 : index
    %c0_30 = arith.constant 0 : index
    %50 = vector.load %arg5[%c1, %c0_29, %c0_30] : memref<4x32x8xbf16, #tpu.memory_space<vmem>>, vector<1x32x8xbf16>
    %51 = vector.shape_cast %50 : vector<1x32x8xbf16> to vector<32x8xbf16>
    %cst_31 = arith.constant dense<0.000000e+00> : vector<8x8xf32>
    %52 = tpu.matmul %2, %51, %cst_31 {dimension_numbers = #tpu.dot_dimension_numbers<[1], [0], [0], [1], [0, 0, 1, 1], [], []>} : vector<8x32xbf16>, vector<32x8xbf16>, vector<8x8xf32> -> vector<8x8xf32>
    %c1_32 = arith.constant 1 : index
    %c0_33 = arith.constant 0 : index
    %c0_34 = arith.constant 0 : index
    %53 = vector.load %arg6[%c1_32, %c0_33, %c0_34] : memref<4x1x8xf32, #tpu.memory_space<vmem>>, vector<1x1x8xf32>
    %54 = vector.shape_cast %53 : vector<1x1x8xf32> to vector<1x8xf32>
    %55 = vector.broadcast %54 : vector<1x8xf32> to vector<8x8xf32>
    %56 = arith.addf %52, %55 : vector<8x8xf32>
    %cst_35 = arith.constant 0.353553385 : f32
    %57 = vector.broadcast %cst_35 : f32 to vector<8x8xf32>
    %58 = arith.mulf %56, %57 : vector<8x8xf32>
    %c0_36 = arith.constant 0 : index
    %c1_37 = arith.constant 1 : index
    %c0_38 = arith.constant 0 : index
    %c0_39 = arith.constant 0 : index
    %59 = vector.load %arg3[%c0_36, %c1_37, %c0_38, %c0_39] : memref<1x4x8x8xbf16, #tpu.memory_space<vmem>>, vector<1x1x8x8xbf16>
    %60 = vector.shape_cast %59 : vector<1x1x8x8xbf16> to vector<8x8xbf16>
    %c0_40 = arith.constant 0 : index
    %c1_41 = arith.constant 1 : index
    %c0_42 = arith.constant 0 : index
    %c0_43 = arith.constant 0 : index
    %61 = vector.load %arg4[%c0_40, %c1_41, %c0_42, %c0_43] : memref<1x4x8x8xbf16, #tpu.memory_space<vmem>>, vector<1x1x8x8xbf16>
    %62 = vector.shape_cast %61 : vector<1x1x8x8xbf16> to vector<8x8xbf16>
    %63 = arith.truncf %58 : vector<8x8xf32> to vector<8x8xbf16>
    %cst_44 = arith.constant dense<0.000000e+00> : vector<8x8xf32>
    %64 = tpu.matmul %63, %60, %cst_44 {dimension_numbers = #tpu.dot_dimension_numbers<[1], [1], [0], [0], [0, 0, 1, 0], [], []>} : vector<8x8xbf16>, vector<8x8xbf16>, vector<8x8xf32> -> vector<8x8xf32>
    %65 = arith.addf %64, %13 : vector<8x8xf32>
    %cst_45 = arith.constant dense<0xFF800000> : vector<8xf32>
    %66 = vector.multi_reduction <maximumf>, %65, %cst_45 [1] : vector<8x8xf32> to vector<8xf32>
    %67 = vector.shape_cast %66 : vector<8xf32> to vector<8x1xf32>
    %68 = vector.broadcast %67 : vector<8x1xf32> to vector<8x8xf32>
    %69 = arith.subf %65, %68 : vector<8x8xf32>
    %70 = math.exp %69 : vector<8x8xf32>
    %cst_46 = arith.constant dense<0.000000e+00> : vector<8xf32>
    %71 = vector.multi_reduction <add>, %70, %cst_46 [1] : vector<8x8xf32> to vector<8xf32>
    %72 = vector.shape_cast %71 : vector<8xf32> to vector<8x1xf32>
    %73 = tpu.reciprocal %72 {approx = true} : vector<8x1xf32> -> vector<8x1xf32>
    %74 = vector.broadcast %73 : vector<8x1xf32> to vector<8x8xf32>
    %75 = arith.mulf %70, %74 : vector<8x8xf32>
    %76 = arith.truncf %75 : vector<8x8xf32> to vector<8x8xbf16>
    %cst_47 = arith.constant dense<0.000000e+00> : vector<8x8xf32>
    %77 = tpu.matmul %76, %62, %cst_47 {dimension_numbers = #tpu.dot_dimension_numbers<[1], [0], [0], [1], [0, 0, 1, 1], [], []>} : vector<8x8xbf16>, vector<8x8xbf16>, vector<8x8xf32> -> vector<8x8xf32>
    %78 = arith.truncf %77 : vector<8x8xf32> to vector<8x8xbf16>
    %c1_48 = arith.constant 1 : index
    %c0_49 = arith.constant 0 : index
    %c0_50 = arith.constant 0 : index
    %79 = vector.load %arg7[%c1_48, %c0_49, %c0_50] : memref<4x8x32xbf16, #tpu.memory_space<vmem>>, vector<1x8x32xbf16>
    %80 = vector.shape_cast %79 : vector<1x8x32xbf16> to vector<8x32xbf16>
    %cst_51 = arith.constant dense<0.000000e+00> : vector<8x32xf32>
    %81 = tpu.matmul %78, %80, %cst_51 {dimension_numbers = #tpu.dot_dimension_numbers<[1], [0], [0], [1], [0, 0, 1, 1], [], []>} : vector<8x8xbf16>, vector<8x32xbf16>, vector<8x32xf32> -> vector<8x32xf32>
    %82 = arith.addf %49, %81 : vector<8x32xf32>
    %c2 = arith.constant 2 : index
    %c0_52 = arith.constant 0 : index
    %c0_53 = arith.constant 0 : index
    %83 = vector.load %arg5[%c2, %c0_52, %c0_53] : memref<4x32x8xbf16, #tpu.memory_space<vmem>>, vector<1x32x8xbf16>
    %84 = vector.shape_cast %83 : vector<1x32x8xbf16> to vector<32x8xbf16>
    %cst_54 = arith.constant dense<0.000000e+00> : vector<8x8xf32>
    %85 = tpu.matmul %2, %84, %cst_54 {dimension_numbers = #tpu.dot_dimension_numbers<[1], [0], [0], [1], [0, 0, 1, 1], [], []>} : vector<8x32xbf16>, vector<32x8xbf16>, vector<8x8xf32> -> vector<8x8xf32>
    %c2_55 = arith.constant 2 : index
    %c0_56 = arith.constant 0 : index
    %c0_57 = arith.constant 0 : index
    %86 = vector.load %arg6[%c2_55, %c0_56, %c0_57] : memref<4x1x8xf32, #tpu.memory_space<vmem>>, vector<1x1x8xf32>
    %87 = vector.shape_cast %86 : vector<1x1x8xf32> to vector<1x8xf32>
    %88 = vector.broadcast %87 : vector<1x8xf32> to vector<8x8xf32>
    %89 = arith.addf %85, %88 : vector<8x8xf32>
    %cst_58 = arith.constant 0.353553385 : f32
    %90 = vector.broadcast %cst_58 : f32 to vector<8x8xf32>
    %91 = arith.mulf %89, %90 : vector<8x8xf32>
    %c0_59 = arith.constant 0 : index
    %c2_60 = arith.constant 2 : index
    %c0_61 = arith.constant 0 : index
    %c0_62 = arith.constant 0 : index
    %92 = vector.load %arg3[%c0_59, %c2_60, %c0_61, %c0_62] : memref<1x4x8x8xbf16, #tpu.memory_space<vmem>>, vector<1x1x8x8xbf16>
    %93 = vector.shape_cast %92 : vector<1x1x8x8xbf16> to vector<8x8xbf16>
    %c0_63 = arith.constant 0 : index
    %c2_64 = arith.constant 2 : index
    %c0_65 = arith.constant 0 : index
    %c0_66 = arith.constant 0 : index
    %94 = vector.load %arg4[%c0_63, %c2_64, %c0_65, %c0_66] : memref<1x4x8x8xbf16, #tpu.memory_space<vmem>>, vector<1x1x8x8xbf16>
    %95 = vector.shape_cast %94 : vector<1x1x8x8xbf16> to vector<8x8xbf16>
    %96 = arith.truncf %91 : vector<8x8xf32> to vector<8x8xbf16>
    %cst_67 = arith.constant dense<0.000000e+00> : vector<8x8xf32>
    %97 = tpu.matmul %96, %93, %cst_67 {dimension_numbers = #tpu.dot_dimension_numbers<[1], [1], [0], [0], [0, 0, 1, 0], [], []>} : vector<8x8xbf16>, vector<8x8xbf16>, vector<8x8xf32> -> vector<8x8xf32>
    %98 = arith.addf %97, %13 : vector<8x8xf32>
    %cst_68 = arith.constant dense<0xFF800000> : vector<8xf32>
    %99 = vector.multi_reduction <maximumf>, %98, %cst_68 [1] : vector<8x8xf32> to vector<8xf32>
    %100 = vector.shape_cast %99 : vector<8xf32> to vector<8x1xf32>
    %101 = vector.broadcast %100 : vector<8x1xf32> to vector<8x8xf32>
    %102 = arith.subf %98, %101 : vector<8x8xf32>
    %103 = math.exp %102 : vector<8x8xf32>
    %cst_69 = arith.constant dense<0.000000e+00> : vector<8xf32>
    %104 = vector.multi_reduction <add>, %103, %cst_69 [1] : vector<8x8xf32> to vector<8xf32>
    %105 = vector.shape_cast %104 : vector<8xf32> to vector<8x1xf32>
    %106 = tpu.reciprocal %105 {approx = true} : vector<8x1xf32> -> vector<8x1xf32>
    %107 = vector.broadcast %106 : vector<8x1xf32> to vector<8x8xf32>
    %108 = arith.mulf %103, %107 : vector<8x8xf32>
    %109 = arith.truncf %108 : vector<8x8xf32> to vector<8x8xbf16>
    %cst_70 = arith.constant dense<0.000000e+00> : vector<8x8xf32>
    %110 = tpu.matmul %109, %95, %cst_70 {dimension_numbers = #tpu.dot_dimension_numbers<[1], [0], [0], [1], [0, 0, 1, 1], [], []>} : vector<8x8xbf16>, vector<8x8xbf16>, vector<8x8xf32> -> vector<8x8xf32>
    %111 = arith.truncf %110 : vector<8x8xf32> to vector<8x8xbf16>
    %c2_71 = arith.constant 2 : index
    %c0_72 = arith.constant 0 : index
    %c0_73 = arith.constant 0 : index
    %112 = vector.load %arg7[%c2_71, %c0_72, %c0_73] : memref<4x8x32xbf16, #tpu.memory_space<vmem>>, vector<1x8x32xbf16>
    %113 = vector.shape_cast %112 : vector<1x8x32xbf16> to vector<8x32xbf16>
    %cst_74 = arith.constant dense<0.000000e+00> : vector<8x32xf32>
    %114 = tpu.matmul %111, %113, %cst_74 {dimension_numbers = #tpu.dot_dimension_numbers<[1], [0], [0], [1], [0, 0, 1, 1], [], []>} : vector<8x8xbf16>, vector<8x32xbf16>, vector<8x32xf32> -> vector<8x32xf32>
    %115 = arith.addf %82, %114 : vector<8x32xf32>
    %c3 = arith.constant 3 : index
    %c0_75 = arith.constant 0 : index
    %c0_76 = arith.constant 0 : index
    %116 = vector.load %arg5[%c3, %c0_75, %c0_76] : memref<4x32x8xbf16, #tpu.memory_space<vmem>>, vector<1x32x8xbf16>
    %117 = vector.shape_cast %116 : vector<1x32x8xbf16> to vector<32x8xbf16>
    %cst_77 = arith.constant dense<0.000000e+00> : vector<8x8xf32>
    %118 = tpu.matmul %2, %117, %cst_77 {dimension_numbers = #tpu.dot_dimension_numbers<[1], [0], [0], [1], [0, 0, 1, 1], [], []>} : vector<8x32xbf16>, vector<32x8xbf16>, vector<8x8xf32> -> vector<8x8xf32>
    %c3_78 = arith.constant 3 : index
    %c0_79 = arith.constant 0 : index
    %c0_80 = arith.constant 0 : index
    %119 = vector.load %arg6[%c3_78, %c0_79, %c0_80] : memref<4x1x8xf32, #tpu.memory_space<vmem>>, vector<1x1x8xf32>
    %120 = vector.shape_cast %119 : vector<1x1x8xf32> to vector<1x8xf32>
    %121 = vector.broadcast %120 : vector<1x8xf32> to vector<8x8xf32>
    %122 = arith.addf %118, %121 : vector<8x8xf32>
    %cst_81 = arith.constant 0.353553385 : f32
    %123 = vector.broadcast %cst_81 : f32 to vector<8x8xf32>
    %124 = arith.mulf %122, %123 : vector<8x8xf32>
    %c0_82 = arith.constant 0 : index
    %c3_83 = arith.constant 3 : index
    %c0_84 = arith.constant 0 : index
    %c0_85 = arith.constant 0 : index
    %125 = vector.load %arg3[%c0_82, %c3_83, %c0_84, %c0_85] : memref<1x4x8x8xbf16, #tpu.memory_space<vmem>>, vector<1x1x8x8xbf16>
    %126 = vector.shape_cast %125 : vector<1x1x8x8xbf16> to vector<8x8xbf16>
    %c0_86 = arith.constant 0 : index
    %c3_87 = arith.constant 3 : index
    %c0_88 = arith.constant 0 : index
    %c0_89 = arith.constant 0 : index
    %127 = vector.load %arg4[%c0_86, %c3_87, %c0_88, %c0_89] : memref<1x4x8x8xbf16, #tpu.memory_space<vmem>>, vector<1x1x8x8xbf16>
    %128 = vector.shape_cast %127 : vector<1x1x8x8xbf16> to vector<8x8xbf16>
    %129 = arith.truncf %124 : vector<8x8xf32> to vector<8x8xbf16>
    %cst_90 = arith.constant dense<0.000000e+00> : vector<8x8xf32>
    %130 = tpu.matmul %129, %126, %cst_90 {dimension_numbers = #tpu.dot_dimension_numbers<[1], [1], [0], [0], [0, 0, 1, 0], [], []>} : vector<8x8xbf16>, vector<8x8xbf16>, vector<8x8xf32> -> vector<8x8xf32>
    %131 = arith.addf %130, %13 : vector<8x8xf32>
    %cst_91 = arith.constant dense<0xFF800000> : vector<8xf32>
    %132 = vector.multi_reduction <maximumf>, %131, %cst_91 [1] : vector<8x8xf32> to vector<8xf32>
    %133 = vector.shape_cast %132 : vector<8xf32> to vector<8x1xf32>
    %134 = vector.broadcast %133 : vector<8x1xf32> to vector<8x8xf32>
    %135 = arith.subf %131, %134 : vector<8x8xf32>
    %136 = math.exp %135 : vector<8x8xf32>
    %cst_92 = arith.constant dense<0.000000e+00> : vector<8xf32>
    %137 = vector.multi_reduction <add>, %136, %cst_92 [1] : vector<8x8xf32> to vector<8xf32>
    %138 = vector.shape_cast %137 : vector<8xf32> to vector<8x1xf32>
    %139 = tpu.reciprocal %138 {approx = true} : vector<8x1xf32> -> vector<8x1xf32>
    %140 = vector.broadcast %139 : vector<8x1xf32> to vector<8x8xf32>
    %141 = arith.mulf %136, %140 : vector<8x8xf32>
    %142 = arith.truncf %141 : vector<8x8xf32> to vector<8x8xbf16>
    %cst_93 = arith.constant dense<0.000000e+00> : vector<8x8xf32>
    %143 = tpu.matmul %142, %128, %cst_93 {dimension_numbers = #tpu.dot_dimension_numbers<[1], [0], [0], [1], [0, 0, 1, 1], [], []>} : vector<8x8xbf16>, vector<8x8xbf16>, vector<8x8xf32> -> vector<8x8xf32>
    %144 = arith.truncf %143 : vector<8x8xf32> to vector<8x8xbf16>
    %c3_94 = arith.constant 3 : index
    %c0_95 = arith.constant 0 : index
    %c0_96 = arith.constant 0 : index
    %145 = vector.load %arg7[%c3_94, %c0_95, %c0_96] : memref<4x8x32xbf16, #tpu.memory_space<vmem>>, vector<1x8x32xbf16>
    %146 = vector.shape_cast %145 : vector<1x8x32xbf16> to vector<8x32xbf16>
    %cst_97 = arith.constant dense<0.000000e+00> : vector<8x32xf32>
    %147 = tpu.matmul %144, %146, %cst_97 {dimension_numbers = #tpu.dot_dimension_numbers<[1], [0], [0], [1], [0, 0, 1, 1], [], []>} : vector<8x8xbf16>, vector<8x32xbf16>, vector<8x32xf32> -> vector<8x32xf32>
    %148 = arith.addf %115, %147 : vector<8x32xf32>
    %c0_98 = arith.constant 0 : index
    %c0_99 = arith.constant 0 : index
    %149 = vector.load %arg9[%c0_98, %c0_99] : memref<1x32xf32, #tpu.memory_space<vmem>>, vector<1x32xf32>
    %c0_100 = arith.constant 0 : index
    %c0_101 = arith.constant 0 : index
    %150 = vector.load %arg10[%c0_100, %c0_101] : memref<1x32xf32, #tpu.memory_space<vmem>>, vector<1x32xf32>
    %cst_102 = arith.constant dense<0.000000e+00> : vector<8xf32>
    %151 = vector.multi_reduction <add>, %148, %cst_102 [1] : vector<8x32xf32> to vector<8xf32>
    %152 = vector.shape_cast %151 : vector<8xf32> to vector<8x1xf32>
    %cst_103 = arith.constant 3.200000e+01 : f32
    %153 = vector.broadcast %cst_103 : f32 to vector<8x1xf32>
    %154 = arith.divf %152, %153 : vector<8x1xf32>
    %155 = vector.broadcast %154 : vector<8x1xf32> to vector<8x32xf32>
    %156 = arith.subf %148, %155 : vector<8x32xf32>
    %157 = arith.mulf %156, %156 : vector<8x32xf32>
    %cst_104 = arith.constant dense<0.000000e+00> : vector<8xf32>
    %158 = vector.multi_reduction <add>, %157, %cst_104 [1] : vector<8x32xf32> to vector<8xf32>
    %159 = vector.shape_cast %158 : vector<8xf32> to vector<8x1xf32>
    %cst_105 = arith.constant 3.200000e+01 : f32
    %160 = vector.broadcast %cst_105 : f32 to vector<8x1xf32>
    %161 = arith.divf %159, %160 : vector<8x1xf32>
    %162 = vector.broadcast %154 : vector<8x1xf32> to vector<8x32xf32>
    %163 = arith.subf %148, %162 : vector<8x32xf32>
    %cst_106 = arith.constant 9.99999974E-6 : f32
    %164 = vector.broadcast %cst_106 : f32 to vector<8x1xf32>
    %165 = arith.addf %161, %164 : vector<8x1xf32>
    %166 = math.rsqrt %165 : vector<8x1xf32>
    %167 = vector.broadcast %166 : vector<8x1xf32> to vector<8x32xf32>
    %168 = arith.mulf %163, %167 : vector<8x32xf32>
    %169 = vector.broadcast %149 : vector<1x32xf32> to vector<8x32xf32>
    %170 = arith.mulf %168, %169 : vector<8x32xf32>
    %171 = vector.broadcast %150 : vector<1x32xf32> to vector<8x32xf32>
    %172 = arith.addf %170, %171 : vector<8x32xf32>
    %c0_107 = arith.constant 0 : index
    %c0_108 = arith.constant 0 : index
    %c0_109 = arith.constant 0 : index
    %173 = vector.load %arg11[%c0_107, %c0_108, %c0_109] : memref<1x8x32xf32, #tpu.memory_space<vmem>>, vector<1x8x32xf32>
    %174 = vector.shape_cast %173 : vector<1x8x32xf32> to vector<8x32xf32>
    %175 = vector.shape_cast %172 : vector<8x32xf32> to vector<1x8x32xf32>
    tpu.vector_store %arg11[%c0_107, %c0_108, %c0_109], %175 {strides = array<i32>} : memref<1x8x32xf32, #tpu.memory_space<vmem>>, vector<1x8x32xf32>,
    return
  }
  func.func @transform_0(%arg0: i32, %arg1: i32) -> (i32, i32, i32) {
    %c0_i32 = arith.constant 0 : i32
    %c0_i32_0 = arith.constant 0 : i32
    return %arg0, %arg1, %c0_i32 : i32, i32, i32
  }
  func.func @transform_1(%arg0: i32, %arg1: i32) -> (i32, i32, i32, i32) {
    %c0_i32 = arith.constant 0 : i32
    %c0_i32_0 = arith.constant 0 : i32
    %c0_i32_1 = arith.constant 0 : i32
    %c0_i32_2 = arith.constant 0 : i32
    return %arg0, %c0_i32, %c0_i32_0, %c0_i32_1 : i32, i32, i32, i32
  }
  func.func @transform_2(%arg0: i32, %arg1: i32) -> (i32, i32, i32, i32) {
    %c0_i32 = arith.constant 0 : i32
    %c0_i32_0 = arith.constant 0 : i32
    %c0_i32_1 = arith.constant 0 : i32
    %c0_i32_2 = arith.constant 0 : i32
    return %arg0, %c0_i32, %c0_i32_0, %c0_i32_1 : i32, i32, i32, i32
  }
  func.func @transform_3(%arg0: i32, %arg1: i32) -> (i32, i32, i32) {
    %c0_i32 = arith.constant 0 : i32
    %c0_i32_0 = arith.constant 0 : i32
    %c0_i32_1 = arith.constant 0 : i32
    %c0_i32_2 = arith.constant 0 : i32
    return %c0_i32, %c0_i32_0, %c0_i32_1 : i32, i32, i32
  }
  func.func @transform_4(%arg0: i32, %arg1: i32) -> (i32, i32, i32) {
    %c0_i32 = arith.constant 0 : i32
    %c0_i32_0 = arith.constant 0 : i32
    %c0_i32_1 = arith.constant 0 : i32
    %c0_i32_2 = arith.constant 0 : i32
    return %c0_i32, %c0_i32_0, %c0_i32_1 : i32, i32, i32
  }
  func.func @transform_5(%arg0: i32, %arg1: i32) -> (i32, i32, i32) {
    %c0_i32 = arith.constant 0 : i32
    %c0_i32_0 = arith.constant 0 : i32
    %c0_i32_1 = arith.constant 0 : i32
    %c0_i32_2 = arith.constant 0 : i32
    return %c0_i32, %c0_i32_0, %c0_i32_1 : i32, i32, i32
  }
  func.func @transform_6(%arg0: i32, %arg1: i32) -> (i32, i32) {
    %c0_i32 = arith.constant 0 : i32
    %c0_i32_0 = arith.constant 0 : i32
    %c0_i32_1 = arith.constant 0 : i32
    return %c0_i32, %c0_i32_0 : i32, i32
  }
  func.func @transform_7(%arg0: i32, %arg1: i32) -> (i32, i32) {
    %c0_i32 = arith.constant 0 : i32
    %c0_i32_0 = arith.constant 0 : i32
    %c0_i32_1 = arith.constant 0 : i32
    return %c0_i32, %c0_i32_0 : i32, i32
  }
  func.func @transform_8(%arg0: i32, %arg1: i32) -> (i32, i32) {
    %c0_i32 = arith.constant 0 : i32
    %c0_i32_0 = arith.constant 0 : i32
    %c0_i32_1 = arith.constant 0 : i32
    return %c0_i32, %c0_i32_0 : i32, i32
  }
  func.func @transform_9(%arg0: i32, %arg1: i32) -> (i32, i32, i32) {
    %c0_i32 = arith.constant 0 : i32
    %c0_i32_0 = arith.constant 0 : i32
    return %arg0, %arg1, %c0_i32 : i32, i32, i32
  }
}

module attributes {stable_mosaic.version = 11 : i64} {
  func.func @_ffn_kernel(%arg0: i32, %arg1: memref<16x32xf32, #tpu.memory_space<vmem>>, %arg2: memref<32x64xbf16, #tpu.memory_space<vmem>>, %arg3: memref<1x64xf32, #tpu.memory_space<vmem>>, %arg4: memref<64x32xbf16, #tpu.memory_space<vmem>>, %arg5: memref<1x32xf32, #tpu.memory_space<vmem>>, %arg6: memref<1x32xf32, #tpu.memory_space<vmem>>, %arg7: memref<1x32xf32, #tpu.memory_space<vmem>>, %arg8: memref<16x32xf32, #tpu.memory_space<vmem>>) attributes {dimension_semantics = [#tpu.dimension_semantics<parallel>], iteration_bounds = array<i64: 1>, scalar_prefetch = 0 : i64, scratch_operands = 0 : i64, tpu.core_type = #tpu.core_type<tc>, window_params = [{transform_indices = @transform_0, window_bounds = array<i64: 16, 32>}, {pipeline_mode = #tpu.pipeline_mode<synchronous>, transform_indices = @transform_1, window_bounds = array<i64: 32, 64>}, {pipeline_mode = #tpu.pipeline_mode<synchronous>, transform_indices = @transform_2, window_bounds = array<i64: 1, 64>}, {pipeline_mode = #tpu.pipeline_mode<synchronous>, transform_indices = @transform_3, window_bounds = array<i64: 64, 32>}, {pipeline_mode = #tpu.pipeline_mode<synchronous>, transform_indices = @transform_4, window_bounds = array<i64: 1, 32>}, {pipeline_mode = #tpu.pipeline_mode<synchronous>, transform_indices = @transform_5, window_bounds = array<i64: 1, 32>}, {pipeline_mode = #tpu.pipeline_mode<synchronous>, transform_indices = @transform_6, window_bounds = array<i64: 1, 32>}, {transform_indices = @transform_7, window_bounds = array<i64: 16, 32>}]} {
    %c0 = arith.constant 0 : index
    %c0_0 = arith.constant 0 : index
    %0 = vector.load %arg1[%c0, %c0_0] : memref<16x32xf32, #tpu.memory_space<vmem>>, vector<16x32xf32>
    %1 = arith.truncf %0 : vector<16x32xf32> to vector<16x32xbf16>
    %c0_1 = arith.constant 0 : index
    %c0_2 = arith.constant 0 : index
    %2 = vector.load %arg2[%c0_1, %c0_2] : memref<32x64xbf16, #tpu.memory_space<vmem>>, vector<32x64xbf16>
    %cst = arith.constant dense<0.000000e+00> : vector<16x64xf32>
    %3 = tpu.matmul %1, %2, %cst {dimension_numbers = #tpu.dot_dimension_numbers<[1], [0], [0], [1], [0, 0, 1, 1], [], []>} : vector<16x32xbf16>, vector<32x64xbf16>, vector<16x64xf32> -> vector<16x64xf32>
    %c0_3 = arith.constant 0 : index
    %c0_4 = arith.constant 0 : index
    %4 = vector.load %arg3[%c0_3, %c0_4] : memref<1x64xf32, #tpu.memory_space<vmem>>, vector<1x64xf32>
    %5 = vector.broadcast %4 : vector<1x64xf32> to vector<16x64xf32>
    %6 = arith.addf %3, %5 : vector<16x64xf32>
    %cst_5 = arith.constant 0.000000e+00 : f32
    %7 = vector.broadcast %cst_5 : f32 to vector<16x64xf32>
    %8 = arith.maximumf %6, %7 : vector<16x64xf32>
    %9 = arith.truncf %8 : vector<16x64xf32> to vector<16x64xbf16>
    %c0_6 = arith.constant 0 : index
    %c0_7 = arith.constant 0 : index
    %10 = vector.load %arg4[%c0_6, %c0_7] : memref<64x32xbf16, #tpu.memory_space<vmem>>, vector<64x32xbf16>
    %cst_8 = arith.constant dense<0.000000e+00> : vector<16x32xf32>
    %11 = tpu.matmul %9, %10, %cst_8 {dimension_numbers = #tpu.dot_dimension_numbers<[1], [0], [0], [1], [0, 0, 1, 1], [], []>} : vector<16x64xbf16>, vector<64x32xbf16>, vector<16x32xf32> -> vector<16x32xf32>
    %c0_9 = arith.constant 0 : index
    %c0_10 = arith.constant 0 : index
    %12 = vector.load %arg5[%c0_9, %c0_10] : memref<1x32xf32, #tpu.memory_space<vmem>>, vector<1x32xf32>
    %13 = vector.broadcast %12 : vector<1x32xf32> to vector<16x32xf32>
    %14 = arith.addf %11, %13 : vector<16x32xf32>
    %15 = arith.addf %14, %0 : vector<16x32xf32>
    %c0_11 = arith.constant 0 : index
    %c0_12 = arith.constant 0 : index
    %16 = vector.load %arg6[%c0_11, %c0_12] : memref<1x32xf32, #tpu.memory_space<vmem>>, vector<1x32xf32>
    %c0_13 = arith.constant 0 : index
    %c0_14 = arith.constant 0 : index
    %17 = vector.load %arg7[%c0_13, %c0_14] : memref<1x32xf32, #tpu.memory_space<vmem>>, vector<1x32xf32>
    %cst_15 = arith.constant dense<0.000000e+00> : vector<16xf32>
    %18 = vector.multi_reduction <add>, %15, %cst_15 [1] : vector<16x32xf32> to vector<16xf32>
    %19 = vector.shape_cast %18 : vector<16xf32> to vector<16x1xf32>
    %cst_16 = arith.constant 3.200000e+01 : f32
    %20 = vector.broadcast %cst_16 : f32 to vector<16x1xf32>
    %21 = arith.divf %19, %20 : vector<16x1xf32>
    %22 = vector.broadcast %21 : vector<16x1xf32> to vector<16x32xf32>
    %23 = arith.subf %15, %22 : vector<16x32xf32>
    %24 = arith.mulf %23, %23 : vector<16x32xf32>
    %cst_17 = arith.constant dense<0.000000e+00> : vector<16xf32>
    %25 = vector.multi_reduction <add>, %24, %cst_17 [1] : vector<16x32xf32> to vector<16xf32>
    %26 = vector.shape_cast %25 : vector<16xf32> to vector<16x1xf32>
    %cst_18 = arith.constant 3.200000e+01 : f32
    %27 = vector.broadcast %cst_18 : f32 to vector<16x1xf32>
    %28 = arith.divf %26, %27 : vector<16x1xf32>
    %29 = vector.broadcast %21 : vector<16x1xf32> to vector<16x32xf32>
    %30 = arith.subf %15, %29 : vector<16x32xf32>
    %cst_19 = arith.constant 9.99999974E-6 : f32
    %31 = vector.broadcast %cst_19 : f32 to vector<16x1xf32>
    %32 = arith.addf %28, %31 : vector<16x1xf32>
    %33 = math.rsqrt %32 : vector<16x1xf32>
    %34 = vector.broadcast %33 : vector<16x1xf32> to vector<16x32xf32>
    %35 = arith.mulf %30, %34 : vector<16x32xf32>
    %36 = vector.broadcast %16 : vector<1x32xf32> to vector<16x32xf32>
    %37 = arith.mulf %35, %36 : vector<16x32xf32>
    %38 = vector.broadcast %17 : vector<1x32xf32> to vector<16x32xf32>
    %39 = arith.addf %37, %38 : vector<16x32xf32>
    %c0_20 = arith.constant 0 : index
    %c0_21 = arith.constant 0 : index
    %40 = vector.load %arg8[%c0_20, %c0_21] : memref<16x32xf32, #tpu.memory_space<vmem>>, vector<16x32xf32>
    tpu.vector_store %arg8[%c0_20, %c0_21], %39 {strides = array<i32>} : memref<16x32xf32, #tpu.memory_space<vmem>>, vector<16x32xf32>,
    return
  }
  func.func @transform_0(%arg0: i32) -> (i32, i32) {
    %c0_i32 = arith.constant 0 : i32
    %c0_i32_0 = arith.constant 0 : i32
    return %arg0, %c0_i32 : i32, i32
  }
  func.func @transform_1(%arg0: i32) -> (i32, i32) {
    %c0_i32 = arith.constant 0 : i32
    %c0_i32_0 = arith.constant 0 : i32
    %c0_i32_1 = arith.constant 0 : i32
    return %c0_i32, %c0_i32_0 : i32, i32
  }
  func.func @transform_2(%arg0: i32) -> (i32, i32) {
    %c0_i32 = arith.constant 0 : i32
    %c0_i32_0 = arith.constant 0 : i32
    %c0_i32_1 = arith.constant 0 : i32
    return %c0_i32, %c0_i32_0 : i32, i32
  }
  func.func @transform_3(%arg0: i32) -> (i32, i32) {
    %c0_i32 = arith.constant 0 : i32
    %c0_i32_0 = arith.constant 0 : i32
    %c0_i32_1 = arith.constant 0 : i32
    return %c0_i32, %c0_i32_0 : i32, i32
  }
  func.func @transform_4(%arg0: i32) -> (i32, i32) {
    %c0_i32 = arith.constant 0 : i32
    %c0_i32_0 = arith.constant 0 : i32
    %c0_i32_1 = arith.constant 0 : i32
    return %c0_i32, %c0_i32_0 : i32, i32
  }
  func.func @transform_5(%arg0: i32) -> (i32, i32) {
    %c0_i32 = arith.constant 0 : i32
    %c0_i32_0 = arith.constant 0 : i32
    %c0_i32_1 = arith.constant 0 : i32
    return %c0_i32, %c0_i32_0 : i32, i32
  }
  func.func @transform_6(%arg0: i32) -> (i32, i32) {
    %c0_i32 = arith.constant 0 : i32
    %c0_i32_0 = arith.constant 0 : i32
    %c0_i32_1 = arith.constant 0 : i32
    return %c0_i32, %c0_i32_0 : i32, i32
  }
  func.func @transform_7(%arg0: i32) -> (i32, i32) {
    %c0_i32 = arith.constant 0 : i32
    %c0_i32_0 = arith.constant 0 : i32
    return %arg0, %c0_i32 : i32, i32
  }
}

</mosaic_0001>

<llo_original>
// kernel: decoder_layer.5
$region0: #{decoder_layer.5}
  #allocation0 [shape = 'u32[]', space=smem, size = 0x4, offset = 0x4, fixed_abs, tag = 'smem constant byte address 0x4 - core index']
  #allocation1 [shape = 'u32[144,128]{1,0:T(1,128)}', space=vmem, size = 0x12000, scoped, tag = 'internal scratch']
  %s0 = inlined_call_operand.vmem [shape: f32[2,8,32], index: 0, kind: input, shape index: {}]
  %s1 = inlined_call_operand.vmem [shape: bf16[4,32,8], index: 1, kind: input, shape index: {}]
  %s2 = inlined_call_operand.vmem [shape: f32[4,1,8], index: 2, kind: input, shape index: {}]
  %s3 = inlined_call_operand.vmem [shape: bf16[4,32,8], index: 3, kind: input, shape index: {}]
  %s4 = inlined_call_operand.vmem [shape: f32[4,1,8], index: 4, kind: input, shape index: {}]
  %s5 = inlined_call_operand.vmem [shape: bf16[2,4,8,8], index: 5, kind: output, shape index: {0}]
  %s6 = inlined_call_operand.vmem [shape: bf16[2,4,8,8], index: 6, kind: output, shape index: {1}]
  %7 = xla_tuple %s5, %s6
  %s8 = sld [smem:[#allocation0]]
  $region61: #{decoder_layer.5} parent=0
    _
  %s10 = ssub.s32 1, %s8
  %s11 = scalar_select 0, %s10, %s8
  loop: start=0, step=1, limit=4
  $region2: #{decoder_layer.5} parent=0 // loop_pre_header
    _
  $region3: #{decoder_layer.5} parent=0 // loop_header
    %s13 = sphi 0, %s17
    %p14 = scmp.ge.s32.totalorder %s13, 4
    %s20 = sphi 0, %s32
    %s21 = sphi 0, %s28
    %s22 = sphi 0, %s20
    %s23 = sphi 0, %s21
    %s24 = sphi 0, %s22
    %s25 = sphi 0, %s23
    %s37 = sphi 0, %s39
    %s40 = sphi 0, %s37
    %s41 = sphi 0, %s40
    %s57 = sphi 0, %s41
    %s61 = sphi 0, %s61
    %s63 = sphi 0, %s61
    %s64 = sphi 0, %s63
    %s78 = sphi 0, %s64
    %s82 = sphi 0, %s82
    %s84 = sphi 0, %s82
    %s85 = sphi 0, %s84
    %s99 = sphi 0, %s85
    %s103 = sphi 0, %s103
    %s105 = sphi 0, %s103
    %s106 = sphi 0, %s105
    %s120 = sphi 0, %s106
    %s124 = sphi 0, %s124
    %s126 = sphi 0, %s124
    %s127 = sphi 0, %s126
    %s141 = sphi 0, %s127
    %s149 = sphi 0, %s151
    %s152 = sphi 0, %s149
    %s153 = sphi 0, %s152
    %s169 = sphi 0, %s153
    %s177 = sphi 0, %s179
    %s180 = sphi 0, %s177
    %s181 = sphi 0, %s180
    %s197 = sphi 0, %s181
  $region4: #{decoder_layer.5} parent=0 // loop_header_branch
    %16 = sbr.rel (%p14) target = $region8
  $region5: #{decoder_layer.5} parent=0 // loop_body
    %s18 = ssub.s32 %s13, 1
    %s19 = ssub.s32 %s13, 2
    %s26 = sadd.s32 1, %s21
    %p27 = scmp.ge.s32.totalorder %s26, 1
    %s28 = scalar_select %p27, 0, %s26
    %s29 = sadd.s32 1, %s20
    %s30 = scalar_select %p27, %s29, %s20
    %p31 = scmp.ge.s32.totalorder %s30, 2
    %s32 = scalar_select %p31, 0, %s30
    %s33 = ssub.s32 %s20, %s32
    %s34 = ssub.s32 %s21, %s28
    %s35 = sor.u32 %s33, %s34
    %p36 = scmp.eq.s32.totalorder %s35, 0
    %s38 = sadd.s32 %s37, 1
    %s39 = scalar_select %p36, %s37, %s38
    %p42 = pneg %p36
    %p43 = scmp.eq.s32.totalorder %s13, 1
    %p44 = por %p42, %p43
    %p45 = scmp.ne.s32.totalorder %s37, %s40
    %p46 = scmp.eq.s32.totalorder %s13, 0
    %p47 = por %p45, %p46
    %p48 = scmp.ne.s32.totalorder %s37, %s40
    %p49 = scmp.eq.s32.totalorder %s18, 1
    %p50 = por %p48, %p49
    %p51 = scmp.ne.s32.totalorder %s40, %s41
    %p52 = scmp.eq.s32.totalorder %s18, 0
    %p53 = por %p51, %p52
    %p54 = scmp.ne.s32.totalorder %s40, %s41
    %p55 = scmp.eq.s32.totalorder %s19, 1
    %p56 = por %p54, %p55
    %p58 = scmp.ne.s32.totalorder %s41, %s57
    %p59 = scmp.eq.s32.totalorder %s19, 0
    %p60 = por %p58, %p59
    %s62 = sadd.s32 %s61, 1
    %p65 = scmp.eq.s32.totalorder %s13, 1
    %p66 = scmp.ne.s32.totalorder %s61, %s63
    %p67 = scmp.eq.s32.totalorder %s13, 0
    %p68 = por %p66, %p67
    %p69 = scmp.ne.s32.totalorder %s61, %s63
    %p70 = scmp.eq.s32.totalorder %s18, 1
    %p71 = por %p69, %p70
    %p72 = scmp.ne.s32.totalorder %s63, %s64
    %p73 = scmp.eq.s32.totalorder %s18, 0
    %p74 = por %p72, %p73
    %p75 = scmp.ne.s32.totalorder %s63, %s64
    %p76 = scmp.eq.s32.totalorder %s19, 1
    %p77 = por %p75, %p76
    %p79 = scmp.ne.s32.totalorder %s64, %s78
    %p80 = scmp.eq.s32.totalorder %s19, 0
    %p81 = por %p79, %p80
    %s83 = sadd.s32 %s82, 1
    %p86 = scmp.eq.s32.totalorder %s13, 1
    %p87 = scmp.ne.s32.totalorder %s82, %s84
    %p88 = scmp.eq.s32.totalorder %s13, 0
    %p89 = por %p87, %p88
    %p90 = scmp.ne.s32.totalorder %s82, %s84
    %p91 = scmp.eq.s32.totalorder %s18, 1
    %p92 = por %p90, %p91
    %p93 = scmp.ne.s32.totalorder %s84, %s85
    %p94 = scmp.eq.s32.totalorder %s18, 0
    %p95 = por %p93, %p94
    %p96 = scmp.ne.s32.totalorder %s84, %s85
    %p97 = scmp.eq.s32.totalorder %s19, 1
    %p98 = por %p96, %p97
    %p100 = scmp.ne.s32.totalorder %s85, %s99
    %p101 = scmp.eq.s32.totalorder %s19, 0
    %p102 = por %p100, %p101
    %s104 = sadd.s32 %s103, 1
    %p107 = scmp.eq.s32.totalorder %s13, 1
    %p108 = scmp.ne.s32.totalorder %s103, %s105
    %p109 = scmp.eq.s32.totalorder %s13, 0
    %p110 = por %p108, %p109
    %p111 = scmp.ne.s32.totalorder %s103, %s105
    %p112 = scmp.eq.s32.totalorder %s18, 1
    %p113 = por %p111, %p112
    %p114 = scmp.ne.s32.totalorder %s105, %s106
    %p115 = scmp.eq.s32.totalorder %s18, 0
    %p116 = por %p114, %p115
    %p117 = scmp.ne.s32.totalorder %s105, %s106
    %p118 = scmp.eq.s32.totalorder %s19, 1
    %p119 = por %p117, %p118
    %p121 = scmp.ne.s32.totalorder %s106, %s120
    %p122 = scmp.eq.s32.totalorder %s19, 0
    %p123 = por %p121, %p122
    %s125 = sadd.s32 %s124, 1
    %p128 = scmp.eq.s32.totalorder %s13, 1
    %p129 = scmp.ne.s32.totalorder %s124, %s126
    %p130 = scmp.eq.s32.totalorder %s13, 0
    %p131 = por %p129, %p130
    %p132 = scmp.ne.s32.totalorder %s124, %s126
    %p133 = scmp.eq.s32.totalorder %s18, 1
    %p134 = por %p132, %p133
    %p135 = scmp.ne.s32.totalorder %s126, %s127
    %p136 = scmp.eq.s32.totalorder %s18, 0
    %p137 = por %p135, %p136
    %p138 = scmp.ne.s32.totalorder %s126, %s127
    %p139 = scmp.eq.s32.totalorder %s19, 1
    %p140 = por %p138, %p139
    %p142 = scmp.ne.s32.totalorder %s127, %s141
    %p143 = scmp.eq.s32.totalorder %s19, 0
    %p144 = por %p142, %p143
    %s145 = ssub.s32 %s20, %s32
    %s146 = ssub.s32 %s21, %s28
    %s147 = sor.u32 %s145, %s146
    %p148 = scmp.eq.s32.totalorder %s147, 0
    %s150 = sadd.s32 %s149, 1
    %s151 = scalar_select %p148, %s149, %s150
    %p154 = pneg %p148
    %p155 = scmp.eq.s32.totalorder %s13, 1
    %p156 = por %p154, %p155
    %p157 = scmp.ne.s32.totalorder %s149, %s152
    %p158 = scmp.eq.s32.totalorder %s13, 0
    %p159 = por %p157, %p158
    %p160 = scmp.ne.s32.totalorder %s149, %s152
    %p161 = scmp.eq.s32.totalorder %s18, 1
    %p162 = por %p160, %p161
    %p163 = scmp.ne.s32.totalorder %s152, %s153
    %p164 = scmp.eq.s32.totalorder %s18, 0
    %p165 = por %p163, %p164
    %p166 = scmp.ne.s32.totalorder %s152, %s153
    %p167 = scmp.eq.s32.totalorder %s19, 1
    %p168 = por %p166, %p167
    %p170 = scmp.ne.s32.totalorder %s153, %s169
    %p171 = scmp.eq.s32.totalorder %s19, 0
    %p172 = por %p170, %p171
    %s173 = ssub.s32 %s20, %s32
    %s174 = ssub.s32 %s21, %s28
    %s175 = sor.u32 %s173, %s174
    %p176 = scmp.eq.s32.totalorder %s175, 0
    %s178 = sadd.s32 %s177, 1
    %s179 = scalar_select %p176, %s177, %s178
    %p182 = pneg %p176
    %p183 = scmp.eq.s32.totalorder %s13, 1
    %p184 = por %p182, %p183
    %p185 = scmp.ne.s32.totalorder %s177, %s180
    %p186 = scmp.eq.s32.totalorder %s13, 0
    %p187 = por %p185, %p186
    %p188 = scmp.ne.s32.totalorder %s177, %s180
    %p189 = scmp.eq.s32.totalorder %s18, 1
    %p190 = por %p188, %p189
    %p191 = scmp.ne.s32.totalorder %s180, %s181
    %p192 = scmp.eq.s32.totalorder %s18, 0
    %p193 = por %p191, %p192
    %p194 = scmp.ne.s32.totalorder %s180, %s181
    %p195 = scmp.eq.s32.totalorder %s19, 1
    %p196 = por %p194, %p195
    %p198 = scmp.ne.s32.totalorder %s181, %s197
    %p199 = scmp.eq.s32.totalorder %s19, 0
    %p200 = por %p198, %p199
    %p201 = scmp.le.s32.totalorder 1, %s13
    %p202 = scmp.lt.s32.totalorder %s13, 3
    %p203 = pnand %p201, %p202
    %p204 = pneg %p203
    // Predicated region
    $region9: #{decoder_layer.5} parent=5 // pred_check
      _
    $region10: #{decoder_layer.5} parent=5 // pred_check_branch
      %206 = sbr.rel (%p203) target = $region12
    $region11: #{decoder_layer.5} parent=5 // pred_region
      %s207 = ssub.s32 %s13, 1
      // Predicated region
      $region13: #{decoder_layer.5} parent=11 // pred_check
        %p208 = pneg %p74
      $region14: #{decoder_layer.5} parent=11 // pred_check_branch
        %210 = sbr.rel (%p208) target = $region16
      $region15: #{decoder_layer.5} parent=11 // pred_region
        _
      $region16: #{decoder_layer.5} parent=11 // pred_fallthru
        _
      // Predicated region
      $region17: #{decoder_layer.5} parent=11 // pred_check
        %p211 = pneg %p95
      $region18: #{decoder_layer.5} parent=11 // pred_check_branch
        %213 = sbr.rel (%p211) target = $region20
      $region19: #{decoder_layer.5} parent=11 // pred_region
        _
      $region20: #{decoder_layer.5} parent=11 // pred_fallthru
        _
      // Predicated region
      $region21: #{decoder_layer.5} parent=11 // pred_check
        %p214 = pneg %p116
      $region22: #{decoder_layer.5} parent=11 // pred_check_branch
        %216 = sbr.rel (%p214) target = $region24
      $region23: #{decoder_layer.5} parent=11 // pred_region
        _
      $region24: #{decoder_layer.5} parent=11 // pred_fallthru
        _
      // Predicated region
      $region25: #{decoder_layer.5} parent=11 // pred_check
        %p217 = pneg %p137
      $region26: #{decoder_layer.5} parent=11 // pred_check_branch
        %219 = sbr.rel (%p217) target = $region28
      $region27: #{decoder_layer.5} parent=11 // pred_region
        _
      $region28: #{decoder_layer.5} parent=11 // pred_fallthru
        _
    $region12: #{decoder_layer.5} parent=5 // pred_fallthru
      _
    %p220 = scmp.lt.s32.totalorder %s13, 2
    // Predicated region
    $region29: #{decoder_layer.5} parent=5 // pred_check
      %p221 = pneg %p220
    $region30: #{decoder_layer.5} parent=5 // pred_check_branch
      %223 = sbr.rel (%p221) target = $region32
    $region31: #{decoder_layer.5} parent=5 // pred_region
      // Predicated region
      $region33: #{decoder_layer.5} parent=31 // pred_check
        %p224 = pneg %p47
      $region34: #{decoder_layer.5} parent=31 // pred_check_branch
        %226 = sbr.rel (%p224) target = $region36
      $region35: #{decoder_layer.5} parent=31 // pred_region
        %p227 = scmp.lt.s32.totalorder %s20, 1
        %s228 = scalar_select %p227, %s20, 1
        %p229 = scmp.lt.s32.totalorder %s21, 0
        %s230 = scalar_select %p229, %s21, 0
        %s231 = sadd.s32 %s230, %s228
        %s232 = smul.addr %s231, 8
        %s233 = scalar_lea.vmem %s0, %s232
      $region36: #{decoder_layer.5} parent=31 // pred_fallthru
        _
    $region32: #{decoder_layer.5} parent=5 // pred_fallthru
      _
    %p234 = scmp.le.s32.totalorder 1, %s13
    %p235 = scmp.lt.s32.totalorder %s13, 3
    %p236 = pnand %p234, %p235
    %p237 = pneg %p236
    // Predicated region
    $region37: #{decoder_layer.5} parent=5 // pred_check
      _
    $region38: #{decoder_layer.5} parent=5 // pred_check_branch
      %239 = sbr.rel (%p236) target = $region40
    $region39: #{decoder_layer.5} parent=5 // pred_region
      %s240 = ssub.s32 %s13, 1
      %p241 = scmp.lt.s32.totalorder %s22, 1
      %s242 = scalar_select %p241, %s22, 1
      %p243 = scmp.lt.s32.totalorder %s23, 0
      %s244 = scalar_select %p243, %s23, 0
      %s245 = sadd.s32 %s244, %s242
      %s246 = smul.addr %s245, 8
      %s247 = scalar_lea.vmem %s0, %s246
      %p248 = pneg %p53
      %p249 = pneg %p50
      %p250 = pneg %p74
      %p251 = pneg %p71
      %p252 = pneg %p95
      %p253 = pneg %p92
      %p254 = pneg %p116
      %p255 = pneg %p113
      %p256 = pneg %p137
      %p257 = pneg %p134
      %p258 = pneg %p165
      %p259 = pneg %p162
      %p260 = scmp.lt.s32.totalorder %s22, 1
      %s261 = scalar_select %p260, %s22, 1
      %p262 = scmp.lt.s32.totalorder %s23, 0
      %s263 = scalar_select %p262, %s23, 0
      %s264 = smul.addr %s261, 4
      %s265 = sadd.s32 %s263, %s264
      %s266 = smul.addr %s265, 4
      %s267 = scalar_lea.vmem %s5, %s266
      %p268 = pneg %p193
      %p269 = pneg %p190
      %p270 = scmp.lt.s32.totalorder %s22, 1
      %s271 = scalar_select %p270, %s22, 1
      %p272 = scmp.lt.s32.totalorder %s23, 0
      %s273 = scalar_select %p272, %s23, 0
      %s274 = smul.addr %s271, 4
      %s275 = sadd.s32 %s273, %s274
      %s276 = smul.addr %s275, 4
      %s277 = scalar_lea.vmem %s6, %s276
      %p278 = scmp.lt.s32.totalorder %s22, 1
      %s279 = scalar_select %p278, %s22, 1
      %p280 = scmp.lt.s32.totalorder %s23, 0
      %s281 = scalar_select %p280, %s23, 0
      %s282 = sadd.s32 %s281, %s279
      %s283 = smul.addr %s282, 8
      %s284 = scalar_lea.vmem %s0, %s283
      %p285 = scmp.lt.s32.totalorder %s22, 1
      %s286 = scalar_select %p285, %s22, 1
      %p287 = scmp.lt.s32.totalorder %s23, 0
      %s288 = scalar_select %p287, %s23, 0
      %s289 = smul.addr %s286, 4
      %s290 = sadd.s32 %s288, %s289
      %s291 = smul.addr %s290, 4
      %s292 = scalar_lea.vmem %s5, %s291
      %p293 = scmp.lt.s32.totalorder %s22, 1
      %s294 = scalar_select %p293, %s22, 1
      %p295 = scmp.lt.s32.totalorder %s23, 0
      %s296 = scalar_select %p295, %s23, 0
      %s297 = smul.addr %s294, 4
      %s298 = sadd.s32 %s296, %s297
      %s299 = smul.addr %s298, 4
      %s300 = scalar_lea.vmem %s6, %s299
      %v302 = vld [vmem:[%s284] sm:$0xff]
      %v303 = vpack.c.bf16 %v302, %v302
      %v304 = vld [vmem:[%s1] sm:$0xf]
      %v305 = vld [vmem:[%s1 + $0x4] sm:$0xf]
      %v306 = vld [vmem:[%s1 + $0x8] sm:$0xf]
      %v307 = vld [vmem:[%s1 + $0xc] sm:$0xf]
      %v308 = vld [vmem:[%s2] sm:$0x1]
      %v310 = vlaneseq
      %v311 = vshrl.u32 %v310, 7
      %v312 = vsub.s32 0, %v311
      %v313 = vrot.slane %v308, %v312
      %v319 = vunpack.c.l.b16 %v304
      %v320 = vunpack.c.l.b16 %v305
      %v321 = vunpack.c.l.b16 %v306
      %v322 = vunpack.c.l.b16 %v307
      %v323 = vpack.c.b16 %v320, %v319
      %v324 = vpack.c.b16 %v322, %v321
      %vm327 = vcmask 261120
      %v329 = vsel %vm327, %v303, 0
      %331 = vmatprep.subr.bf16.mxu0 0
      %332 = vmatpush1.bf16.msra.mxu0 %v323
      %333 = vmatprep.subr.bf16.mxu0 0
      %334 = vmatpush1.bf16.msra.mxu0 %v324
      %335 = vmatprep.subr.bf16.mxu0 0
      %336 = vmatpush1.bf16.msra.mxu0 0
      %337 = vmatprep.subr.bf16.mxu0 0
      %338 = vmatpush1.bf16.msra.mxu0 0
      %339 = vmatprep.subr.bf16.mxu0 0
      %340 = vmatpush1.bf16.msra.mxu0 0
      %341 = vmatprep.subr.bf16.mxu0 0
      %342 = vmatpush1.bf16.msra.mxu0 0
      %343 = vmatprep.subr.bf16.mxu0 0
      %344 = vmatpush1.bf16.msra.mxu0 0
      %345 = vmatprep.subr.bf16.mxu0 0
      %346 = vmatpush1.bf16.msra.mxu0 0
      %347 = vmatprep.subr.bf16.mxu0 0
      %348 = vmatpush1.bf16.msra.mxu0 0
      %349 = vmatprep.subr.bf16.mxu0 0
      %350 = vmatpush1.bf16.msra.mxu0 0
      %351 = vmatprep.subr.bf16.mxu0 0
      %352 = vmatpush1.bf16.msra.mxu0 0
      %353 = vmatprep.subr.bf16.mxu0 0
      %354 = vmatpush1.bf16.msra.mxu0 0
      %355 = vmatprep.subr.bf16.mxu0 0
      %356 = vmatpush1.bf16.msra.mxu0 0
      %357 = vmatprep.subr.bf16.mxu0 0
      %358 = vmatpush1.bf16.msra.mxu0 0
      %359 = vmatprep.subr.bf16.mxu0 0
      %360 = vmatpush1.bf16.msra.mxu0 0
      %361 = vmatprep.subr.bf16.mxu0 0
      %362 = vmatpush1.bf16.msra.mxu0 0
      %363 = vmatprep.mubr.bf16.mxu0 0
      %364 = vmatmul.mubr.bf16.gmra.mrb[0].mxu0 %v329
      %v365 = vpop.f32.mrb[0].mxu0
      %v366 = vadd.f32 %v313, %v365
      %v367 = vpop.f32.mrb[0].mxu0
      %v368 = vpop.f32.mrb[0].mxu0
      %v369 = vpop.f32.mrb[0].mxu0
      %370 = vdwg.mxu0
      %v371 = vld [vmem:[%s3] sm:$0xf]
      %v372 = vld [vmem:[%s3 + $0x4] sm:$0xf]
      %v373 = vld [vmem:[%s3 + $0x8] sm:$0xf]
      %v374 = vld [vmem:[%s3 + $0xc] sm:$0xf]
      %v375 = vld [vmem:[%s4] sm:$0x1]
      %v377 = vlaneseq
      %v378 = vshrl.u32 %v377, 7
      %v379 = vsub.s32 0, %v378
      %v380 = vrot.slane %v375, %v379
      %v386 = vunpack.c.l.b16 %v371
      %v387 = vunpack.c.l.b16 %v372
      %v388 = vunpack.c.l.b16 %v373
      %v389 = vunpack.c.l.b16 %v374
      %v390 = vpack.c.b16 %v387, %v386
      %v391 = vpack.c.b16 %v389, %v388
      %394 = vmatprep.subr.bf16.mxu0 0
      %395 = vmatpush1.bf16.msra.mxu0 %v390
      %396 = vmatprep.subr.bf16.mxu0 0
      %397 = vmatpush1.bf16.msra.mxu0 %v391
      %398 = vmatprep.subr.bf16.mxu0 0
      %399 = vmatpush1.bf16.msra.mxu0 0
      %400 = vmatprep.subr.bf16.mxu0 0
      %401 = vmatpush1.bf16.msra.mxu0 0
      %402 = vmatprep.subr.bf16.mxu0 0
      %403 = vmatpush1.bf16.msra.mxu0 0
      %404 = vmatprep.subr.bf16.mxu0 0
      %405 = vmatpush1.bf16.msra.mxu0 0
      %406 = vmatprep.subr.bf16.mxu0 0
      %407 = vmatpush1.bf16.msra.mxu0 0
      %408 = vmatprep.subr.bf16.mxu0 0
      %409 = vmatpush1.bf16.msra.mxu0 0
      %410 = vmatprep.subr.bf16.mxu0 0
      %411 = vmatpush1.bf16.msra.mxu0 0
      %412 = vmatprep.subr.bf16.mxu0 0
      %413 = vmatpush1.bf16.msra.mxu0 0
      %414 = vmatprep.subr.bf16.mxu0 0
      %415 = vmatpush1.bf16.msra.mxu0 0
      %416 = vmatprep.subr.bf16.mxu0 0
      %417 = vmatpush1.bf16.msra.mxu0 0
      %418 = vmatprep.subr.bf16.mxu0 0
      %419 = vmatpush1.bf16.msra.mxu0 0
      %420 = vmatprep.subr.bf16.mxu0 0
      %421 = vmatpush1.bf16.msra.mxu0 0
      %422 = vmatprep.subr.bf16.mxu0 0
      %423 = vmatpush1.bf16.msra.mxu0 0
      %424 = vmatprep.subr.bf16.mxu0 0
      %425 = vmatpush1.bf16.msra.mxu0 0
      %426 = vmatprep.mubr.bf16.mxu0 0
      %427 = vmatmul.mubr.bf16.gmra.mrb[0].mxu0 %v329
      %v428 = vpop.f32.mrb[0].mxu0
      %v429 = vadd.f32 %v380, %v428
      %v430 = vpop.f32.mrb[0].mxu0
      %v431 = vpop.f32.mrb[0].mxu0
      %v432 = vpop.f32.mrb[0].mxu0
      %433 = vdwg.mxu0
      %v434 = vpack.c.bf16 %v366, %v366
      %vm435 = vcmask 60416
      %436 = vst.msk [vmem:[%s292] sm:$0xf] %vm435, %v434
      %v437 = vpack.c.bf16 %v429, %v429
      %438 = vst.msk [vmem:[%s300] sm:$0xf] %vm435, %v437
      %s439 = scalar_lea.vmem %s1, 16
      %v440 = vld [vmem:[%s439] sm:$0xf]
      %v441 = vld [vmem:[%s439 + $0x4] sm:$0xf]
      %v442 = vld [vmem:[%s439 + $0x8] sm:$0xf]
      %v443 = vld [vmem:[%s439 + $0xc] sm:$0xf]
      %s444 = scalar_lea.vmem %s2, 1
      %v445 = vld [vmem:[%s444] sm:$0x1]
      %v447 = vlaneseq
      %v448 = vshrl.u32 %v447, 7
      %v449 = vsub.s32 0, %v448
      %v450 = vrot.slane %v445, %v449
      %v456 = vunpack.c.l.b16 %v440
      %v457 = vunpack.c.l.b16 %v441
      %v458 = vunpack.c.l.b16 %v442
      %v459 = vunpack.c.l.b16 %v443
      %v460 = vpack.c.b16 %v457, %v456
      %v461 = vpack.c.b16 %v459, %v458
      %464 = vmatprep.subr.bf16.mxu0 0
      %465 = vmatpush1.bf16.msra.mxu0 %v460
      %466 = vmatprep.subr.bf16.mxu0 0
      %467 = vmatpush1.bf16.msra.mxu0 %v461
      %468 = vmatprep.subr.bf16.mxu0 0
      %469 = vmatpush1.bf16.msra.mxu0 0
      %470 = vmatprep.subr.bf16.mxu0 0
      %471 = vmatpush1.bf16.msra.mxu0 0
      %472 = vmatprep.subr.bf16.mxu0 0
      %473 = vmatpush1.bf16.msra.mxu0 0
      %474 = vmatprep.subr.bf16.mxu0 0
      %475 = vmatpush1.bf16.msra.mxu0 0
      %476 = vmatprep.subr.bf16.mxu0 0
      %477 = vmatpush1.bf16.msra.mxu0 0
      %478 = vmatprep.subr.bf16.mxu0 0
      %479 = vmatpush1.bf16.msra.mxu0 0
      %480 = vmatprep.subr.bf16.mxu0 0
      %481 = vmatpush1.bf16.msra.mxu0 0
      %482 = vmatprep.subr.bf16.mxu0 0
      %483 = vmatpush1.bf16.msra.mxu0 0
      %484 = vmatprep.subr.bf16.mxu0 0
      %485 = vmatpush1.bf16.msra.mxu0 0
      %486 = vmatprep.subr.bf16.mxu0 0
      %487 = vmatpush1.bf16.msra.mxu0 0
      %488 = vmatprep.subr.bf16.mxu0 0
      %489 = vmatpush1.bf16.msra.mxu0 0
      %490 = vmatprep.subr.bf16.mxu0 0
      %491 = vmatpush1.bf16.msra.mxu0 0
      %492 = vmatprep.subr.bf16.mxu0 0
      %493 = vmatpush1.bf16.msra.mxu0 0
      %494 = vmatprep.subr.bf16.mxu0 0
      %495 = vmatpush1.bf16.msra.mxu0 0
      %496 = vmatprep.mubr.bf16.mxu0 0
      %497 = vmatmul.mubr.bf16.gmra.mrb[0].mxu0 %v329
      %v498 = vpop.f32.mrb[0].mxu0
      %v499 = vadd.f32 %v450, %v498
      %v500 = vpop.f32.mrb[0].mxu0
      %v501 = vpop.f32.mrb[0].mxu0
      %v502 = vpop.f32.mrb[0].mxu0
      %503 = vdwg.mxu0
      %s504 = scalar_lea.vmem %s3, 16
      %v505 = vld [vmem:[%s504] sm:$0xf]
      %v506 = vld [vmem:[%s504 + $0x4] sm:$0xf]
      %v507 = vld [vmem:[%s504 + $0x8] sm:$0xf]
      %v508 = vld [vmem:[%s504 + $0xc] sm:$0xf]
      %s509 = scalar_lea.vmem %s4, 1
      %v510 = vld [vmem:[%s509] sm:$0x1]
      %v512 = vlaneseq
      %v513 = vshrl.u32 %v512, 7
      %v514 = vsub.s32 0, %v513
      %v515 = vrot.slane %v510, %v514
      %v521 = vunpack.c.l.b16 %v505
      %v522 = vunpack.c.l.b16 %v506
      %v523 = vunpack.c.l.b16 %v507
      %v524 = vunpack.c.l.b16 %v508
      %v525 = vpack.c.b16 %v522, %v521
      %v526 = vpack.c.b16 %v524, %v523
      %529 = vmatprep.subr.bf16.mxu0 0
      %530 = vmatpush1.bf16.msra.mxu0 %v525
      %531 = vmatprep.subr.bf16.mxu0 0
      %532 = vmatpush1.bf16.msra.mxu0 %v526
      %533 = vmatprep.subr.bf16.mxu0 0
      %534 = vmatpush1.bf16.msra.mxu0 0
      %535 = vmatprep.subr.bf16.mxu0 0
      %536 = vmatpush1.bf16.msra.mxu0 0
      %537 = vmatprep.subr.bf16.mxu0 0
      %538 = vmatpush1.bf16.msra.mxu0 0
      %539 = vmatprep.subr.bf16.mxu0 0
      %540 = vmatpush1.bf16.msra.mxu0 0
      %541 = vmatprep.subr.bf16.mxu0 0
      %542 = vmatpush1.bf16.msra.mxu0 0
      %543 = vmatprep.subr.bf16.mxu0 0
      %544 = vmatpush1.bf16.msra.mxu0 0
      %545 = vmatprep.subr.bf16.mxu0 0
      %546 = vmatpush1.bf16.msra.mxu0 0
      %547 = vmatprep.subr.bf16.mxu0 0
      %548 = vmatpush1.bf16.msra.mxu0 0
      %549 = vmatprep.subr.bf16.mxu0 0
      %550 = vmatpush1.bf16.msra.mxu0 0
      %551 = vmatprep.subr.bf16.mxu0 0
      %552 = vmatpush1.bf16.msra.mxu0 0
      %553 = vmatprep.subr.bf16.mxu0 0
      %554 = vmatpush1.bf16.msra.mxu0 0
      %555 = vmatprep.subr.bf16.mxu0 0
      %556 = vmatpush1.bf16.msra.mxu0 0
      %557 = vmatprep.subr.bf16.mxu0 0
      %558 = vmatpush1.bf16.msra.mxu0 0
      %559 = vmatprep.subr.bf16.mxu0 0
      %560 = vmatpush1.bf16.msra.mxu0 0
      %561 = vmatprep.mubr.bf16.mxu0 0
      %562 = vmatmul.mubr.bf16.gmra.mrb[0].mxu0 %v329
      %v563 = vpop.f32.mrb[0].mxu0
      %v564 = vadd.f32 %v515, %v563
      %v565 = vpop.f32.mrb[0].mxu0
      %v566 = vpop.f32.mrb[0].mxu0
      %v567 = vpop.f32.mrb[0].mxu0
      %568 = vdwg.mxu0
      %v569 = vpack.c.bf16 %v499, %v499
      %s570 = scalar_lea.vmem %s292, 4
      %571 = vst.msk [vmem:[%s570] sm:$0xf] %vm435, %v569
      %v572 = vpack.c.bf16 %v564, %v564
      %s573 = scalar_lea.vmem %s300, 4
      %574 = vst.msk [vmem:[%s573] sm:$0xf] %vm435, %v572
      %s575 = scalar_lea.vmem %s1, 32
      %v576 = vld [vmem:[%s575] sm:$0xf]
      %v577 = vld [vmem:[%s575 + $0x4] sm:$0xf]
      %v578 = vld [vmem:[%s575 + $0x8] sm:$0xf]
      %v579 = vld [vmem:[%s575 + $0xc] sm:$0xf]
      %s580 = scalar_lea.vmem %s2, 2
      %v581 = vld [vmem:[%s580] sm:$0x1]
      %v583 = vlaneseq
      %v584 = vshrl.u32 %v583, 7
      %v585 = vsub.s32 0, %v584
      %v586 = vrot.slane %v581, %v585
      %v592 = vunpack.c.l.b16 %v576
      %v593 = vunpack.c.l.b16 %v577
      %v594 = vunpack.c.l.b16 %v578
      %v595 = vunpack.c.l.b16 %v579
      %v596 = vpack.c.b16 %v593, %v592
      %v597 = vpack.c.b16 %v595, %v594
      %600 = vmatprep.subr.bf16.mxu0 0
      %601 = vmatpush1.bf16.msra.mxu0 %v596
      %602 = vmatprep.subr.bf16.mxu0 0
      %603 = vmatpush1.bf16.msra.mxu0 %v597
      %604 = vmatprep.subr.bf16.mxu0 0
      %605 = vmatpush1.bf16.msra.mxu0 0
      %606 = vmatprep.subr.bf16.mxu0 0
      %607 = vmatpush1.bf16.msra.mxu0 0
      %608 = vmatprep.subr.bf16.mxu0 0
      %609 = vmatpush1.bf16.msra.mxu0 0
      %610 = vmatprep.subr.bf16.mxu0 0
      %611 = vmatpush1.bf16.msra.mxu0 0
      %612 = vmatprep.subr.bf16.mxu0 0
      %613 = vmatpush1.bf16.msra.mxu0 0
      %614 = vmatprep.subr.bf16.mxu0 0
      %615 = vmatpush1.bf16.msra.mxu0 0
      %616 = vmatprep.subr.bf16.mxu0 0
      %617 = vmatpush1.bf16.msra.mxu0 0
      %618 = vmatprep.subr.bf16.mxu0 0
      %619 = vmatpush1.bf16.msra.mxu0 0
      %620 = vmatprep.subr.bf16.mxu0 0
      %621 = vmatpush1.bf16.msra.mxu0 0
      %622 = vmatprep.subr.bf16.mxu0 0
      %623 = vmatpush1.bf16.msra.mxu0 0
      %624 = vmatprep.subr.bf16.mxu0 0
      %625 = vmatpush1.bf16.msra.mxu0 0
      %626 = vmatprep.subr.bf16.mxu0 0
      %627 = vmatpush1.bf16.msra.mxu0 0
      %628 = vmatprep.subr.bf16.mxu0 0
      %629 = vmatpush1.bf16.msra.mxu0 0
      %630 = vmatprep.subr.bf16.mxu0 0
      %631 = vmatpush1.bf16.msra.mxu0 0
      %632 = vmatprep.mubr.bf16.mxu0 0
      %633 = vmatmul.mubr.bf16.gmra.mrb[0].mxu0 %v329
      %v634 = vpop.f32.mrb[0].mxu0
      %v635 = vadd.f32 %v586, %v634
      %v636 = vpop.f32.mrb[0].mxu0
      %v637 = vpop.f32.mrb[0].mxu0
      %v638 = vpop.f32.mrb[0].mxu0
      %639 = vdwg.mxu0
      %s640 = scalar_lea.vmem %s3, 32
      %v641 = vld [vmem:[%s640] sm:$0xf]
      %v642 = vld [vmem:[%s640 + $0x4] sm:$0xf]
      %v643 = vld [vmem:[%s640 + $0x8] sm:$0xf]
      %v644 = vld [vmem:[%s640 + $0xc] sm:$0xf]
      %s645 = scalar_lea.vmem %s4, 2
      %v646 = vld [vmem:[%s645] sm:$0x1]
      %v648 = vlaneseq
      %v649 = vshrl.u32 %v648, 7
      %v650 = vsub.s32 0, %v649
      %v651 = vrot.slane %v646, %v650
      %v657 = vunpack.c.l.b16 %v641
      %v658 = vunpack.c.l.b16 %v642
      %v659 = vunpack.c.l.b16 %v643
      %v660 = vunpack.c.l.b16 %v644
      %v661 = vpack.c.b16 %v658, %v657
      %v662 = vpack.c.b16 %v660, %v659
      %665 = vmatprep.subr.bf16.mxu0 0
      %666 = vmatpush1.bf16.msra.mxu0 %v661
      %667 = vmatprep.subr.bf16.mxu0 0
      %668 = vmatpush1.bf16.msra.mxu0 %v662
      %669 = vmatprep.subr.bf16.mxu0 0
      %670 = vmatpush1.bf16.msra.mxu0 0
      %671 = vmatprep.subr.bf16.mxu0 0
      %672 = vmatpush1.bf16.msra.mxu0 0
      %673 = vmatprep.subr.bf16.mxu0 0
      %674 = vmatpush1.bf16.msra.mxu0 0
      %675 = vmatprep.subr.bf16.mxu0 0
      %676 = vmatpush1.bf16.msra.mxu0 0
      %677 = vmatprep.subr.bf16.mxu0 0
      %678 = vmatpush1.bf16.msra.mxu0 0
      %679 = vmatprep.subr.bf16.mxu0 0
      %680 = vmatpush1.bf16.msra.mxu0 0
      %681 = vmatprep.subr.bf16.mxu0 0
      %682 = vmatpush1.bf16.msra.mxu0 0
      %683 = vmatprep.subr.bf16.mxu0 0
      %684 = vmatpush1.bf16.msra.mxu0 0
      %685 = vmatprep.subr.bf16.mxu0 0
      %686 = vmatpush1.bf16.msra.mxu0 0
      %687 = vmatprep.subr.bf16.mxu0 0
      %688 = vmatpush1.bf16.msra.mxu0 0
      %689 = vmatprep.subr.bf16.mxu0 0
      %690 = vmatpush1.bf16.msra.mxu0 0
      %691 = vmatprep.subr.bf16.mxu0 0
      %692 = vmatpush1.bf16.msra.mxu0 0
      %693 = vmatprep.subr.bf16.mxu0 0
      %694 = vmatpush1.bf16.msra.mxu0 0
      %695 = vmatprep.subr.bf16.mxu0 0
      %696 = vmatpush1.bf16.msra.mxu0 0
      %697 = vmatprep.mubr.bf16.mxu0 0
      %698 = vmatmul.mubr.bf16.gmra.mrb[0].mxu0 %v329
      %v699 = vpop.f32.mrb[0].mxu0
      %v700 = vadd.f32 %v651, %v699
      %v701 = vpop.f32.mrb[0].mxu0
      %v702 = vpop.f32.mrb[0].mxu0
      %v703 = vpop.f32.mrb[0].mxu0
      %704 = vdwg.mxu0
      %v705 = vpack.c.bf16 %v635, %v635
      %s706 = scalar_lea.vmem %s292, 8
      %707 = vst.msk [vmem:[%s706] sm:$0xf] %vm435, %v705
      %v708 = vpack.c.bf16 %v700, %v700
      %s709 = scalar_lea.vmem %s300, 8
      %710 = vst.msk [vmem:[%s709] sm:$0xf] %vm435, %v708
      %s711 = scalar_lea.vmem %s1, 48
      %v712 = vld [vmem:[%s711] sm:$0xf]
      %v713 = vld [vmem:[%s711 + $0x4] sm:$0xf]
      %v714 = vld [vmem:[%s711 + $0x8] sm:$0xf]
      %v715 = vld [vmem:[%s711 + $0xc] sm:$0xf]
      %s716 = scalar_lea.vmem %s2, 3
      %v717 = vld [vmem:[%s716] sm:$0x1]
      %v719 = vlaneseq
      %v720 = vshrl.u32 %v719, 7
      %v721 = vsub.s32 0, %v720
      %v722 = vrot.slane %v717, %v721
      %v728 = vunpack.c.l.b16 %v712
      %v729 = vunpack.c.l.b16 %v713
      %v730 = vunpack.c.l.b16 %v714
      %v731 = vunpack.c.l.b16 %v715
      %v732 = vpack.c.b16 %v729, %v728
      %v733 = vpack.c.b16 %v731, %v730
      %736 = vmatprep.subr.bf16.mxu0 0
      %737 = vmatpush1.bf16.msra.mxu0 %v732
      %738 = vmatprep.subr.bf16.mxu0 0
      %739 = vmatpush1.bf16.msra.mxu0 %v733
      %740 = vmatprep.subr.bf16.mxu0 0
      %741 = vmatpush1.bf16.msra.mxu0 0
      %742 = vmatprep.subr.bf16.mxu0 0
      %743 = vmatpush1.bf16.msra.mxu0 0
      %744 = vmatprep.subr.bf16.mxu0 0
      %745 = vmatpush1.bf16.msra.mxu0 0
      %746 = vmatprep.subr.bf16.mxu0 0
      %747 = vmatpush1.bf16.msra.mxu0 0
      %748 = vmatprep.subr.bf16.mxu0 0
      %749 = vmatpush1.bf16.msra.mxu0 0
      %750 = vmatprep.subr.bf16.mxu0 0
      %751 = vmatpush1.bf16.msra.mxu0 0
      %752 = vmatprep.subr.bf16.mxu0 0
      %753 = vmatpush1.bf16.msra.mxu0 0
      %754 = vmatprep.subr.bf16.mxu0 0
      %755 = vmatpush1.bf16.msra.mxu0 0
      %756 = vmatprep.subr.bf16.mxu0 0
      %757 = vmatpush1.bf16.msra.mxu0 0
      %758 = vmatprep.subr.bf16.mxu0 0
      %759 = vmatpush1.bf16.msra.mxu0 0
      %760 = vmatprep.subr.bf16.mxu0 0
      %761 = vmatpush1.bf16.msra.mxu0 0
      %762 = vmatprep.subr.bf16.mxu0 0
      %763 = vmatpush1.bf16.msra.mxu0 0
      %764 = vmatprep.subr.bf16.mxu0 0
      %765 = vmatpush1.bf16.msra.mxu0 0
      %766 = vmatprep.subr.bf16.mxu0 0
      %767 = vmatpush1.bf16.msra.mxu0 0
      %768 = vmatprep.mubr.bf16.mxu0 0
      %769 = vmatmul.mubr.bf16.gmra.mrb[0].mxu0 %v329
      %v770 = vpop.f32.mrb[0].mxu0
      %v771 = vadd.f32 %v722, %v770
      %v772 = vpop.f32.mrb[0].mxu0
      %v773 = vpop.f32.mrb[0].mxu0
      %v774 = vpop.f32.mrb[0].mxu0
      %775 = vdwg.mxu0
      %s776 = scalar_lea.vmem %s3, 48
      %v777 = vld [vmem:[%s776] sm:$0xf]
      %v778 = vld [vmem:[%s776 + $0x4] sm:$0xf]
      %v779 = vld [vmem:[%s776 + $0x8] sm:$0xf]
      %v780 = vld [vmem:[%s776 + $0xc] sm:$0xf]
      %s781 = scalar_lea.vmem %s4, 3
      %v782 = vld [vmem:[%s781] sm:$0x1]
      %v784 = vlaneseq
      %v785 = vshrl.u32 %v784, 7
      %v786 = vsub.s32 0, %v785
      %v787 = vrot.slane %v782, %v786
      %v793 = vunpack.c.l.b16 %v777
      %v794 = vunpack.c.l.b16 %v778
      %v795 = vunpack.c.l.b16 %v779
      %v796 = vunpack.c.l.b16 %v780
      %v797 = vpack.c.b16 %v794, %v793
      %v798 = vpack.c.b16 %v796, %v795
      %801 = vmatprep.subr.bf16.mxu0 0
      %802 = vmatpush1.bf16.msra.mxu0 %v797
      %803 = vmatprep.subr.bf16.mxu0 0
      %804 = vmatpush1.bf16.msra.mxu0 %v798
      %805 = vmatprep.subr.bf16.mxu0 0
      %806 = vmatpush1.bf16.msra.mxu0 0
      %807 = vmatprep.subr.bf16.mxu0 0
      %808 = vmatpush1.bf16.msra.mxu0 0
      %809 = vmatprep.subr.bf16.mxu0 0
      %810 = vmatpush1.bf16.msra.mxu0 0
      %811 = vmatprep.subr.bf16.mxu0 0
      %812 = vmatpush1.bf16.msra.mxu0 0
      %813 = vmatprep.subr.bf16.mxu0 0
      %814 = vmatpush1.bf16.msra.mxu0 0
      %815 = vmatprep.subr.bf16.mxu0 0
      %816 = vmatpush1.bf16.msra.mxu0 0
      %817 = vmatprep.subr.bf16.mxu0 0
      %818 = vmatpush1.bf16.msra.mxu0 0
      %819 = vmatprep.subr.bf16.mxu0 0
      %820 = vmatpush1.bf16.msra.mxu0 0
      %821 = vmatprep.subr.bf16.mxu0 0
      %822 = vmatpush1.bf16.msra.mxu0 0
      %823 = vmatprep.subr.bf16.mxu0 0
      %824 = vmatpush1.bf16.msra.mxu0 0
      %825 = vmatprep.subr.bf16.mxu0 0
      %826 = vmatpush1.bf16.msra.mxu0 0
      %827 = vmatprep.subr.bf16.mxu0 0
      %828 = vmatpush1.bf16.msra.mxu0 0
      %829 = vmatprep.subr.bf16.mxu0 0
      %830 = vmatpush1.bf16.msra.mxu0 0
      %831 = vmatprep.subr.bf16.mxu0 0
      %832 = vmatpush1.bf16.msra.mxu0 0
      %833 = vmatprep.mubr.bf16.mxu0 0
      %834 = vmatmul.mubr.bf16.gmra.mrb[0].mxu0 %v329
      %v835 = vpop.f32.mrb[0].mxu0
      %v836 = vadd.f32 %v787, %v835
      %v837 = vpop.f32.mrb[0].mxu0
      %v838 = vpop.f32.mrb[0].mxu0
      %v839 = vpop.f32.mrb[0].mxu0
      %840 = vdwg.mxu0
      %v841 = vpack.c.bf16 %v771, %v771
      %s842 = scalar_lea.vmem %s292, 12
      %843 = vst.msk [vmem:[%s842] sm:$0xf] %vm435, %v841
      %v844 = vpack.c.bf16 %v836, %v836
      %s845 = scalar_lea.vmem %s300, 12
      %846 = vst.msk [vmem:[%s845] sm:$0xf] %vm435, %v844
      %p847 = scmp.lt.s32.totalorder %s22, 1
      %s848 = scalar_select %p847, %s22, 1
      %p849 = scmp.lt.s32.totalorder %s23, 0
      %s850 = scalar_select %p849, %s23, 0
      %s851 = smul.addr %s848, 4
      %s852 = sadd.s32 %s850, %s851
      %s853 = smul.addr %s852, 4
      %s854 = scalar_lea.vmem %s5, %s853
      %p855 = scmp.lt.s32.totalorder %s22, 1
      %s856 = scalar_select %p855, %s22, 1
      %p857 = scmp.lt.s32.totalorder %s23, 0
      %s858 = scalar_select %p857, %s23, 0
      %s859 = smul.addr %s856, 4
      %s860 = sadd.s32 %s858, %s859
      %s861 = smul.addr %s860, 4
      %s862 = scalar_lea.vmem %s6, %s861
      // Predicated region
      $region41: #{decoder_layer.5} parent=39 // pred_check
        %p863 = pneg %p162
      $region42: #{decoder_layer.5} parent=39 // pred_check_branch
        %865 = sbr.rel (%p863) target = $region44
      $region43: #{decoder_layer.5} parent=39 // pred_region
        _
      $region44: #{decoder_layer.5} parent=39 // pred_fallthru
        _
      // Predicated region
      $region45: #{decoder_layer.5} parent=39 // pred_check
        %p866 = pneg %p190
      $region46: #{decoder_layer.5} parent=39 // pred_check_branch
        %868 = sbr.rel (%p866) target = $region48
      $region47: #{decoder_layer.5} parent=39 // pred_region
        _
      $region48: #{decoder_layer.5} parent=39 // pred_fallthru
        _
    $region40: #{decoder_layer.5} parent=5 // pred_fallthru
      _
    %p869 = scmp.le.s32.totalorder 2, %s13
    // Predicated region
    $region49: #{decoder_layer.5} parent=5 // pred_check
      %p870 = pneg %p869
    $region50: #{decoder_layer.5} parent=5 // pred_check_branch
      %872 = sbr.rel (%p870) target = $region52
    $region51: #{decoder_layer.5} parent=5 // pred_region
      %s873 = ssub.s32 %s13, 2
      // Predicated region
      $region53: #{decoder_layer.5} parent=51 // pred_check
        %p874 = pneg %p168
      $region54: #{decoder_layer.5} parent=51 // pred_check_branch
        %876 = sbr.rel (%p874) target = $region56
      $region55: #{decoder_layer.5} parent=51 // pred_region
        %p877 = scmp.lt.s32.totalorder %s24, 1
        %s878 = scalar_select %p877, %s24, 1
        %p879 = scmp.lt.s32.totalorder %s25, 0
        %s880 = scalar_select %p879, %s25, 0
        %s881 = smul.addr %s878, 4
        %s882 = sadd.s32 %s880, %s881
        %s883 = smul.addr %s882, 4
        %s884 = scalar_lea.vmem %s5, %s883
      $region56: #{decoder_layer.5} parent=51 // pred_fallthru
        _
      // Predicated region
      $region57: #{decoder_layer.5} parent=51 // pred_check
        %p885 = pneg %p196
      $region58: #{decoder_layer.5} parent=51 // pred_check_branch
        %887 = sbr.rel (%p885) target = $region60
      $region59: #{decoder_layer.5} parent=51 // pred_region
        %p888 = scmp.lt.s32.totalorder %s24, 1
        %s889 = scalar_select %p888, %s24, 1
        %p890 = scmp.lt.s32.totalorder %s25, 0
        %s891 = scalar_select %p890, %s25, 0
        %s892 = smul.addr %s889, 4
        %s893 = sadd.s32 %s891, %s892
        %s894 = smul.addr %s893, 4
        %s895 = scalar_lea.vmem %s6, %s894
      $region60: #{decoder_layer.5} parent=51 // pred_fallthru
        _
    $region52: #{decoder_layer.5} parent=5 // pred_fallthru
      _
  $region6: #{decoder_layer.5} parent=0 // loop_footer
    %s17 = sadd.s32 1, %s13
  $region7: #{decoder_layer.5} parent=0 // loop_footer_branch
    %12 = sbr.rel target = $region3
  $region8: #{decoder_layer.5} parent=0 // loop_exit
    _

// kernel: decoder_layer.8
$region0: #{decoder_layer.8}
  #allocation0 [shape = 'u32[]', space=smem, size = 0x4, offset = 0x4, fixed_abs, tag = 'smem constant byte address 0x4 - core index']
  #allocation1 [shape = 'u32[144,128]{1,0:T(1,128)}', space=vmem, size = 0x12000, scoped, tag = 'internal scratch']
  %s0 = inlined_call_operand.vmem [shape: f32[2,8,32], index: 0, kind: input, shape index: {}]
  %s1 = inlined_call_operand.vmem [shape: bf16[2,4,8,8], index: 1, kind: input, shape index: {}]
  %s2 = inlined_call_operand.vmem [shape: bf16[2,4,8,8], index: 2, kind: input, shape index: {}]
  %s3 = inlined_call_operand.vmem [shape: bf16[4,32,8], index: 3, kind: input, shape index: {}]
  %s4 = inlined_call_operand.vmem [shape: f32[4,1,8], index: 4, kind: input, shape index: {}]
  %s5 = inlined_call_operand.vmem [shape: bf16[4,8,32], index: 5, kind: input, shape index: {}]
  %s6 = inlined_call_operand.vmem [shape: f32[1,32], index: 6, kind: input, shape index: {}]
  %s7 = inlined_call_operand.vmem [shape: f32[1,32], index: 7, kind: input, shape index: {}]
  %s8 = inlined_call_operand.vmem [shape: f32[1,32], index: 8, kind: input, shape index: {}]
  %s9 = inlined_call_operand.vmem [shape: f32[2,8,32], index: 9, kind: output, shape index: {}]
  %s10 = sld [smem:[#allocation0]]
  $region69: #{decoder_layer.8} parent=0
    _
  %s12 = ssub.s32 1, %s10
  %s13 = scalar_select 0, %s12, %s10
  loop: start=0, step=1, limit=4
  $region2: #{decoder_layer.8} parent=0 // loop_pre_header
    _
  $region3: #{decoder_layer.8} parent=0 // loop_header
    %s15 = sphi 0, %s19
    %p16 = scmp.ge.s32.totalorder %s15, 4
    %s22 = sphi 0, %s34
    %s23 = sphi 0, %s30
    %s24 = sphi 0, %s22
    %s25 = sphi 0, %s23
    %s26 = sphi 0, %s24
    %s27 = sphi 0, %s25
    %s39 = sphi 0, %s41
    %s42 = sphi 0, %s39
    %s43 = sphi 0, %s42
    %s59 = sphi 0, %s43
    %s65 = sphi 0, %s67
    %s68 = sphi 0, %s65
    %s69 = sphi 0, %s68
    %s85 = sphi 0, %s69
    %s91 = sphi 0, %s93
    %s94 = sphi 0, %s91
    %s95 = sphi 0, %s94
    %s111 = sphi 0, %s95
    %s115 = sphi 0, %s115
    %s117 = sphi 0, %s115
    %s118 = sphi 0, %s117
    %s132 = sphi 0, %s118
    %s136 = sphi 0, %s136
    %s138 = sphi 0, %s136
    %s139 = sphi 0, %s138
    %s153 = sphi 0, %s139
    %s157 = sphi 0, %s157
    %s159 = sphi 0, %s157
    %s160 = sphi 0, %s159
    %s174 = sphi 0, %s160
    %s178 = sphi 0, %s178
    %s180 = sphi 0, %s178
    %s181 = sphi 0, %s180
    %s195 = sphi 0, %s181
    %s199 = sphi 0, %s199
    %s201 = sphi 0, %s199
    %s202 = sphi 0, %s201
    %s216 = sphi 0, %s202
    %s220 = sphi 0, %s220
    %s222 = sphi 0, %s220
    %s223 = sphi 0, %s222
    %s237 = sphi 0, %s223
    %s245 = sphi 0, %s247
    %s248 = sphi 0, %s245
    %s249 = sphi 0, %s248
    %s265 = sphi 0, %s249
  $region4: #{decoder_layer.8} parent=0 // loop_header_branch
    %18 = sbr.rel (%p16) target = $region8
  $region5: #{decoder_layer.8} parent=0 // loop_body
    %s20 = ssub.s32 %s15, 1
    %s21 = ssub.s32 %s15, 2
    %s28 = sadd.s32 1, %s23
    %p29 = scmp.ge.s32.totalorder %s28, 1
    %s30 = scalar_select %p29, 0, %s28
    %s31 = sadd.s32 1, %s22
    %s32 = scalar_select %p29, %s31, %s22
    %p33 = scmp.ge.s32.totalorder %s32, 2
    %s34 = scalar_select %p33, 0, %s32
    %s35 = ssub.s32 %s22, %s34
    %s36 = ssub.s32 %s23, %s30
    %s37 = sor.u32 %s35, %s36
    %p38 = scmp.eq.s32.totalorder %s37, 0
    %s40 = sadd.s32 %s39, 1
    %s41 = scalar_select %p38, %s39, %s40
    %p44 = pneg %p38
    %p45 = scmp.eq.s32.totalorder %s15, 1
    %p46 = por %p44, %p45
    %p47 = scmp.ne.s32.totalorder %s39, %s42
    %p48 = scmp.eq.s32.totalorder %s15, 0
    %p49 = por %p47, %p48
    %p50 = scmp.ne.s32.totalorder %s39, %s42
    %p51 = scmp.eq.s32.totalorder %s20, 1
    %p52 = por %p50, %p51
    %p53 = scmp.ne.s32.totalorder %s42, %s43
    %p54 = scmp.eq.s32.totalorder %s20, 0
    %p55 = por %p53, %p54
    %p56 = scmp.ne.s32.totalorder %s42, %s43
    %p57 = scmp.eq.s32.totalorder %s21, 1
    %p58 = por %p56, %p57
    %p60 = scmp.ne.s32.totalorder %s43, %s59
    %p61 = scmp.eq.s32.totalorder %s21, 0
    %p62 = por %p60, %p61
    %s63 = ssub.s32 %s22, %s34
    %p64 = scmp.eq.s32.totalorder %s63, 0
    %s66 = sadd.s32 %s65, 1
    %s67 = scalar_select %p64, %s65, %s66
    %p70 = pneg %p64
    %p71 = scmp.eq.s32.totalorder %s15, 1
    %p72 = por %p70, %p71
    %p73 = scmp.ne.s32.totalorder %s65, %s68
    %p74 = scmp.eq.s32.totalorder %s15, 0
    %p75 = por %p73, %p74
    %p76 = scmp.ne.s32.totalorder %s65, %s68
    %p77 = scmp.eq.s32.totalorder %s20, 1
    %p78 = por %p76, %p77
    %p79 = scmp.ne.s32.totalorder %s68, %s69
    %p80 = scmp.eq.s32.totalorder %s20, 0
    %p81 = por %p79, %p80
    %p82 = scmp.ne.s32.totalorder %s68, %s69
    %p83 = scmp.eq.s32.totalorder %s21, 1
    %p84 = por %p82, %p83
    %p86 = scmp.ne.s32.totalorder %s69, %s85
    %p87 = scmp.eq.s32.totalorder %s21, 0
    %p88 = por %p86, %p87
    %s89 = ssub.s32 %s22, %s34
    %p90 = scmp.eq.s32.totalorder %s89, 0
    %s92 = sadd.s32 %s91, 1
    %s93 = scalar_select %p90, %s91, %s92
    %p96 = pneg %p90
    %p97 = scmp.eq.s32.totalorder %s15, 1
    %p98 = por %p96, %p97
    %p99 = scmp.ne.s32.totalorder %s91, %s94
    %p100 = scmp.eq.s32.totalorder %s15, 0
    %p101 = por %p99, %p100
    %p102 = scmp.ne.s32.totalorder %s91, %s94
    %p103 = scmp.eq.s32.totalorder %s20, 1
    %p104 = por %p102, %p103
    %p105 = scmp.ne.s32.totalorder %s94, %s95
    %p106 = scmp.eq.s32.totalorder %s20, 0
    %p107 = por %p105, %p106
    %p108 = scmp.ne.s32.totalorder %s94, %s95
    %p109 = scmp.eq.s32.totalorder %s21, 1
    %p110 = por %p108, %p109
    %p112 = scmp.ne.s32.totalorder %s95, %s111
    %p113 = scmp.eq.s32.totalorder %s21, 0
    %p114 = por %p112, %p113
    %s116 = sadd.s32 %s115, 1
    %p119 = scmp.eq.s32.totalorder %s15, 1
    %p120 = scmp.ne.s32.totalorder %s115, %s117
    %p121 = scmp.eq.s32.totalorder %s15, 0
    %p122 = por %p120, %p121
    %p123 = scmp.ne.s32.totalorder %s115, %s117
    %p124 = scmp.eq.s32.totalorder %s20, 1
    %p125 = por %p123, %p124
    %p126 = scmp.ne.s32.totalorder %s117, %s118
    %p127 = scmp.eq.s32.totalorder %s20, 0
    %p128 = por %p126, %p127
    %p129 = scmp.ne.s32.totalorder %s117, %s118
    %p130 = scmp.eq.s32.totalorder %s21, 1
    %p131 = por %p129, %p130
    %p133 = scmp.ne.s32.totalorder %s118, %s132
    %p134 = scmp.eq.s32.totalorder %s21, 0
    %p135 = por %p133, %p134
    %s137 = sadd.s32 %s136, 1
    %p140 = scmp.eq.s32.totalorder %s15, 1
    %p141 = scmp.ne.s32.totalorder %s136, %s138
    %p142 = scmp.eq.s32.totalorder %s15, 0
    %p143 = por %p141, %p142
    %p144 = scmp.ne.s32.totalorder %s136, %s138
    %p145 = scmp.eq.s32.totalorder %s20, 1
    %p146 = por %p144, %p145
    %p147 = scmp.ne.s32.totalorder %s138, %s139
    %p148 = scmp.eq.s32.totalorder %s20, 0
    %p149 = por %p147, %p148
    %p150 = scmp.ne.s32.totalorder %s138, %s139
    %p151 = scmp.eq.s32.totalorder %s21, 1
    %p152 = por %p150, %p151
    %p154 = scmp.ne.s32.totalorder %s139, %s153
    %p155 = scmp.eq.s32.totalorder %s21, 0
    %p156 = por %p154, %p155
    %s158 = sadd.s32 %s157, 1
    %p161 = scmp.eq.s32.totalorder %s15, 1
    %p162 = scmp.ne.s32.totalorder %s157, %s159
    %p163 = scmp.eq.s32.totalorder %s15, 0
    %p164 = por %p162, %p163
    %p165 = scmp.ne.s32.totalorder %s157, %s159
    %p166 = scmp.eq.s32.totalorder %s20, 1
    %p167 = por %p165, %p166
    %p168 = scmp.ne.s32.totalorder %s159, %s160
    %p169 = scmp.eq.s32.totalorder %s20, 0
    %p170 = por %p168, %p169
    %p171 = scmp.ne.s32.totalorder %s159, %s160
    %p172 = scmp.eq.s32.totalorder %s21, 1
    %p173 = por %p171, %p172
    %p175 = scmp.ne.s32.totalorder %s160, %s174
    %p176 = scmp.eq.s32.totalorder %s21, 0
    %p177 = por %p175, %p176
    %s179 = sadd.s32 %s178, 1
    %p182 = scmp.eq.s32.totalorder %s15, 1
    %p183 = scmp.ne.s32.totalorder %s178, %s180
    %p184 = scmp.eq.s32.totalorder %s15, 0
    %p185 = por %p183, %p184
    %p186 = scmp.ne.s32.totalorder %s178, %s180
    %p187 = scmp.eq.s32.totalorder %s20, 1
    %p188 = por %p186, %p187
    %p189 = scmp.ne.s32.totalorder %s180, %s181
    %p190 = scmp.eq.s32.totalorder %s20, 0
    %p191 = por %p189, %p190
    %p192 = scmp.ne.s32.totalorder %s180, %s181
    %p193 = scmp.eq.s32.totalorder %s21, 1
    %p194 = por %p192, %p193
    %p196 = scmp.ne.s32.totalorder %s181, %s195
    %p197 = scmp.eq.s32.totalorder %s21, 0
    %p198 = por %p196, %p197
    %s200 = sadd.s32 %s199, 1
    %p203 = scmp.eq.s32.totalorder %s15, 1
    %p204 = scmp.ne.s32.totalorder %s199, %s201
    %p205 = scmp.eq.s32.totalorder %s15, 0
    %p206 = por %p204, %p205
    %p207 = scmp.ne.s32.totalorder %s199, %s201
    %p208 = scmp.eq.s32.totalorder %s20, 1
    %p209 = por %p207, %p208
    %p210 = scmp.ne.s32.totalorder %s201, %s202
    %p211 = scmp.eq.s32.totalorder %s20, 0
    %p212 = por %p210, %p211
    %p213 = scmp.ne.s32.totalorder %s201, %s202
    %p214 = scmp.eq.s32.totalorder %s21, 1
    %p215 = por %p213, %p214
    %p217 = scmp.ne.s32.totalorder %s202, %s216
    %p218 = scmp.eq.s32.totalorder %s21, 0
    %p219 = por %p217, %p218
    %s221 = sadd.s32 %s220, 1
    %p224 = scmp.eq.s32.totalorder %s15, 1
    %p225 = scmp.ne.s32.totalorder %s220, %s222
    %p226 = scmp.eq.s32.totalorder %s15, 0
    %p227 = por %p225, %p226
    %p228 = scmp.ne.s32.totalorder %s220, %s222
    %p229 = scmp.eq.s32.totalorder %s20, 1
    %p230 = por %p228, %p229
    %p231 = scmp.ne.s32.totalorder %s222, %s223
    %p232 = scmp.eq.s32.totalorder %s20, 0
    %p233 = por %p231, %p232
    %p234 = scmp.ne.s32.totalorder %s222, %s223
    %p235 = scmp.eq.s32.totalorder %s21, 1
    %p236 = por %p234, %p235
    %p238 = scmp.ne.s32.totalorder %s223, %s237
    %p239 = scmp.eq.s32.totalorder %s21, 0
    %p240 = por %p238, %p239
    %s241 = ssub.s32 %s22, %s34
    %s242 = ssub.s32 %s23, %s30
    %s243 = sor.u32 %s241, %s242
    %p244 = scmp.eq.s32.totalorder %s243, 0
    %s246 = sadd.s32 %s245, 1
    %s247 = scalar_select %p244, %s245, %s246
    %p250 = pneg %p244
    %p251 = scmp.eq.s32.totalorder %s15, 1
    %p252 = por %p250, %p251
    %p253 = scmp.ne.s32.totalorder %s245, %s248
    %p254 = scmp.eq.s32.totalorder %s15, 0
    %p255 = por %p253, %p254
    %p256 = scmp.ne.s32.totalorder %s245, %s248
    %p257 = scmp.eq.s32.totalorder %s20, 1
    %p258 = por %p256, %p257
    %p259 = scmp.ne.s32.totalorder %s248, %s249
    %p260 = scmp.eq.s32.totalorder %s20, 0
    %p261 = por %p259, %p260
    %p262 = scmp.ne.s32.totalorder %s248, %s249
    %p263 = scmp.eq.s32.totalorder %s21, 1
    %p264 = por %p262, %p263
    %p266 = scmp.ne.s32.totalorder %s249, %s265
    %p267 = scmp.eq.s32.totalorder %s21, 0
    %p268 = por %p266, %p267
    %p269 = scmp.le.s32.totalorder 1, %s15
    %p270 = scmp.lt.s32.totalorder %s15, 3
    %p271 = pnand %p269, %p270
    %p272 = pneg %p271
    // Predicated region
    $region9: #{decoder_layer.8} parent=5 // pred_check
      _
    $region10: #{decoder_layer.8} parent=5 // pred_check_branch
      %274 = sbr.rel (%p271) target = $region12
    $region11: #{decoder_layer.8} parent=5 // pred_region
      %s275 = ssub.s32 %s15, 1
      // Predicated region
      $region13: #{decoder_layer.8} parent=11 // pred_check
        %p276 = pneg %p128
      $region14: #{decoder_layer.8} parent=11 // pred_check_branch
        %278 = sbr.rel (%p276) target = $region16
      $region15: #{decoder_layer.8} parent=11 // pred_region
        _
      $region16: #{decoder_layer.8} parent=11 // pred_fallthru
        _
      // Predicated region
      $region17: #{decoder_layer.8} parent=11 // pred_check
        %p279 = pneg %p149
      $region18: #{decoder_layer.8} parent=11 // pred_check_branch
        %281 = sbr.rel (%p279) target = $region20
      $region19: #{decoder_layer.8} parent=11 // pred_region
        _
      $region20: #{decoder_layer.8} parent=11 // pred_fallthru
        _
      // Predicated region
      $region21: #{decoder_layer.8} parent=11 // pred_check
        %p282 = pneg %p170
      $region22: #{decoder_layer.8} parent=11 // pred_check_branch
        %284 = sbr.rel (%p282) target = $region24
      $region23: #{decoder_layer.8} parent=11 // pred_region
        _
      $region24: #{decoder_layer.8} parent=11 // pred_fallthru
        _
      // Predicated region
      $region25: #{decoder_layer.8} parent=11 // pred_check
        %p285 = pneg %p191
      $region26: #{decoder_layer.8} parent=11 // pred_check_branch
        %287 = sbr.rel (%p285) target = $region28
      $region27: #{decoder_layer.8} parent=11 // pred_region
        _
      $region28: #{decoder_layer.8} parent=11 // pred_fallthru
        _
      // Predicated region
      $region29: #{decoder_layer.8} parent=11 // pred_check
        %p288 = pneg %p212
      $region30: #{decoder_layer.8} parent=11 // pred_check_branch
        %290 = sbr.rel (%p288) target = $region32
      $region31: #{decoder_layer.8} parent=11 // pred_region
        _
      $region32: #{decoder_layer.8} parent=11 // pred_fallthru
        _
      // Predicated region
      $region33: #{decoder_layer.8} parent=11 // pred_check
        %p291 = pneg %p233
      $region34: #{decoder_layer.8} parent=11 // pred_check_branch
        %293 = sbr.rel (%p291) target = $region36
      $region35: #{decoder_layer.8} parent=11 // pred_region
        _
      $region36: #{decoder_layer.8} parent=11 // pred_fallthru
        _
    $region12: #{decoder_layer.8} parent=5 // pred_fallthru
      _
    %p294 = scmp.lt.s32.totalorder %s15, 2
    // Predicated region
    $region37: #{decoder_layer.8} parent=5 // pred_check
      %p295 = pneg %p294
    $region38: #{decoder_layer.8} parent=5 // pred_check_branch
      %297 = sbr.rel (%p295) target = $region40
    $region39: #{decoder_layer.8} parent=5 // pred_region
      // Predicated region
      $region41: #{decoder_layer.8} parent=39 // pred_check
        %p298 = pneg %p49
      $region42: #{decoder_layer.8} parent=39 // pred_check_branch
        %300 = sbr.rel (%p298) target = $region44
      $region43: #{decoder_layer.8} parent=39 // pred_region
        %p301 = scmp.lt.s32.totalorder %s22, 1
        %s302 = scalar_select %p301, %s22, 1
        %p303 = scmp.lt.s32.totalorder %s23, 0
        %s304 = scalar_select %p303, %s23, 0
        %s305 = sadd.s32 %s304, %s302
        %s306 = smul.addr %s305, 8
        %s307 = scalar_lea.vmem %s0, %s306
      $region44: #{decoder_layer.8} parent=39 // pred_fallthru
        _
      // Predicated region
      $region45: #{decoder_layer.8} parent=39 // pred_check
        %p308 = pneg %p75
      $region46: #{decoder_layer.8} parent=39 // pred_check_branch
        %310 = sbr.rel (%p308) target = $region48
      $region47: #{decoder_layer.8} parent=39 // pred_region
        %p311 = scmp.lt.s32.totalorder %s22, 1
        %s312 = scalar_select %p311, %s22, 1
        %s313 = smul.addr %s312, 4
        %s314 = smul.addr %s313, 4
        %s315 = scalar_lea.vmem %s1, %s314
      $region48: #{decoder_layer.8} parent=39 // pred_fallthru
        _
      // Predicated region
      $region49: #{decoder_layer.8} parent=39 // pred_check
        %p316 = pneg %p101
      $region50: #{decoder_layer.8} parent=39 // pred_check_branch
        %318 = sbr.rel (%p316) target = $region52
      $region51: #{decoder_layer.8} parent=39 // pred_region
        %p319 = scmp.lt.s32.totalorder %s22, 1
        %s320 = scalar_select %p319, %s22, 1
        %s321 = smul.addr %s320, 4
        %s322 = smul.addr %s321, 4
        %s323 = scalar_lea.vmem %s2, %s322
      $region52: #{decoder_layer.8} parent=39 // pred_fallthru
        _
    $region40: #{decoder_layer.8} parent=5 // pred_fallthru
      _
    %p324 = scmp.le.s32.totalorder 1, %s15
    %p325 = scmp.lt.s32.totalorder %s15, 3
    %p326 = pnand %p324, %p325
    %p327 = pneg %p326
    // Predicated region
    $region53: #{decoder_layer.8} parent=5 // pred_check
      _
    $region54: #{decoder_layer.8} parent=5 // pred_check_branch
      %329 = sbr.rel (%p326) target = $region56
    $region55: #{decoder_layer.8} parent=5 // pred_region
      %s330 = ssub.s32 %s15, 1
      %p331 = scmp.lt.s32.totalorder %s24, 1
      %s332 = scalar_select %p331, %s24, 1
      %p333 = scmp.lt.s32.totalorder %s25, 0
      %s334 = scalar_select %p333, %s25, 0
      %s335 = sadd.s32 %s334, %s332
      %s336 = smul.addr %s335, 8
      %s337 = scalar_lea.vmem %s0, %s336
      %p338 = pneg %p55
      %p339 = pneg %p52
      %p340 = scmp.lt.s32.totalorder %s24, 1
      %s341 = scalar_select %p340, %s24, 1
      %s342 = smul.addr %s341, 4
      %s343 = smul.addr %s342, 4
      %s344 = scalar_lea.vmem %s1, %s343
      %p345 = pneg %p81
      %p346 = pneg %p78
      %p347 = scmp.lt.s32.totalorder %s24, 1
      %s348 = scalar_select %p347, %s24, 1
      %s349 = smul.addr %s348, 4
      %s350 = smul.addr %s349, 4
      %s351 = scalar_lea.vmem %s2, %s350
      %p352 = pneg %p107
      %p353 = pneg %p104
      %p354 = pneg %p128
      %p355 = pneg %p125
      %p356 = pneg %p149
      %p357 = pneg %p146
      %p358 = pneg %p170
      %p359 = pneg %p167
      %p360 = pneg %p191
      %p361 = pneg %p188
      %p362 = pneg %p212
      %p363 = pneg %p209
      %p364 = pneg %p233
      %p365 = pneg %p230
      %p366 = pneg %p261
      %p367 = pneg %p258
      %p368 = scmp.lt.s32.totalorder %s24, 1
      %s369 = scalar_select %p368, %s24, 1
      %p370 = scmp.lt.s32.totalorder %s25, 0
      %s371 = scalar_select %p370, %s25, 0
      %s372 = sadd.s32 %s371, %s369
      %s373 = smul.addr %s372, 8
      %s374 = scalar_lea.vmem %s9, %s373
      %p375 = scmp.lt.s32.totalorder %s24, 1
      %s376 = scalar_select %p375, %s24, 1
      %p377 = scmp.lt.s32.totalorder %s25, 0
      %s378 = scalar_select %p377, %s25, 0
      %s379 = sadd.s32 %s378, %s376
      %s380 = smul.addr %s379, 8
      %s381 = scalar_lea.vmem %s0, %s380
      %p382 = scmp.lt.s32.totalorder %s24, 1
      %s383 = scalar_select %p382, %s24, 1
      %s384 = smul.addr %s383, 4
      %s385 = smul.addr %s384, 4
      %s386 = scalar_lea.vmem %s1, %s385
      %p387 = scmp.lt.s32.totalorder %s24, 1
      %s388 = scalar_select %p387, %s24, 1
      %s389 = smul.addr %s388, 4
      %s390 = smul.addr %s389, 4
      %s391 = scalar_lea.vmem %s2, %s390
      %p392 = scmp.lt.s32.totalorder %s24, 1
      %s393 = scalar_select %p392, %s24, 1
      %p394 = scmp.lt.s32.totalorder %s25, 0
      %s395 = scalar_select %p394, %s25, 0
      %s396 = sadd.s32 %s395, %s393
      %s397 = smul.addr %s396, 8
      %s398 = scalar_lea.vmem %s9, %s397
      %v400 = vld [vmem:[%s381] sm:$0xff]
      %v401 = vpack.c.bf16 %v400, %v400
      %v402 = vld [vmem:[%s6] sm:$0x1]
      %v404 = vlaneseq
      %v405 = vshrl.u32 %v404, 7
      %v406 = vsub.s32 0, %v405
      %v407 = vrot.slane %v402, %v406
      %v409 = vadd.f32 %v400, %v407
      %v410 = vld [vmem:[%s3] sm:$0xf]
      %v411 = vld [vmem:[%s3 + $0x4] sm:$0xf]
      %v412 = vld [vmem:[%s3 + $0x8] sm:$0xf]
      %v413 = vld [vmem:[%s3 + $0xc] sm:$0xf]
      %v414 = vld [vmem:[%s4] sm:$0x1]
      %v416 = vlaneseq
      %v417 = vshrl.u32 %v416, 7
      %v418 = vsub.s32 0, %v417
      %v419 = vrot.slane %v414, %v418
      %v425 = vunpack.c.l.b16 %v410
      %v426 = vunpack.c.l.b16 %v411
      %v427 = vunpack.c.l.b16 %v412
      %v428 = vunpack.c.l.b16 %v413
      %v429 = vpack.c.b16 %v426, %v425
      %v430 = vpack.c.b16 %v428, %v427
      %vm433 = vcmask 261120
      %v435 = vsel %vm433, %v401, 0
      %437 = vmatprep.subr.bf16.mxu0 0
      %438 = vmatpush1.bf16.msra.mxu0 %v429
      %439 = vmatprep.subr.bf16.mxu0 0
      %440 = vmatpush1.bf16.msra.mxu0 %v430
      %441 = vmatprep.subr.bf16.mxu0 0
      %442 = vmatpush1.bf16.msra.mxu0 0
      %443 = vmatprep.subr.bf16.mxu0 0
      %444 = vmatpush1.bf16.msra.mxu0 0
      %445 = vmatprep.subr.bf16.mxu0 0
      %446 = vmatpush1.bf16.msra.mxu0 0
      %447 = vmatprep.subr.bf16.mxu0 0
      %448 = vmatpush1.bf16.msra.mxu0 0
      %449 = vmatprep.subr.bf16.mxu0 0
      %450 = vmatpush1.bf16.msra.mxu0 0
      %451 = vmatprep.subr.bf16.mxu0 0
      %452 = vmatpush1.bf16.msra.mxu0 0
      %453 = vmatprep.subr.bf16.mxu0 0
      %454 = vmatpush1.bf16.msra.mxu0 0
      %455 = vmatprep.subr.bf16.mxu0 0
      %456 = vmatpush1.bf16.msra.mxu0 0
      %457 = vmatprep.subr.bf16.mxu0 0
      %458 = vmatpush1.bf16.msra.mxu0 0
      %459 = vmatprep.subr.bf16.mxu0 0
      %460 = vmatpush1.bf16.msra.mxu0 0
      %461 = vmatprep.subr.bf16.mxu0 0
      %462 = vmatpush1.bf16.msra.mxu0 0
      %463 = vmatprep.subr.bf16.mxu0 0
      %464 = vmatpush1.bf16.msra.mxu0 0
      %465 = vmatprep.subr.bf16.mxu0 0
      %466 = vmatpush1.bf16.msra.mxu0 0
      %467 = vmatprep.subr.bf16.mxu0 0
      %468 = vmatpush1.bf16.msra.mxu0 0
      %469 = vmatprep.mubr.bf16.mxu0 0
      %470 = vmatmul.mubr.bf16.gmra.mrb[0].mxu0 %v435
      %v471 = vpop.f32.mrb[0].mxu0
      %v472 = vadd.f32 %v419, %v471
      %v473 = vpop.f32.mrb[0].mxu0
      %v474 = vpop.f32.mrb[0].mxu0
      %v475 = vpop.f32.mrb[0].mxu0
      %476 = vdwg.mxu0
      %v477 = vmul.f32 %v472, 0.35355338
      %v478 = vld [vmem:[%s386] sm:$0xf]
      %v479 = vld [vmem:[%s391] sm:$0xf]
      %v480 = vpack.c.bf16 %v477, %v477
      %vm481 = vcmask 64512
      %v483 = vsel %vm481, %v480, 0
      %v486 = vsel %vm481, %v478, 0
      %488 = vmatprep.subr.bf16.mxu0 0
      %489 = vmatpush1.bf16.xpose.msra.mxu0 %v486
      %490 = vmatprep.subr.bf16.mxu0 0
      %491 = vmatpush1.bf16.xpose.msra.mxu0 0
      %492 = vmatprep.subr.bf16.mxu0 0
      %493 = vmatpush1.bf16.xpose.msra.mxu0 0
      %494 = vmatprep.subr.bf16.mxu0 0
      %495 = vmatpush1.bf16.xpose.msra.mxu0 0
      %496 = vmatprep.subr.bf16.mxu0 0
      %497 = vmatpush1.bf16.xpose.msra.mxu0 0
      %498 = vmatprep.subr.bf16.mxu0 0
      %499 = vmatpush1.bf16.xpose.msra.mxu0 0
      %500 = vmatprep.subr.bf16.mxu0 0
      %501 = vmatpush1.bf16.xpose.msra.mxu0 0
      %502 = vmatprep.subr.bf16.mxu0 0
      %503 = vmatpush1.bf16.xpose.msra.mxu0 0
      %504 = vmatprep.subr.bf16.mxu0 0
      %505 = vmatpush1.bf16.xpose.msra.mxu0 0
      %506 = vmatprep.subr.bf16.mxu0 0
      %507 = vmatpush1.bf16.xpose.msra.mxu0 0
      %508 = vmatprep.subr.bf16.mxu0 0
      %509 = vmatpush1.bf16.xpose.msra.mxu0 0
      %510 = vmatprep.subr.bf16.mxu0 0
      %511 = vmatpush1.bf16.xpose.msra.mxu0 0
      %512 = vmatprep.subr.bf16.mxu0 0
      %513 = vmatpush1.bf16.xpose.msra.mxu0 0
      %514 = vmatprep.subr.bf16.mxu0 0
      %515 = vmatpush1.bf16.xpose.msra.mxu0 0
      %516 = vmatprep.subr.bf16.mxu0 0
      %517 = vmatpush1.bf16.xpose.msra.mxu0 0
      %518 = vmatprep.subr.bf16.mxu0 0
      %519 = vmatpush1.bf16.xpose.msra.mxu0 0
      %520 = vmatprep.mubr.bf16.mxu0 0
      %521 = vmatmul.mubr.bf16.gmra.mrb[0].mxu0 %v483
      %v522 = vpop.f32.mrb[0].mxu0
      %v523 = vadd.f32 0.0, %v522
      %v524 = vpop.f32.mrb[0].mxu0
      %v525 = vpop.f32.mrb[0].mxu0
      %v526 = vpop.f32.mrb[0].mxu0
      %527 = vdwg.mxu0
      %v528 = vsel %vm481, %v523, -inf
      %529 = vmax.xlane.f32.xlu0 %v528
      %v530 = vpop.xlane.xlu0 %529
      %v531 = vsub.f32 %v523, %v530
      %v532 = vmul.f32 %v531, 1.442695
      %v533 = vpow.pop %v532
      %v534 = vsel %vm481, %v533, 0.0
      %535 = vadd.xlane.f32.xlu0 %v534
      %v536 = vpop.xlane.xlu0 %535
      %v537 = vrcp.pop %v536
      %v538 = vmul.f32 %v533, %v537
      %v539 = vpack.c.bf16 %v538, %v538
      %v541 = vsel %vm481, %v539, 0
      %vm543 = vcmask 1043456
      %v545 = vsel %vm543, %v479, 0
      %547 = vmatprep.subr.bf16.mxu0 0
      %548 = vmatpush1.bf16.msra.mxu0 %v545
      %549 = vmatprep.subr.bf16.mxu0 0
      %550 = vmatpush1.bf16.msra.mxu0 0
      %551 = vmatprep.subr.bf16.mxu0 0
      %552 = vmatpush1.bf16.msra.mxu0 0
      %553 = vmatprep.subr.bf16.mxu0 0
      %554 = vmatpush1.bf16.msra.mxu0 0
      %555 = vmatprep.subr.bf16.mxu0 0
      %556 = vmatpush1.bf16.msra.mxu0 0
      %557 = vmatprep.subr.bf16.mxu0 0
      %558 = vmatpush1.bf16.msra.mxu0 0
      %559 = vmatprep.subr.bf16.mxu0 0
      %560 = vmatpush1.bf16.msra.mxu0 0
      %561 = vmatprep.subr.bf16.mxu0 0
      %562 = vmatpush1.bf16.msra.mxu0 0
      %563 = vmatprep.subr.bf16.mxu0 0
      %564 = vmatpush1.bf16.msra.mxu0 0
      %565 = vmatprep.subr.bf16.mxu0 0
      %566 = vmatpush1.bf16.msra.mxu0 0
      %567 = vmatprep.subr.bf16.mxu0 0
      %568 = vmatpush1.bf16.msra.mxu0 0
      %569 = vmatprep.subr.bf16.mxu0 0
      %570 = vmatpush1.bf16.msra.mxu0 0
      %571 = vmatprep.subr.bf16.mxu0 0
      %572 = vmatpush1.bf16.msra.mxu0 0
      %573 = vmatprep.subr.bf16.mxu0 0
      %574 = vmatpush1.bf16.msra.mxu0 0
      %575 = vmatprep.subr.bf16.mxu0 0
      %576 = vmatpush1.bf16.msra.mxu0 0
      %577 = vmatprep.subr.bf16.mxu0 0
      %578 = vmatpush1.bf16.msra.mxu0 0
      %579 = vmatprep.mubr.bf16.mxu0 0
      %580 = vmatmul.mubr.bf16.gmra.mrb[0].mxu0 %v541
      %v581 = vpop.f32.mrb[0].mxu0
      %v582 = vadd.f32 0.0, %v581
      %v583 = vpop.f32.mrb[0].mxu0
      %v584 = vpop.f32.mrb[0].mxu0
      %v585 = vpop.f32.mrb[0].mxu0
      %586 = vdwg.mxu0
      %v587 = vpack.c.bf16 %v582, %v582
      %v588 = vld [vmem:[%s5] sm:$0xf]
      %v590 = vsel %vm481, %v587, 0
      %v593 = vsel %vm543, %v588, 0
      %595 = vmatprep.subr.bf16.mxu0 0
      %596 = vmatpush1.bf16.msra.mxu0 %v593
      %597 = vmatprep.subr.bf16.mxu0 0
      %598 = vmatpush1.bf16.msra.mxu0 0
      %599 = vmatprep.subr.bf16.mxu0 0
      %600 = vmatpush1.bf16.msra.mxu0 0
      %601 = vmatprep.subr.bf16.mxu0 0
      %602 = vmatpush1.bf16.msra.mxu0 0
      %603 = vmatprep.subr.bf16.mxu0 0
      %604 = vmatpush1.bf16.msra.mxu0 0
      %605 = vmatprep.subr.bf16.mxu0 0
      %606 = vmatpush1.bf16.msra.mxu0 0
      %607 = vmatprep.subr.bf16.mxu0 0
      %608 = vmatpush1.bf16.msra.mxu0 0
      %609 = vmatprep.subr.bf16.mxu0 0
      %610 = vmatpush1.bf16.msra.mxu0 0
      %611 = vmatprep.subr.bf16.mxu0 0
      %612 = vmatpush1.bf16.msra.mxu0 0
      %613 = vmatprep.subr.bf16.mxu0 0
      %614 = vmatpush1.bf16.msra.mxu0 0
      %615 = vmatprep.subr.bf16.mxu0 0
      %616 = vmatpush1.bf16.msra.mxu0 0
      %617 = vmatprep.subr.bf16.mxu0 0
      %618 = vmatpush1.bf16.msra.mxu0 0
      %619 = vmatprep.subr.bf16.mxu0 0
      %620 = vmatpush1.bf16.msra.mxu0 0
      %621 = vmatprep.subr.bf16.mxu0 0
      %622 = vmatpush1.bf16.msra.mxu0 0
      %623 = vmatprep.subr.bf16.mxu0 0
      %624 = vmatpush1.bf16.msra.mxu0 0
      %625 = vmatprep.subr.bf16.mxu0 0
      %626 = vmatpush1.bf16.msra.mxu0 0
      %627 = vmatprep.mubr.bf16.mxu0 0
      %628 = vmatmul.mubr.bf16.gmra.mrb[0].mxu0 %v590
      %v629 = vpop.f32.mrb[0].mxu0
      %v630 = vadd.f32 0.0, %v629
      %v631 = vpop.f32.mrb[0].mxu0
      %v632 = vpop.f32.mrb[0].mxu0
      %v633 = vpop.f32.mrb[0].mxu0
      %634 = vdwg.mxu0
      %v635 = vadd.f32 %v409, %v630
      %s636 = scalar_lea.vmem %s3, 16
      %v637 = vld [vmem:[%s636] sm:$0xf]
      %v638 = vld [vmem:[%s636 + $0x4] sm:$0xf]
      %v639 = vld [vmem:[%s636 + $0x8] sm:$0xf]
      %v640 = vld [vmem:[%s636 + $0xc] sm:$0xf]
      %s641 = scalar_lea.vmem %s4, 1
      %v642 = vld [vmem:[%s641] sm:$0x1]
      %v644 = vlaneseq
      %v645 = vshrl.u32 %v644, 7
      %v646 = vsub.s32 0, %v645
      %v647 = vrot.slane %v642, %v646
      %v653 = vunpack.c.l.b16 %v637
      %v654 = vunpack.c.l.b16 %v638
      %v655 = vunpack.c.l.b16 %v639
      %v656 = vunpack.c.l.b16 %v640
      %v657 = vpack.c.b16 %v654, %v653
      %v658 = vpack.c.b16 %v656, %v655
      %661 = vmatprep.subr.bf16.mxu0 0
      %662 = vmatpush1.bf16.msra.mxu0 %v657
      %663 = vmatprep.subr.bf16.mxu0 0
      %664 = vmatpush1.bf16.msra.mxu0 %v658
      %665 = vmatprep.subr.bf16.mxu0 0
      %666 = vmatpush1.bf16.msra.mxu0 0
      %667 = vmatprep.subr.bf16.mxu0 0
      %668 = vmatpush1.bf16.msra.mxu0 0
      %669 = vmatprep.subr.bf16.mxu0 0
      %670 = vmatpush1.bf16.msra.mxu0 0
      %671 = vmatprep.subr.bf16.mxu0 0
      %672 = vmatpush1.bf16.msra.mxu0 0
      %673 = vmatprep.subr.bf16.mxu0 0
      %674 = vmatpush1.bf16.msra.mxu0 0
      %675 = vmatprep.subr.bf16.mxu0 0
      %676 = vmatpush1.bf16.msra.mxu0 0
      %677 = vmatprep.subr.bf16.mxu0 0
      %678 = vmatpush1.bf16.msra.mxu0 0
      %679 = vmatprep.subr.bf16.mxu0 0
      %680 = vmatpush1.bf16.msra.mxu0 0
      %681 = vmatprep.subr.bf16.mxu0 0
      %682 = vmatpush1.bf16.msra.mxu0 0
      %683 = vmatprep.subr.bf16.mxu0 0
      %684 = vmatpush1.bf16.msra.mxu0 0
      %685 = vmatprep.subr.bf16.mxu0 0
      %686 = vmatpush1.bf16.msra.mxu0 0
      %687 = vmatprep.subr.bf16.mxu0 0
      %688 = vmatpush1.bf16.msra.mxu0 0
      %689 = vmatprep.subr.bf16.mxu0 0
      %690 = vmatpush1.bf16.msra.mxu0 0
      %691 = vmatprep.subr.bf16.mxu0 0
      %692 = vmatpush1.bf16.msra.mxu0 0
      %693 = vmatprep.mubr.bf16.mxu0 0
      %694 = vmatmul.mubr.bf16.gmra.mrb[0].mxu0 %v435
      %v695 = vpop.f32.mrb[0].mxu0
      %v696 = vadd.f32 %v647, %v695
      %v697 = vpop.f32.mrb[0].mxu0
      %v698 = vpop.f32.mrb[0].mxu0
      %v699 = vpop.f32.mrb[0].mxu0
      %700 = vdwg.mxu0
      %v701 = vmul.f32 %v696, 0.35355338
      %s702 = scalar_lea.vmem %s386, 4
      %v703 = vld [vmem:[%s702] sm:$0xf]
      %s704 = scalar_lea.vmem %s391, 4
      %v705 = vld [vmem:[%s704] sm:$0xf]
      %v706 = vpack.c.bf16 %v701, %v701
      %v708 = vsel %vm481, %v706, 0
      %v711 = vsel %vm481, %v703, 0
      %713 = vmatprep.subr.bf16.mxu0 0
      %714 = vmatpush1.bf16.xpose.msra.mxu0 %v711
      %715 = vmatprep.subr.bf16.mxu0 0
      %716 = vmatpush1.bf16.xpose.msra.mxu0 0
      %717 = vmatprep.subr.bf16.mxu0 0
      %718 = vmatpush1.bf16.xpose.msra.mxu0 0
      %719 = vmatprep.subr.bf16.mxu0 0
      %720 = vmatpush1.bf16.xpose.msra.mxu0 0
      %721 = vmatprep.subr.bf16.mxu0 0
      %722 = vmatpush1.bf16.xpose.msra.mxu0 0
      %723 = vmatprep.subr.bf16.mxu0 0
      %724 = vmatpush1.bf16.xpose.msra.mxu0 0
      %725 = vmatprep.subr.bf16.mxu0 0
      %726 = vmatpush1.bf16.xpose.msra.mxu0 0
      %727 = vmatprep.subr.bf16.mxu0 0
      %728 = vmatpush1.bf16.xpose.msra.mxu0 0
      %729 = vmatprep.subr.bf16.mxu0 0
      %730 = vmatpush1.bf16.xpose.msra.mxu0 0
      %731 = vmatprep.subr.bf16.mxu0 0
      %732 = vmatpush1.bf16.xpose.msra.mxu0 0
      %733 = vmatprep.subr.bf16.mxu0 0
      %734 = vmatpush1.bf16.xpose.msra.mxu0 0
      %735 = vmatprep.subr.bf16.mxu0 0
      %736 = vmatpush1.bf16.xpose.msra.mxu0 0
      %737 = vmatprep.subr.bf16.mxu0 0
      %738 = vmatpush1.bf16.xpose.msra.mxu0 0
      %739 = vmatprep.subr.bf16.mxu0 0
      %740 = vmatpush1.bf16.xpose.msra.mxu0 0
      %741 = vmatprep.subr.bf16.mxu0 0
      %742 = vmatpush1.bf16.xpose.msra.mxu0 0
      %743 = vmatprep.subr.bf16.mxu0 0
      %744 = vmatpush1.bf16.xpose.msra.mxu0 0
      %745 = vmatprep.mubr.bf16.mxu0 0
      %746 = vmatmul.mubr.bf16.gmra.mrb[0].mxu0 %v708
      %v747 = vpop.f32.mrb[0].mxu0
      %v748 = vadd.f32 0.0, %v747
      %v749 = vpop.f32.mrb[0].mxu0
      %v750 = vpop.f32.mrb[0].mxu0
      %v751 = vpop.f32.mrb[0].mxu0
      %752 = vdwg.mxu0
      %v753 = vsel %vm481, %v748, -inf
      %754 = vmax.xlane.f32.xlu0 %v753
      %v755 = vpop.xlane.xlu0 %754
      %v756 = vsub.f32 %v748, %v755
      %v757 = vmul.f32 %v756, 1.442695
      %v758 = vpow.pop %v757
      %v759 = vsel %vm481, %v758, 0.0
      %760 = vadd.xlane.f32.xlu0 %v759
      %v761 = vpop.xlane.xlu0 %760
      %v762 = vrcp.pop %v761
      %v763 = vmul.f32 %v758, %v762
      %v764 = vpack.c.bf16 %v763, %v763
      %v766 = vsel %vm481, %v764, 0
      %v769 = vsel %vm543, %v705, 0
      %771 = vmatprep.subr.bf16.mxu0 0
      %772 = vmatpush1.bf16.msra.mxu0 %v769
      %773 = vmatprep.subr.bf16.mxu0 0
      %774 = vmatpush1.bf16.msra.mxu0 0
      %775 = vmatprep.subr.bf16.mxu0 0
      %776 = vmatpush1.bf16.msra.mxu0 0
      %777 = vmatprep.subr.bf16.mxu0 0
      %778 = vmatpush1.bf16.msra.mxu0 0
      %779 = vmatprep.subr.bf16.mxu0 0
      %780 = vmatpush1.bf16.msra.mxu0 0
      %781 = vmatprep.subr.bf16.mxu0 0
      %782 = vmatpush1.bf16.msra.mxu0 0
      %783 = vmatprep.subr.bf16.mxu0 0
      %784 = vmatpush1.bf16.msra.mxu0 0
      %785 = vmatprep.subr.bf16.mxu0 0
      %786 = vmatpush1.bf16.msra.mxu0 0
      %787 = vmatprep.subr.bf16.mxu0 0
      %788 = vmatpush1.bf16.msra.mxu0 0
      %789 = vmatprep.subr.bf16.mxu0 0
      %790 = vmatpush1.bf16.msra.mxu0 0
      %791 = vmatprep.subr.bf16.mxu0 0
      %792 = vmatpush1.bf16.msra.mxu0 0
      %793 = vmatprep.subr.bf16.mxu0 0
      %794 = vmatpush1.bf16.msra.mxu0 0
      %795 = vmatprep.subr.bf16.mxu0 0
      %796 = vmatpush1.bf16.msra.mxu0 0
      %797 = vmatprep.subr.bf16.mxu0 0
      %798 = vmatpush1.bf16.msra.mxu0 0
      %799 = vmatprep.subr.bf16.mxu0 0
      %800 = vmatpush1.bf16.msra.mxu0 0
      %801 = vmatprep.subr.bf16.mxu0 0
      %802 = vmatpush1.bf16.msra.mxu0 0
      %803 = vmatprep.mubr.bf16.mxu0 0
      %804 = vmatmul.mubr.bf16.gmra.mrb[0].mxu0 %v766
      %v805 = vpop.f32.mrb[0].mxu0
      %v806 = vadd.f32 0.0, %v805
      %v807 = vpop.f32.mrb[0].mxu0
      %v808 = vpop.f32.mrb[0].mxu0
      %v809 = vpop.f32.mrb[0].mxu0
      %810 = vdwg.mxu0
      %v811 = vpack.c.bf16 %v806, %v806
      %s812 = scalar_lea.vmem %s5, 4
      %v813 = vld [vmem:[%s812] sm:$0xf]
      %v815 = vsel %vm481, %v811, 0
      %v818 = vsel %vm543, %v813, 0
      %820 = vmatprep.subr.bf16.mxu0 0
      %821 = vmatpush1.bf16.msra.mxu0 %v818
      %822 = vmatprep.subr.bf16.mxu0 0
      %823 = vmatpush1.bf16.msra.mxu0 0
      %824 = vmatprep.subr.bf16.mxu0 0
      %825 = vmatpush1.bf16.msra.mxu0 0
      %826 = vmatprep.subr.bf16.mxu0 0
      %827 = vmatpush1.bf16.msra.mxu0 0
      %828 = vmatprep.subr.bf16.mxu0 0
      %829 = vmatpush1.bf16.msra.mxu0 0
      %830 = vmatprep.subr.bf16.mxu0 0
      %831 = vmatpush1.bf16.msra.mxu0 0
      %832 = vmatprep.subr.bf16.mxu0 0
      %833 = vmatpush1.bf16.msra.mxu0 0
      %834 = vmatprep.subr.bf16.mxu0 0
      %835 = vmatpush1.bf16.msra.mxu0 0
      %836 = vmatprep.subr.bf16.mxu0 0
      %837 = vmatpush1.bf16.msra.mxu0 0
      %838 = vmatprep.subr.bf16.mxu0 0
      %839 = vmatpush1.bf16.msra.mxu0 0
      %840 = vmatprep.subr.bf16.mxu0 0
      %841 = vmatpush1.bf16.msra.mxu0 0
      %842 = vmatprep.subr.bf16.mxu0 0
      %843 = vmatpush1.bf16.msra.mxu0 0
      %844 = vmatprep.subr.bf16.mxu0 0
      %845 = vmatpush1.bf16.msra.mxu0 0
      %846 = vmatprep.subr.bf16.mxu0 0
      %847 = vmatpush1.bf16.msra.mxu0 0
      %848 = vmatprep.subr.bf16.mxu0 0
      %849 = vmatpush1.bf16.msra.mxu0 0
      %850 = vmatprep.subr.bf16.mxu0 0
      %851 = vmatpush1.bf16.msra.mxu0 0
      %852 = vmatprep.mubr.bf16.mxu0 0
      %853 = vmatmul.mubr.bf16.gmra.mrb[0].mxu0 %v815
      %v854 = vpop.f32.mrb[0].mxu0
      %v855 = vadd.f32 0.0, %v854
      %v856 = vpop.f32.mrb[0].mxu0
      %v857 = vpop.f32.mrb[0].mxu0
      %v858 = vpop.f32.mrb[0].mxu0
      %859 = vdwg.mxu0
      %v860 = vadd.f32 %v635, %v855
      %s861 = scalar_lea.vmem %s3, 32
      %v862 = vld [vmem:[%s861] sm:$0xf]
      %v863 = vld [vmem:[%s861 + $0x4] sm:$0xf]
      %v864 = vld [vmem:[%s861 + $0x8] sm:$0xf]
      %v865 = vld [vmem:[%s861 + $0xc] sm:$0xf]
      %s866 = scalar_lea.vmem %s4, 2
      %v867 = vld [vmem:[%s866] sm:$0x1]
      %v869 = vlaneseq
      %v870 = vshrl.u32 %v869, 7
      %v871 = vsub.s32 0, %v870
      %v872 = vrot.slane %v867, %v871
      %v878 = vunpack.c.l.b16 %v862
      %v879 = vunpack.c.l.b16 %v863
      %v880 = vunpack.c.l.b16 %v864
      %v881 = vunpack.c.l.b16 %v865
      %v882 = vpack.c.b16 %v879, %v878
      %v883 = vpack.c.b16 %v881, %v880
      %886 = vmatprep.subr.bf16.mxu0 0
      %887 = vmatpush1.bf16.msra.mxu0 %v882
      %888 = vmatprep.subr.bf16.mxu0 0
      %889 = vmatpush1.bf16.msra.mxu0 %v883
      %890 = vmatprep.subr.bf16.mxu0 0
      %891 = vmatpush1.bf16.msra.mxu0 0
      %892 = vmatprep.subr.bf16.mxu0 0
      %893 = vmatpush1.bf16.msra.mxu0 0
      %894 = vmatprep.subr.bf16.mxu0 0
      %895 = vmatpush1.bf16.msra.mxu0 0
      %896 = vmatprep.subr.bf16.mxu0 0
      %897 = vmatpush1.bf16.msra.mxu0 0
      %898 = vmatprep.subr.bf16.mxu0 0
      %899 = vmatpush1.bf16.msra.mxu0 0
      %900 = vmatprep.subr.bf16.mxu0 0
      %901 = vmatpush1.bf16.msra.mxu0 0
      %902 = vmatprep.subr.bf16.mxu0 0
      %903 = vmatpush1.bf16.msra.mxu0 0
      %904 = vmatprep.subr.bf16.mxu0 0
      %905 = vmatpush1.bf16.msra.mxu0 0
      %906 = vmatprep.subr.bf16.mxu0 0
      %907 = vmatpush1.bf16.msra.mxu0 0
      %908 = vmatprep.subr.bf16.mxu0 0
      %909 = vmatpush1.bf16.msra.mxu0 0
      %910 = vmatprep.subr.bf16.mxu0 0
      %911 = vmatpush1.bf16.msra.mxu0 0
      %912 = vmatprep.subr.bf16.mxu0 0
      %913 = vmatpush1.bf16.msra.mxu0 0
      %914 = vmatprep.subr.bf16.mxu0 0
      %915 = vmatpush1.bf16.msra.mxu0 0
      %916 = vmatprep.subr.bf16.mxu0 0
      %917 = vmatpush1.bf16.msra.mxu0 0
      %918 = vmatprep.mubr.bf16.mxu0 0
      %919 = vmatmul.mubr.bf16.gmra.mrb[0].mxu0 %v435
      %v920 = vpop.f32.mrb[0].mxu0
      %v921 = vadd.f32 %v872, %v920
      %v922 = vpop.f32.mrb[0].mxu0
      %v923 = vpop.f32.mrb[0].mxu0
      %v924 = vpop.f32.mrb[0].mxu0
      %925 = vdwg.mxu0
      %v926 = vmul.f32 %v921, 0.35355338
      %s927 = scalar_lea.vmem %s386, 8
      %v928 = vld [vmem:[%s927] sm:$0xf]
      %s929 = scalar_lea.vmem %s391, 8
      %v930 = vld [vmem:[%s929] sm:$0xf]
      %v931 = vpack.c.bf16 %v926, %v926
      %v933 = vsel %vm481, %v931, 0
      %v936 = vsel %vm481, %v928, 0
      %938 = vmatprep.subr.bf16.mxu0 0
      %939 = vmatpush1.bf16.xpose.msra.mxu0 %v936
      %940 = vmatprep.subr.bf16.mxu0 0
      %941 = vmatpush1.bf16.xpose.msra.mxu0 0
      %942 = vmatprep.subr.bf16.mxu0 0
      %943 = vmatpush1.bf16.xpose.msra.mxu0 0
      %944 = vmatprep.subr.bf16.mxu0 0
      %945 = vmatpush1.bf16.xpose.msra.mxu0 0
      %946 = vmatprep.subr.bf16.mxu0 0
      %947 = vmatpush1.bf16.xpose.msra.mxu0 0
      %948 = vmatprep.subr.bf16.mxu0 0
      %949 = vmatpush1.bf16.xpose.msra.mxu0 0
      %950 = vmatprep.subr.bf16.mxu0 0
      %951 = vmatpush1.bf16.xpose.msra.mxu0 0
      %952 = vmatprep.subr.bf16.mxu0 0
      %953 = vmatpush1.bf16.xpose.msra.mxu0 0
      %954 = vmatprep.subr.bf16.mxu0 0
      %955 = vmatpush1.bf16.xpose.msra.mxu0 0
      %956 = vmatprep.subr.bf16.mxu0 0
      %957 = vmatpush1.bf16.xpose.msra.mxu0 0
      %958 = vmatprep.subr.bf16.mxu0 0
      %959 = vmatpush1.bf16.xpose.msra.mxu0 0
      %960 = vmatprep.subr.bf16.mxu0 0
      %961 = vmatpush1.bf16.xpose.msra.mxu0 0
      %962 = vmatprep.subr.bf16.mxu0 0
      %963 = vmatpush1.bf16.xpose.msra.mxu0 0
      %964 = vmatprep.subr.bf16.mxu0 0
      %965 = vmatpush1.bf16.xpose.msra.mxu0 0
      %966 = vmatprep.subr.bf16.mxu0 0
      %967 = vmatpush1.bf16.xpose.msra.mxu0 0
      %968 = vmatprep.subr.bf16.mxu0 0
      %969 = vmatpush1.bf16.xpose.msra.mxu0 0
      %970 = vmatprep.mubr.bf16.mxu0 0
      %971 = vmatmul.mubr.bf16.gmra.mrb[0].mxu0 %v933
      %v972 = vpop.f32.mrb[0].mxu0
      %v973 = vadd.f32 0.0, %v972
      %v974 = vpop.f32.mrb[0].mxu0
      %v975 = vpop.f32.mrb[0].mxu0
      %v976 = vpop.f32.mrb[0].mxu0
      %977 = vdwg.mxu0
      %v978 = vsel %vm481, %v973, -inf
      %979 = vmax.xlane.f32.xlu0 %v978
      %v980 = vpop.xlane.xlu0 %979
      %v981 = vsub.f32 %v973, %v980
      %v982 = vmul.f32 %v981, 1.442695
      %v983 = vpow.pop %v982
      %v984 = vsel %vm481, %v983, 0.0
      %985 = vadd.xlane.f32.xlu0 %v984
      %v986 = vpop.xlane.xlu0 %985
      %v987 = vrcp.pop %v986
      %v988 = vmul.f32 %v983, %v987
      %v989 = vpack.c.bf16 %v988, %v988
      %v991 = vsel %vm481, %v989, 0
      %v994 = vsel %vm543, %v930, 0
      %996 = vmatprep.subr.bf16.mxu0 0
      %997 = vmatpush1.bf16.msra.mxu0 %v994
      %998 = vmatprep.subr.bf16.mxu0 0
      %999 = vmatpush1.bf16.msra.mxu0 0
      %1000 = vmatprep.subr.bf16.mxu0 0
      %1001 = vmatpush1.bf16.msra.mxu0 0
      %1002 = vmatprep.subr.bf16.mxu0 0
      %1003 = vmatpush1.bf16.msra.mxu0 0
      %1004 = vmatprep.subr.bf16.mxu0 0
      %1005 = vmatpush1.bf16.msra.mxu0 0
      %1006 = vmatprep.subr.bf16.mxu0 0
      %1007 = vmatpush1.bf16.msra.mxu0 0
      %1008 = vmatprep.subr.bf16.mxu0 0
      %1009 = vmatpush1.bf16.msra.mxu0 0
      %1010 = vmatprep.subr.bf16.mxu0 0
      %1011 = vmatpush1.bf16.msra.mxu0 0
      %1012 = vmatprep.subr.bf16.mxu0 0
      %1013 = vmatpush1.bf16.msra.mxu0 0
      %1014 = vmatprep.subr.bf16.mxu0 0
      %1015 = vmatpush1.bf16.msra.mxu0 0
      %1016 = vmatprep.subr.bf16.mxu0 0
      %1017 = vmatpush1.bf16.msra.mxu0 0
      %1018 = vmatprep.subr.bf16.mxu0 0
      %1019 = vmatpush1.bf16.msra.mxu0 0
      %1020 = vmatprep.subr.bf16.mxu0 0
      %1021 = vmatpush1.bf16.msra.mxu0 0
      %1022 = vmatprep.subr.bf16.mxu0 0
      %1023 = vmatpush1.bf16.msra.mxu0 0
      %1024 = vmatprep.subr.bf16.mxu0 0
      %1025 = vmatpush1.bf16.msra.mxu0 0
      %1026 = vmatprep.subr.bf16.mxu0 0
      %1027 = vmatpush1.bf16.msra.mxu0 0
      %1028 = vmatprep.mubr.bf16.mxu0 0
      %1029 = vmatmul.mubr.bf16.gmra.mrb[0].mxu0 %v991
      %v1030 = vpop.f32.mrb[0].mxu0
      %v1031 = vadd.f32 0.0, %v1030
      %v1032 = vpop.f32.mrb[0].mxu0
      %v1033 = vpop.f32.mrb[0].mxu0
      %v1034 = vpop.f32.mrb[0].mxu0
      %1035 = vdwg.mxu0
      %v1036 = vpack.c.bf16 %v1031, %v1031
      %s1037 = scalar_lea.vmem %s5, 8
      %v1038 = vld [vmem:[%s1037] sm:$0xf]
      %v1040 = vsel %vm481, %v1036, 0
      %v1043 = vsel %vm543, %v1038, 0
      %1045 = vmatprep.subr.bf16.mxu0 0
      %1046 = vmatpush1.bf16.msra.mxu0 %v1043
      %1047 = vmatprep.subr.bf16.mxu0 0
      %1048 = vmatpush1.bf16.msra.mxu0 0
      %1049 = vmatprep.subr.bf16.mxu0 0
      %1050 = vmatpush1.bf16.msra.mxu0 0
      %1051 = vmatprep.subr.bf16.mxu0 0
      %1052 = vmatpush1.bf16.msra.mxu0 0
      %1053 = vmatprep.subr.bf16.mxu0 0
      %1054 = vmatpush1.bf16.msra.mxu0 0
      %1055 = vmatprep.subr.bf16.mxu0 0
      %1056 = vmatpush1.bf16.msra.mxu0 0
      %1057 = vmatprep.subr.bf16.mxu0 0
      %1058 = vmatpush1.bf16.msra.mxu0 0
      %1059 = vmatprep.subr.bf16.mxu0 0
      %1060 = vmatpush1.bf16.msra.mxu0 0
      %1061 = vmatprep.subr.bf16.mxu0 0
      %1062 = vmatpush1.bf16.msra.mxu0 0
      %1063 = vmatprep.subr.bf16.mxu0 0
      %1064 = vmatpush1.bf16.msra.mxu0 0
      %1065 = vmatprep.subr.bf16.mxu0 0
      %1066 = vmatpush1.bf16.msra.mxu0 0
      %1067 = vmatprep.subr.bf16.mxu0 0
      %1068 = vmatpush1.bf16.msra.mxu0 0
      %1069 = vmatprep.subr.bf16.mxu0 0
      %1070 = vmatpush1.bf16.msra.mxu0 0
      %1071 = vmatprep.subr.bf16.mxu0 0
      %1072 = vmatpush1.bf16.msra.mxu0 0
      %1073 = vmatprep.subr.bf16.mxu0 0
      %1074 = vmatpush1.bf16.msra.mxu0 0
      %1075 = vmatprep.subr.bf16.mxu0 0
      %1076 = vmatpush1.bf16.msra.mxu0 0
      %1077 = vmatprep.mubr.bf16.mxu0 0
      %1078 = vmatmul.mubr.bf16.gmra.mrb[0].mxu0 %v1040
      %v1079 = vpop.f32.mrb[0].mxu0
      %v1080 = vadd.f32 0.0, %v1079
      %v1081 = vpop.f32.mrb[0].mxu0
      %v1082 = vpop.f32.mrb[0].mxu0
      %v1083 = vpop.f32.mrb[0].mxu0
      %1084 = vdwg.mxu0
      %v1085 = vadd.f32 %v860, %v1080
      %s1086 = scalar_lea.vmem %s3, 48
      %v1087 = vld [vmem:[%s1086] sm:$0xf]
      %v1088 = vld [vmem:[%s1086 + $0x4] sm:$0xf]
      %v1089 = vld [vmem:[%s1086 + $0x8] sm:$0xf]
      %v1090 = vld [vmem:[%s1086 + $0xc] sm:$0xf]
      %s1091 = scalar_lea.vmem %s4, 3
      %v1092 = vld [vmem:[%s1091] sm:$0x1]
      %v1094 = vlaneseq
      %v1095 = vshrl.u32 %v1094, 7
      %v1096 = vsub.s32 0, %v1095
      %v1097 = vrot.slane %v1092, %v1096
      %v1103 = vunpack.c.l.b16 %v1087
      %v1104 = vunpack.c.l.b16 %v1088
      %v1105 = vunpack.c.l.b16 %v1089
      %v1106 = vunpack.c.l.b16 %v1090
      %v1107 = vpack.c.b16 %v1104, %v1103
      %v1108 = vpack.c.b16 %v1106, %v1105
      %1111 = vmatprep.subr.bf16.mxu0 0
      %1112 = vmatpush1.bf16.msra.mxu0 %v1107
      %1113 = vmatprep.subr.bf16.mxu0 0
      %1114 = vmatpush1.bf16.msra.mxu0 %v1108
      %1115 = vmatprep.subr.bf16.mxu0 0
      %1116 = vmatpush1.bf16.msra.mxu0 0
      %1117 = vmatprep.subr.bf16.mxu0 0
      %1118 = vmatpush1.bf16.msra.mxu0 0
      %1119 = vmatprep.subr.bf16.mxu0 0
      %1120 = vmatpush1.bf16.msra.mxu0 0
      %1121 = vmatprep.subr.bf16.mxu0 0
      %1122 = vmatpush1.bf16.msra.mxu0 0
      %1123 = vmatprep.subr.bf16.mxu0 0
      %1124 = vmatpush1.bf16.msra.mxu0 0
      %1125 = vmatprep.subr.bf16.mxu0 0
      %1126 = vmatpush1.bf16.msra.mxu0 0
      %1127 = vmatprep.subr.bf16.mxu0 0
      %1128 = vmatpush1.bf16.msra.mxu0 0
      %1129 = vmatprep.subr.bf16.mxu0 0
      %1130 = vmatpush1.bf16.msra.mxu0 0
      %1131 = vmatprep.subr.bf16.mxu0 0
      %1132 = vmatpush1.bf16.msra.mxu0 0
      %1133 = vmatprep.subr.bf16.mxu0 0
      %1134 = vmatpush1.bf16.msra.mxu0 0
      %1135 = vmatprep.subr.bf16.mxu0 0
      %1136 = vmatpush1.bf16.msra.mxu0 0
      %1137 = vmatprep.subr.bf16.mxu0 0
      %1138 = vmatpush1.bf16.msra.mxu0 0
      %1139 = vmatprep.subr.bf16.mxu0 0
      %1140 = vmatpush1.bf16.msra.mxu0 0
      %1141 = vmatprep.subr.bf16.mxu0 0
      %1142 = vmatpush1.bf16.msra.mxu0 0
      %1143 = vmatprep.mubr.bf16.mxu0 0
      %1144 = vmatmul.mubr.bf16.gmra.mrb[0].mxu0 %v435
      %v1145 = vpop.f32.mrb[0].mxu0
      %v1146 = vadd.f32 %v1097, %v1145
      %v1147 = vpop.f32.mrb[0].mxu0
      %v1148 = vpop.f32.mrb[0].mxu0
      %v1149 = vpop.f32.mrb[0].mxu0
      %1150 = vdwg.mxu0
      %v1151 = vmul.f32 %v1146, 0.35355338
      %s1152 = scalar_lea.vmem %s386, 12
      %v1153 = vld [vmem:[%s1152] sm:$0xf]
      %s1154 = scalar_lea.vmem %s391, 12
      %v1155 = vld [vmem:[%s1154] sm:$0xf]
      %v1156 = vpack.c.bf16 %v1151, %v1151
      %v1158 = vsel %vm481, %v1156, 0
      %v1161 = vsel %vm481, %v1153, 0
      %1163 = vmatprep.subr.bf16.mxu0 0
      %1164 = vmatpush1.bf16.xpose.msra.mxu0 %v1161
      %1165 = vmatprep.subr.bf16.mxu0 0
      %1166 = vmatpush1.bf16.xpose.msra.mxu0 0
      %1167 = vmatprep.subr.bf16.mxu0 0
      %1168 = vmatpush1.bf16.xpose.msra.mxu0 0
      %1169 = vmatprep.subr.bf16.mxu0 0
      %1170 = vmatpush1.bf16.xpose.msra.mxu0 0
      %1171 = vmatprep.subr.bf16.mxu0 0
      %1172 = vmatpush1.bf16.xpose.msra.mxu0 0
      %1173 = vmatprep.subr.bf16.mxu0 0
      %1174 = vmatpush1.bf16.xpose.msra.mxu0 0
      %1175 = vmatprep.subr.bf16.mxu0 0
      %1176 = vmatpush1.bf16.xpose.msra.mxu0 0
      %1177 = vmatprep.subr.bf16.mxu0 0
      %1178 = vmatpush1.bf16.xpose.msra.mxu0 0
      %1179 = vmatprep.subr.bf16.mxu0 0
      %1180 = vmatpush1.bf16.xpose.msra.mxu0 0
      %1181 = vmatprep.subr.bf16.mxu0 0
      %1182 = vmatpush1.bf16.xpose.msra.mxu0 0
      %1183 = vmatprep.subr.bf16.mxu0 0
      %1184 = vmatpush1.bf16.xpose.msra.mxu0 0
      %1185 = vmatprep.subr.bf16.mxu0 0
      %1186 = vmatpush1.bf16.xpose.msra.mxu0 0
      %1187 = vmatprep.subr.bf16.mxu0 0
      %1188 = vmatpush1.bf16.xpose.msra.mxu0 0
      %1189 = vmatprep.subr.bf16.mxu0 0
      %1190 = vmatpush1.bf16.xpose.msra.mxu0 0
      %1191 = vmatprep.subr.bf16.mxu0 0
      %1192 = vmatpush1.bf16.xpose.msra.mxu0 0
      %1193 = vmatprep.subr.bf16.mxu0 0
      %1194 = vmatpush1.bf16.xpose.msra.mxu0 0
      %1195 = vmatprep.mubr.bf16.mxu0 0
      %1196 = vmatmul.mubr.bf16.gmra.mrb[0].mxu0 %v1158
      %v1197 = vpop.f32.mrb[0].mxu0
      %v1198 = vadd.f32 0.0, %v1197
      %v1199 = vpop.f32.mrb[0].mxu0
      %v1200 = vpop.f32.mrb[0].mxu0
      %v1201 = vpop.f32.mrb[0].mxu0
      %1202 = vdwg.mxu0
      %v1203 = vsel %vm481, %v1198, -inf
      %1204 = vmax.xlane.f32.xlu0 %v1203
      %v1205 = vpop.xlane.xlu0 %1204
      %v1206 = vsub.f32 %v1198, %v1205
      %v1207 = vmul.f32 %v1206, 1.442695
      %v1208 = vpow.pop %v1207
      %v1209 = vsel %vm481, %v1208, 0.0
      %1210 = vadd.xlane.f32.xlu0 %v1209
      %v1211 = vpop.xlane.xlu0 %1210
      %v1212 = vrcp.pop %v1211
      %v1213 = vmul.f32 %v1208, %v1212
      %v1214 = vpack.c.bf16 %v1213, %v1213
      %v1216 = vsel %vm481, %v1214, 0
      %v1219 = vsel %vm543, %v1155, 0
      %1221 = vmatprep.subr.bf16.mxu0 0
      %1222 = vmatpush1.bf16.msra.mxu0 %v1219
      %1223 = vmatprep.subr.bf16.mxu0 0
      %1224 = vmatpush1.bf16.msra.mxu0 0
      %1225 = vmatprep.subr.bf16.mxu0 0
      %1226 = vmatpush1.bf16.msra.mxu0 0
      %1227 = vmatprep.subr.bf16.mxu0 0
      %1228 = vmatpush1.bf16.msra.mxu0 0
      %1229 = vmatprep.subr.bf16.mxu0 0
      %1230 = vmatpush1.bf16.msra.mxu0 0
      %1231 = vmatprep.subr.bf16.mxu0 0
      %1232 = vmatpush1.bf16.msra.mxu0 0
      %1233 = vmatprep.subr.bf16.mxu0 0
      %1234 = vmatpush1.bf16.msra.mxu0 0
      %1235 = vmatprep.subr.bf16.mxu0 0
      %1236 = vmatpush1.bf16.msra.mxu0 0
      %1237 = vmatprep.subr.bf16.mxu0 0
      %1238 = vmatpush1.bf16.msra.mxu0 0
      %1239 = vmatprep.subr.bf16.mxu0 0
      %1240 = vmatpush1.bf16.msra.mxu0 0
      %1241 = vmatprep.subr.bf16.mxu0 0
      %1242 = vmatpush1.bf16.msra.mxu0 0
      %1243 = vmatprep.subr.bf16.mxu0 0
      %1244 = vmatpush1.bf16.msra.mxu0 0
      %1245 = vmatprep.subr.bf16.mxu0 0
      %1246 = vmatpush1.bf16.msra.mxu0 0
      %1247 = vmatprep.subr.bf16.mxu0 0
      %1248 = vmatpush1.bf16.msra.mxu0 0
      %1249 = vmatprep.subr.bf16.mxu0 0
      %1250 = vmatpush1.bf16.msra.mxu0 0
      %1251 = vmatprep.subr.bf16.mxu0 0
      %1252 = vmatpush1.bf16.msra.mxu0 0
      %1253 = vmatprep.mubr.bf16.mxu0 0
      %1254 = vmatmul.mubr.bf16.gmra.mrb[0].mxu0 %v1216
      %v1255 = vpop.f32.mrb[0].mxu0
      %v1256 = vadd.f32 0.0, %v1255
      %v1257 = vpop.f32.mrb[0].mxu0
      %v1258 = vpop.f32.mrb[0].mxu0
      %v1259 = vpop.f32.mrb[0].mxu0
      %1260 = vdwg.mxu0
      %v1261 = vpack.c.bf16 %v1256, %v1256
      %s1262 = scalar_lea.vmem %s5, 12
      %v1263 = vld [vmem:[%s1262] sm:$0xf]
      %v1265 = vsel %vm481, %v1261, 0
      %v1268 = vsel %vm543, %v1263, 0
      %1270 = vmatprep.subr.bf16.mxu0 0
      %1271 = vmatpush1.bf16.msra.mxu0 %v1268
      %1272 = vmatprep.subr.bf16.mxu0 0
      %1273 = vmatpush1.bf16.msra.mxu0 0
      %1274 = vmatprep.subr.bf16.mxu0 0
      %1275 = vmatpush1.bf16.msra.mxu0 0
      %1276 = vmatprep.subr.bf16.mxu0 0
      %1277 = vmatpush1.bf16.msra.mxu0 0
      %1278 = vmatprep.subr.bf16.mxu0 0
      %1279 = vmatpush1.bf16.msra.mxu0 0
      %1280 = vmatprep.subr.bf16.mxu0 0
      %1281 = vmatpush1.bf16.msra.mxu0 0
      %1282 = vmatprep.subr.bf16.mxu0 0
      %1283 = vmatpush1.bf16.msra.mxu0 0
      %1284 = vmatprep.subr.bf16.mxu0 0
      %1285 = vmatpush1.bf16.msra.mxu0 0
      %1286 = vmatprep.subr.bf16.mxu0 0
      %1287 = vmatpush1.bf16.msra.mxu0 0
      %1288 = vmatprep.subr.bf16.mxu0 0
      %1289 = vmatpush1.bf16.msra.mxu0 0
      %1290 = vmatprep.subr.bf16.mxu0 0
      %1291 = vmatpush1.bf16.msra.mxu0 0
      %1292 = vmatprep.subr.bf16.mxu0 0
      %1293 = vmatpush1.bf16.msra.mxu0 0
      %1294 = vmatprep.subr.bf16.mxu0 0
      %1295 = vmatpush1.bf16.msra.mxu0 0
      %1296 = vmatprep.subr.bf16.mxu0 0
      %1297 = vmatpush1.bf16.msra.mxu0 0
      %1298 = vmatprep.subr.bf16.mxu0 0
      %1299 = vmatpush1.bf16.msra.mxu0 0
      %1300 = vmatprep.subr.bf16.mxu0 0
      %1301 = vmatpush1.bf16.msra.mxu0 0
      %1302 = vmatprep.mubr.bf16.mxu0 0
      %1303 = vmatmul.mubr.bf16.gmra.mrb[0].mxu0 %v1265
      %v1304 = vpop.f32.mrb[0].mxu0
      %v1305 = vadd.f32 0.0, %v1304
      %v1306 = vpop.f32.mrb[0].mxu0
      %v1307 = vpop.f32.mrb[0].mxu0
      %v1308 = vpop.f32.mrb[0].mxu0
      %1309 = vdwg.mxu0
      %v1310 = vadd.f32 %v1085, %v1305
      %v1311 = vld [vmem:[%s7] sm:$0x1]
      %v1312 = vld [vmem:[%s8] sm:$0x1]
      %v1313 = vsel %vm433, %v1310, 0.0
      %1314 = vadd.xlane.f32.xlu0 %v1313
      %v1315 = vpop.xlane.xlu0 %1314
      %v1316 = vrcp.pop 32.0
      %v1317 = vmul.f32 %v1315, %v1316
      %v1318 = vsub.f32 %v1310, %v1317
      %v1319 = vmul.f32 %v1318, %v1318
      %v1320 = vsel %vm433, %v1319, 0.0
      %1321 = vadd.xlane.f32.xlu0 %v1320
      %v1322 = vpop.xlane.xlu0 %1321
      %v1323 = vmul.f32 %v1322, %v1316
      %v1324 = vadd.f32 %v1323, 1e-05
      %v1325 = vrsqrt.pop %v1324
      %v1326 = vmul.f32 %v1318, %v1325
      %v1328 = vlaneseq
      %v1329 = vshrl.u32 %v1328, 7
      %v1330 = vsub.s32 0, %v1329
      %v1331 = vrot.slane %v1311, %v1330
      %v1333 = vmul.f32 %v1326, %v1331
      %v1335 = vlaneseq
      %v1336 = vshrl.u32 %v1335, 7
      %v1337 = vsub.s32 0, %v1336
      %v1338 = vrot.slane %v1312, %v1337
      %v1340 = vadd.f32 %v1333, %v1338
      %1341 = vst.msk [vmem:[%s398] sm:$0xff] %vm433, %v1340
      %p1342 = scmp.lt.s32.totalorder %s24, 1
      %s1343 = scalar_select %p1342, %s24, 1
      %p1344 = scmp.lt.s32.totalorder %s25, 0
      %s1345 = scalar_select %p1344, %s25, 0
      %s1346 = sadd.s32 %s1345, %s1343
      %s1347 = smul.addr %s1346, 8
      %s1348 = scalar_lea.vmem %s9, %s1347
      // Predicated region
      $region57: #{decoder_layer.8} parent=55 // pred_check
        %p1349 = pneg %p258
      $region58: #{decoder_layer.8} parent=55 // pred_check_branch
        %1351 = sbr.rel (%p1349) target = $region60
      $region59: #{decoder_layer.8} parent=55 // pred_region
        _
      $region60: #{decoder_layer.8} parent=55 // pred_fallthru
        _
    $region56: #{decoder_layer.8} parent=5 // pred_fallthru
      _
    %p1352 = scmp.le.s32.totalorder 2, %s15
    // Predicated region
    $region61: #{decoder_layer.8} parent=5 // pred_check
      %p1353 = pneg %p1352
    $region62: #{decoder_layer.8} parent=5 // pred_check_branch
      %1355 = sbr.rel (%p1353) target = $region64
    $region63: #{decoder_layer.8} parent=5 // pred_region
      %s1356 = ssub.s32 %s15, 2
      // Predicated region
      $region65: #{decoder_layer.8} parent=63 // pred_check
        %p1357 = pneg %p264
      $region66: #{decoder_layer.8} parent=63 // pred_check_branch
        %1359 = sbr.rel (%p1357) target = $region68
      $region67: #{decoder_layer.8} parent=63 // pred_region
        %p1360 = scmp.lt.s32.totalorder %s26, 1
        %s1361 = scalar_select %p1360, %s26, 1
        %p1362 = scmp.lt.s32.totalorder %s27, 0
        %s1363 = scalar_select %p1362, %s27, 0
        %s1364 = sadd.s32 %s1363, %s1361
        %s1365 = smul.addr %s1364, 8
        %s1366 = scalar_lea.vmem %s9, %s1365
      $region68: #{decoder_layer.8} parent=63 // pred_fallthru
        _
    $region64: #{decoder_layer.8} parent=5 // pred_fallthru
      _
  $region6: #{decoder_layer.8} parent=0 // loop_footer
    %s19 = sadd.s32 1, %s15
  $region7: #{decoder_layer.8} parent=0 // loop_footer_branch
    %14 = sbr.rel target = $region3
  $region8: #{decoder_layer.8} parent=0 // loop_exit
    _

// kernel: decoder_layer.6
$region0: #{decoder_layer.6}
  #allocation0 [shape = 'u32[]', space=smem, size = 0x4, offset = 0x4, fixed_abs, tag = 'smem constant byte address 0x4 - core index']
  #allocation1 [shape = 'u32[144,128]{1,0:T(1,128)}', space=vmem, size = 0x12000, scoped, tag = 'internal scratch']
  %s0 = inlined_call_operand.vmem [shape: f32[2,8,32], index: 0, kind: input, shape index: {}]
  %s1 = inlined_call_operand.vmem [shape: bf16[2,4,8,8], index: 1, kind: input, shape index: {}]
  %s2 = inlined_call_operand.vmem [shape: bf16[2,4,8,8], index: 2, kind: input, shape index: {}]
  %s3 = inlined_call_operand.vmem [shape: bf16[4,32,8], index: 3, kind: input, shape index: {}]
  %s4 = inlined_call_operand.vmem [shape: f32[4,1,8], index: 4, kind: input, shape index: {}]
  %s5 = inlined_call_operand.vmem [shape: bf16[4,8,32], index: 5, kind: input, shape index: {}]
  %s6 = inlined_call_operand.vmem [shape: f32[1,32], index: 6, kind: input, shape index: {}]
  %s7 = inlined_call_operand.vmem [shape: f32[1,32], index: 7, kind: input, shape index: {}]
  %s8 = inlined_call_operand.vmem [shape: f32[1,32], index: 8, kind: input, shape index: {}]
  %s9 = inlined_call_operand.vmem [shape: f32[2,8,32], index: 9, kind: output, shape index: {}]
  %s10 = sld [smem:[#allocation0]]
  $region69: #{decoder_layer.6} parent=0
    _
  %s12 = ssub.s32 1, %s10
  %s13 = scalar_select 0, %s12, %s10
  loop: start=0, step=1, limit=4
  $region2: #{decoder_layer.6} parent=0 // loop_pre_header
    _
  $region3: #{decoder_layer.6} parent=0 // loop_header
    %s15 = sphi 0, %s19
    %p16 = scmp.ge.s32.totalorder %s15, 4
    %s22 = sphi 0, %s34
    %s23 = sphi 0, %s30
    %s24 = sphi 0, %s22
    %s25 = sphi 0, %s23
    %s26 = sphi 0, %s24
    %s27 = sphi 0, %s25
    %s39 = sphi 0, %s41
    %s42 = sphi 0, %s39
    %s43 = sphi 0, %s42
    %s59 = sphi 0, %s43
    %s65 = sphi 0, %s67
    %s68 = sphi 0, %s65
    %s69 = sphi 0, %s68
    %s85 = sphi 0, %s69
    %s91 = sphi 0, %s93
    %s94 = sphi 0, %s91
    %s95 = sphi 0, %s94
    %s111 = sphi 0, %s95
    %s115 = sphi 0, %s115
    %s117 = sphi 0, %s115
    %s118 = sphi 0, %s117
    %s132 = sphi 0, %s118
    %s136 = sphi 0, %s136
    %s138 = sphi 0, %s136
    %s139 = sphi 0, %s138
    %s153 = sphi 0, %s139
    %s157 = sphi 0, %s157
    %s159 = sphi 0, %s157
    %s160 = sphi 0, %s159
    %s174 = sphi 0, %s160
    %s178 = sphi 0, %s178
    %s180 = sphi 0, %s178
    %s181 = sphi 0, %s180
    %s195 = sphi 0, %s181
    %s199 = sphi 0, %s199
    %s201 = sphi 0, %s199
    %s202 = sphi 0, %s201
    %s216 = sphi 0, %s202
    %s220 = sphi 0, %s220
    %s222 = sphi 0, %s220
    %s223 = sphi 0, %s222
    %s237 = sphi 0, %s223
    %s245 = sphi 0, %s247
    %s248 = sphi 0, %s245
    %s249 = sphi 0, %s248
    %s265 = sphi 0, %s249
  $region4: #{decoder_layer.6} parent=0 // loop_header_branch
    %18 = sbr.rel (%p16) target = $region8
  $region5: #{decoder_layer.6} parent=0 // loop_body
    %s20 = ssub.s32 %s15, 1
    %s21 = ssub.s32 %s15, 2
    %s28 = sadd.s32 1, %s23
    %p29 = scmp.ge.s32.totalorder %s28, 1
    %s30 = scalar_select %p29, 0, %s28
    %s31 = sadd.s32 1, %s22
    %s32 = scalar_select %p29, %s31, %s22
    %p33 = scmp.ge.s32.totalorder %s32, 2
    %s34 = scalar_select %p33, 0, %s32
    %s35 = ssub.s32 %s22, %s34
    %s36 = ssub.s32 %s23, %s30
    %s37 = sor.u32 %s35, %s36
    %p38 = scmp.eq.s32.totalorder %s37, 0
    %s40 = sadd.s32 %s39, 1
    %s41 = scalar_select %p38, %s39, %s40
    %p44 = pneg %p38
    %p45 = scmp.eq.s32.totalorder %s15, 1
    %p46 = por %p44, %p45
    %p47 = scmp.ne.s32.totalorder %s39, %s42
    %p48 = scmp.eq.s32.totalorder %s15, 0
    %p49 = por %p47, %p48
    %p50 = scmp.ne.s32.totalorder %s39, %s42
    %p51 = scmp.eq.s32.totalorder %s20, 1
    %p52 = por %p50, %p51
    %p53 = scmp.ne.s32.totalorder %s42, %s43
    %p54 = scmp.eq.s32.totalorder %s20, 0
    %p55 = por %p53, %p54
    %p56 = scmp.ne.s32.totalorder %s42, %s43
    %p57 = scmp.eq.s32.totalorder %s21, 1
    %p58 = por %p56, %p57
    %p60 = scmp.ne.s32.totalorder %s43, %s59
    %p61 = scmp.eq.s32.totalorder %s21, 0
    %p62 = por %p60, %p61
    %s63 = ssub.s32 %s22, %s34
    %p64 = scmp.eq.s32.totalorder %s63, 0
    %s66 = sadd.s32 %s65, 1
    %s67 = scalar_select %p64, %s65, %s66
    %p70 = pneg %p64
    %p71 = scmp.eq.s32.totalorder %s15, 1
    %p72 = por %p70, %p71
    %p73 = scmp.ne.s32.totalorder %s65, %s68
    %p74 = scmp.eq.s32.totalorder %s15, 0
    %p75 = por %p73, %p74
    %p76 = scmp.ne.s32.totalorder %s65, %s68
    %p77 = scmp.eq.s32.totalorder %s20, 1
    %p78 = por %p76, %p77
    %p79 = scmp.ne.s32.totalorder %s68, %s69
    %p80 = scmp.eq.s32.totalorder %s20, 0
    %p81 = por %p79, %p80
    %p82 = scmp.ne.s32.totalorder %s68, %s69
    %p83 = scmp.eq.s32.totalorder %s21, 1
    %p84 = por %p82, %p83
    %p86 = scmp.ne.s32.totalorder %s69, %s85
    %p87 = scmp.eq.s32.totalorder %s21, 0
    %p88 = por %p86, %p87
    %s89 = ssub.s32 %s22, %s34
    %p90 = scmp.eq.s32.totalorder %s89, 0
    %s92 = sadd.s32 %s91, 1
    %s93 = scalar_select %p90, %s91, %s92
    %p96 = pneg %p90
    %p97 = scmp.eq.s32.totalorder %s15, 1
    %p98 = por %p96, %p97
    %p99 = scmp.ne.s32.totalorder %s91, %s94
    %p100 = scmp.eq.s32.totalorder %s15, 0
    %p101 = por %p99, %p100
    %p102 = scmp.ne.s32.totalorder %s91, %s94
    %p103 = scmp.eq.s32.totalorder %s20, 1
    %p104 = por %p102, %p103
    %p105 = scmp.ne.s32.totalorder %s94, %s95
    %p106 = scmp.eq.s32.totalorder %s20, 0
    %p107 = por %p105, %p106
    %p108 = scmp.ne.s32.totalorder %s94, %s95
    %p109 = scmp.eq.s32.totalorder %s21, 1
    %p110 = por %p108, %p109
    %p112 = scmp.ne.s32.totalorder %s95, %s111
    %p113 = scmp.eq.s32.totalorder %s21, 0
    %p114 = por %p112, %p113
    %s116 = sadd.s32 %s115, 1
    %p119 = scmp.eq.s32.totalorder %s15, 1
    %p120 = scmp.ne.s32.totalorder %s115, %s117
    %p121 = scmp.eq.s32.totalorder %s15, 0
    %p122 = por %p120, %p121
    %p123 = scmp.ne.s32.totalorder %s115, %s117
    %p124 = scmp.eq.s32.totalorder %s20, 1
    %p125 = por %p123, %p124
    %p126 = scmp.ne.s32.totalorder %s117, %s118
    %p127 = scmp.eq.s32.totalorder %s20, 0
    %p128 = por %p126, %p127
    %p129 = scmp.ne.s32.totalorder %s117, %s118
    %p130 = scmp.eq.s32.totalorder %s21, 1
    %p131 = por %p129, %p130
    %p133 = scmp.ne.s32.totalorder %s118, %s132
    %p134 = scmp.eq.s32.totalorder %s21, 0
    %p135 = por %p133, %p134
    %s137 = sadd.s32 %s136, 1
    %p140 = scmp.eq.s32.totalorder %s15, 1
    %p141 = scmp.ne.s32.totalorder %s136, %s138
    %p142 = scmp.eq.s32.totalorder %s15, 0
    %p143 = por %p141, %p142
    %p144 = scmp.ne.s32.totalorder %s136, %s138
    %p145 = scmp.eq.s32.totalorder %s20, 1
    %p146 = por %p144, %p145
    %p147 = scmp.ne.s32.totalorder %s138, %s139
    %p148 = scmp.eq.s32.totalorder %s20, 0
    %p149 = por %p147, %p148
    %p150 = scmp.ne.s32.totalorder %s138, %s139
    %p151 = scmp.eq.s32.totalorder %s21, 1
    %p152 = por %p150, %p151
    %p154 = scmp.ne.s32.totalorder %s139, %s153
    %p155 = scmp.eq.s32.totalorder %s21, 0
    %p156 = por %p154, %p155
    %s158 = sadd.s32 %s157, 1
    %p161 = scmp.eq.s32.totalorder %s15, 1
    %p162 = scmp.ne.s32.totalorder %s157, %s159
    %p163 = scmp.eq.s32.totalorder %s15, 0
    %p164 = por %p162, %p163
    %p165 = scmp.ne.s32.totalorder %s157, %s159
    %p166 = scmp.eq.s32.totalorder %s20, 1
    %p167 = por %p165, %p166
    %p168 = scmp.ne.s32.totalorder %s159, %s160
    %p169 = scmp.eq.s32.totalorder %s20, 0
    %p170 = por %p168, %p169
    %p171 = scmp.ne.s32.totalorder %s159, %s160
    %p172 = scmp.eq.s32.totalorder %s21, 1
    %p173 = por %p171, %p172
    %p175 = scmp.ne.s32.totalorder %s160, %s174
    %p176 = scmp.eq.s32.totalorder %s21, 0
    %p177 = por %p175, %p176
    %s179 = sadd.s32 %s178, 1
    %p182 = scmp.eq.s32.totalorder %s15, 1
    %p183 = scmp.ne.s32.totalorder %s178, %s180
    %p184 = scmp.eq.s32.totalorder %s15, 0
    %p185 = por %p183, %p184
    %p186 = scmp.ne.s32.totalorder %s178, %s180
    %p187 = scmp.eq.s32.totalorder %s20, 1
    %p188 = por %p186, %p187
    %p189 = scmp.ne.s32.totalorder %s180, %s181
    %p190 = scmp.eq.s32.totalorder %s20, 0
    %p191 = por %p189, %p190
    %p192 = scmp.ne.s32.totalorder %s180, %s181
    %p193 = scmp.eq.s32.totalorder %s21, 1
    %p194 = por %p192, %p193
    %p196 = scmp.ne.s32.totalorder %s181, %s195
    %p197 = scmp.eq.s32.totalorder %s21, 0
    %p198 = por %p196, %p197
    %s200 = sadd.s32 %s199, 1
    %p203 = scmp.eq.s32.totalorder %s15, 1
    %p204 = scmp.ne.s32.totalorder %s199, %s201
    %p205 = scmp.eq.s32.totalorder %s15, 0
    %p206 = por %p204, %p205
    %p207 = scmp.ne.s32.totalorder %s199, %s201
    %p208 = scmp.eq.s32.totalorder %s20, 1
    %p209 = por %p207, %p208
    %p210 = scmp.ne.s32.totalorder %s201, %s202
    %p211 = scmp.eq.s32.totalorder %s20, 0
    %p212 = por %p210, %p211
    %p213 = scmp.ne.s32.totalorder %s201, %s202
    %p214 = scmp.eq.s32.totalorder %s21, 1
    %p215 = por %p213, %p214
    %p217 = scmp.ne.s32.totalorder %s202, %s216
    %p218 = scmp.eq.s32.totalorder %s21, 0
    %p219 = por %p217, %p218
    %s221 = sadd.s32 %s220, 1
    %p224 = scmp.eq.s32.totalorder %s15, 1
    %p225 = scmp.ne.s32.totalorder %s220, %s222
    %p226 = scmp.eq.s32.totalorder %s15, 0
    %p227 = por %p225, %p226
    %p228 = scmp.ne.s32.totalorder %s220, %s222
    %p229 = scmp.eq.s32.totalorder %s20, 1
    %p230 = por %p228, %p229
    %p231 = scmp.ne.s32.totalorder %s222, %s223
    %p232 = scmp.eq.s32.totalorder %s20, 0
    %p233 = por %p231, %p232
    %p234 = scmp.ne.s32.totalorder %s222, %s223
    %p235 = scmp.eq.s32.totalorder %s21, 1
    %p236 = por %p234, %p235
    %p238 = scmp.ne.s32.totalorder %s223, %s237
    %p239 = scmp.eq.s32.totalorder %s21, 0
    %p240 = por %p238, %p239
    %s241 = ssub.s32 %s22, %s34
    %s242 = ssub.s32 %s23, %s30
    %s243 = sor.u32 %s241, %s242
    %p244 = scmp.eq.s32.totalorder %s243, 0
    %s246 = sadd.s32 %s245, 1
    %s247 = scalar_select %p244, %s245, %s246
    %p250 = pneg %p244
    %p251 = scmp.eq.s32.totalorder %s15, 1
    %p252 = por %p250, %p251
    %p253 = scmp.ne.s32.totalorder %s245, %s248
    %p254 = scmp.eq.s32.totalorder %s15, 0
    %p255 = por %p253, %p254
    %p256 = scmp.ne.s32.totalorder %s245, %s248
    %p257 = scmp.eq.s32.totalorder %s20, 1
    %p258 = por %p256, %p257
    %p259 = scmp.ne.s32.totalorder %s248, %s249
    %p260 = scmp.eq.s32.totalorder %s20, 0
    %p261 = por %p259, %p260
    %p262 = scmp.ne.s32.totalorder %s248, %s249
    %p263 = scmp.eq.s32.totalorder %s21, 1
    %p264 = por %p262, %p263
    %p266 = scmp.ne.s32.totalorder %s249, %s265
    %p267 = scmp.eq.s32.totalorder %s21, 0
    %p268 = por %p266, %p267
    %p269 = scmp.le.s32.totalorder 1, %s15
    %p270 = scmp.lt.s32.totalorder %s15, 3
    %p271 = pnand %p269, %p270
    %p272 = pneg %p271
    // Predicated region
    $region9: #{decoder_layer.6} parent=5 // pred_check
      _
    $region10: #{decoder_layer.6} parent=5 // pred_check_branch
      %274 = sbr.rel (%p271) target = $region12
    $region11: #{decoder_layer.6} parent=5 // pred_region
      %s275 = ssub.s32 %s15, 1
      // Predicated region
      $region13: #{decoder_layer.6} parent=11 // pred_check
        %p276 = pneg %p128
      $region14: #{decoder_layer.6} parent=11 // pred_check_branch
        %278 = sbr.rel (%p276) target = $region16
      $region15: #{decoder_layer.6} parent=11 // pred_region
        _
      $region16: #{decoder_layer.6} parent=11 // pred_fallthru
        _
      // Predicated region
      $region17: #{decoder_layer.6} parent=11 // pred_check
        %p279 = pneg %p149
      $region18: #{decoder_layer.6} parent=11 // pred_check_branch
        %281 = sbr.rel (%p279) target = $region20
      $region19: #{decoder_layer.6} parent=11 // pred_region
        _
      $region20: #{decoder_layer.6} parent=11 // pred_fallthru
        _
      // Predicated region
      $region21: #{decoder_layer.6} parent=11 // pred_check
        %p282 = pneg %p170
      $region22: #{decoder_layer.6} parent=11 // pred_check_branch
        %284 = sbr.rel (%p282) target = $region24
      $region23: #{decoder_layer.6} parent=11 // pred_region
        _
      $region24: #{decoder_layer.6} parent=11 // pred_fallthru
        _
      // Predicated region
      $region25: #{decoder_layer.6} parent=11 // pred_check
        %p285 = pneg %p191
      $region26: #{decoder_layer.6} parent=11 // pred_check_branch
        %287 = sbr.rel (%p285) target = $region28
      $region27: #{decoder_layer.6} parent=11 // pred_region
        _
      $region28: #{decoder_layer.6} parent=11 // pred_fallthru
        _
      // Predicated region
      $region29: #{decoder_layer.6} parent=11 // pred_check
        %p288 = pneg %p212
      $region30: #{decoder_layer.6} parent=11 // pred_check_branch
        %290 = sbr.rel (%p288) target = $region32
      $region31: #{decoder_layer.6} parent=11 // pred_region
        _
      $region32: #{decoder_layer.6} parent=11 // pred_fallthru
        _
      // Predicated region
      $region33: #{decoder_layer.6} parent=11 // pred_check
        %p291 = pneg %p233
      $region34: #{decoder_layer.6} parent=11 // pred_check_branch
        %293 = sbr.rel (%p291) target = $region36
      $region35: #{decoder_layer.6} parent=11 // pred_region
        _
      $region36: #{decoder_layer.6} parent=11 // pred_fallthru
        _
    $region12: #{decoder_layer.6} parent=5 // pred_fallthru
      _
    %p294 = scmp.lt.s32.totalorder %s15, 2
    // Predicated region
    $region37: #{decoder_layer.6} parent=5 // pred_check
      %p295 = pneg %p294
    $region38: #{decoder_layer.6} parent=5 // pred_check_branch
      %297 = sbr.rel (%p295) target = $region40
    $region39: #{decoder_layer.6} parent=5 // pred_region
      // Predicated region
      $region41: #{decoder_layer.6} parent=39 // pred_check
        %p298 = pneg %p49
      $region42: #{decoder_layer.6} parent=39 // pred_check_branch
        %300 = sbr.rel (%p298) target = $region44
      $region43: #{decoder_layer.6} parent=39 // pred_region
        %p301 = scmp.lt.s32.totalorder %s22, 1
        %s302 = scalar_select %p301, %s22, 1
        %p303 = scmp.lt.s32.totalorder %s23, 0
        %s304 = scalar_select %p303, %s23, 0
        %s305 = sadd.s32 %s304, %s302
        %s306 = smul.addr %s305, 8
        %s307 = scalar_lea.vmem %s0, %s306
      $region44: #{decoder_layer.6} parent=39 // pred_fallthru
        _
      // Predicated region
      $region45: #{decoder_layer.6} parent=39 // pred_check
        %p308 = pneg %p75
      $region46: #{decoder_layer.6} parent=39 // pred_check_branch
        %310 = sbr.rel (%p308) target = $region48
      $region47: #{decoder_layer.6} parent=39 // pred_region
        %p311 = scmp.lt.s32.totalorder %s22, 1
        %s312 = scalar_select %p311, %s22, 1
        %s313 = smul.addr %s312, 4
        %s314 = smul.addr %s313, 4
        %s315 = scalar_lea.vmem %s1, %s314
      $region48: #{decoder_layer.6} parent=39 // pred_fallthru
        _
      // Predicated region
      $region49: #{decoder_layer.6} parent=39 // pred_check
        %p316 = pneg %p101
      $region50: #{decoder_layer.6} parent=39 // pred_check_branch
        %318 = sbr.rel (%p316) target = $region52
      $region51: #{decoder_layer.6} parent=39 // pred_region
        %p319 = scmp.lt.s32.totalorder %s22, 1
        %s320 = scalar_select %p319, %s22, 1
        %s321 = smul.addr %s320, 4
        %s322 = smul.addr %s321, 4
        %s323 = scalar_lea.vmem %s2, %s322
      $region52: #{decoder_layer.6} parent=39 // pred_fallthru
        _
    $region40: #{decoder_layer.6} parent=5 // pred_fallthru
      _
    %p324 = scmp.le.s32.totalorder 1, %s15
    %p325 = scmp.lt.s32.totalorder %s15, 3
    %p326 = pnand %p324, %p325
    %p327 = pneg %p326
    // Predicated region
    $region53: #{decoder_layer.6} parent=5 // pred_check
      _
    $region54: #{decoder_layer.6} parent=5 // pred_check_branch
      %329 = sbr.rel (%p326) target = $region56
    $region55: #{decoder_layer.6} parent=5 // pred_region
      %s330 = ssub.s32 %s15, 1
      %p331 = scmp.lt.s32.totalorder %s24, 1
      %s332 = scalar_select %p331, %s24, 1
      %p333 = scmp.lt.s32.totalorder %s25, 0
      %s334 = scalar_select %p333, %s25, 0
      %s335 = sadd.s32 %s334, %s332
      %s336 = smul.addr %s335, 8
      %s337 = scalar_lea.vmem %s0, %s336
      %p338 = pneg %p55
      %p339 = pneg %p52
      %p340 = scmp.lt.s32.totalorder %s24, 1
      %s341 = scalar_select %p340, %s24, 1
      %s342 = smul.addr %s341, 4
      %s343 = smul.addr %s342, 4
      %s344 = scalar_lea.vmem %s1, %s343
      %p345 = pneg %p81
      %p346 = pneg %p78
      %p347 = scmp.lt.s32.totalorder %s24, 1
      %s348 = scalar_select %p347, %s24, 1
      %s349 = smul.addr %s348, 4
      %s350 = smul.addr %s349, 4
      %s351 = scalar_lea.vmem %s2, %s350
      %p352 = pneg %p107
      %p353 = pneg %p104
      %p354 = pneg %p128
      %p355 = pneg %p125
      %p356 = pneg %p149
      %p357 = pneg %p146
      %p358 = pneg %p170
      %p359 = pneg %p167
      %p360 = pneg %p191
      %p361 = pneg %p188
      %p362 = pneg %p212
      %p363 = pneg %p209
      %p364 = pneg %p233
      %p365 = pneg %p230
      %p366 = pneg %p261
      %p367 = pneg %p258
      %p368 = scmp.lt.s32.totalorder %s24, 1
      %s369 = scalar_select %p368, %s24, 1
      %p370 = scmp.lt.s32.totalorder %s25, 0
      %s371 = scalar_select %p370, %s25, 0
      %s372 = sadd.s32 %s371, %s369
      %s373 = smul.addr %s372, 8
      %s374 = scalar_lea.vmem %s9, %s373
      %p375 = scmp.lt.s32.totalorder %s24, 1
      %s376 = scalar_select %p375, %s24, 1
      %p377 = scmp.lt.s32.totalorder %s25, 0
      %s378 = scalar_select %p377, %s25, 0
      %s379 = sadd.s32 %s378, %s376
      %s380 = smul.addr %s379, 8
      %s381 = scalar_lea.vmem %s0, %s380
      %p382 = scmp.lt.s32.totalorder %s24, 1
      %s383 = scalar_select %p382, %s24, 1
      %s384 = smul.addr %s383, 4
      %s385 = smul.addr %s384, 4
      %s386 = scalar_lea.vmem %s1, %s385
      %p387 = scmp.lt.s32.totalorder %s24, 1
      %s388 = scalar_select %p387, %s24, 1
      %s389 = smul.addr %s388, 4
      %s390 = smul.addr %s389, 4
      %s391 = scalar_lea.vmem %s2, %s390
      %p392 = scmp.lt.s32.totalorder %s24, 1
      %s393 = scalar_select %p392, %s24, 1
      %p394 = scmp.lt.s32.totalorder %s25, 0
      %s395 = scalar_select %p394, %s25, 0
      %s396 = sadd.s32 %s395, %s393
      %s397 = smul.addr %s396, 8
      %s398 = scalar_lea.vmem %s9, %s397
      %v400 = vld [vmem:[%s381] sm:$0xff]
      %v401 = vpack.c.bf16 %v400, %v400
      %v402 = vlaneseq
      %v403 = vshrl.u32 %v402, 7
      %s404 = smul.u32 %s25, 8
      %v405 = vstv %s404
      %v406 = vadd.s32 %v403, %v405
      %v407 = vlaneseq
      %v408 = vand.u32 %v407, 127
      %vm409 = vcmp.le.s32.totalorder %v408, %v406
      %v410 = vsel %vm409, 0.0, -1e+30
      %v411 = vld [vmem:[%s6] sm:$0x1]
      %v413 = vlaneseq
      %v414 = vshrl.u32 %v413, 7
      %v415 = vsub.s32 0, %v414
      %v416 = vrot.slane %v411, %v415
      %v418 = vadd.f32 %v400, %v416
      %v419 = vld [vmem:[%s3] sm:$0xf]
      %v420 = vld [vmem:[%s3 + $0x4] sm:$0xf]
      %v421 = vld [vmem:[%s3 + $0x8] sm:$0xf]
      %v422 = vld [vmem:[%s3 + $0xc] sm:$0xf]
      %v423 = vld [vmem:[%s4] sm:$0x1]
      %v425 = vlaneseq
      %v426 = vshrl.u32 %v425, 7
      %v427 = vsub.s32 0, %v426
      %v428 = vrot.slane %v423, %v427
      %v434 = vunpack.c.l.b16 %v419
      %v435 = vunpack.c.l.b16 %v420
      %v436 = vunpack.c.l.b16 %v421
      %v437 = vunpack.c.l.b16 %v422
      %v438 = vpack.c.b16 %v435, %v434
      %v439 = vpack.c.b16 %v437, %v436
      %vm442 = vcmask 261120
      %v444 = vsel %vm442, %v401, 0
      %446 = vmatprep.subr.bf16.mxu0 0
      %447 = vmatpush1.bf16.msra.mxu0 %v438
      %448 = vmatprep.subr.bf16.mxu0 0
      %449 = vmatpush1.bf16.msra.mxu0 %v439
      %450 = vmatprep.subr.bf16.mxu0 0
      %451 = vmatpush1.bf16.msra.mxu0 0
      %452 = vmatprep.subr.bf16.mxu0 0
      %453 = vmatpush1.bf16.msra.mxu0 0
      %454 = vmatprep.subr.bf16.mxu0 0
      %455 = vmatpush1.bf16.msra.mxu0 0
      %456 = vmatprep.subr.bf16.mxu0 0
      %457 = vmatpush1.bf16.msra.mxu0 0
      %458 = vmatprep.subr.bf16.mxu0 0
      %459 = vmatpush1.bf16.msra.mxu0 0
      %460 = vmatprep.subr.bf16.mxu0 0
      %461 = vmatpush1.bf16.msra.mxu0 0
      %462 = vmatprep.subr.bf16.mxu0 0
      %463 = vmatpush1.bf16.msra.mxu0 0
      %464 = vmatprep.subr.bf16.mxu0 0
      %465 = vmatpush1.bf16.msra.mxu0 0
      %466 = vmatprep.subr.bf16.mxu0 0
      %467 = vmatpush1.bf16.msra.mxu0 0
      %468 = vmatprep.subr.bf16.mxu0 0
      %469 = vmatpush1.bf16.msra.mxu0 0
      %470 = vmatprep.subr.bf16.mxu0 0
      %471 = vmatpush1.bf16.msra.mxu0 0
      %472 = vmatprep.subr.bf16.mxu0 0
      %473 = vmatpush1.bf16.msra.mxu0 0
      %474 = vmatprep.subr.bf16.mxu0 0
      %475 = vmatpush1.bf16.msra.mxu0 0
      %476 = vmatprep.subr.bf16.mxu0 0
      %477 = vmatpush1.bf16.msra.mxu0 0
      %478 = vmatprep.mubr.bf16.mxu0 0
      %479 = vmatmul.mubr.bf16.gmra.mrb[0].mxu0 %v444
      %v480 = vpop.f32.mrb[0].mxu0
      %v481 = vadd.f32 %v428, %v480
      %v482 = vpop.f32.mrb[0].mxu0
      %v483 = vpop.f32.mrb[0].mxu0
      %v484 = vpop.f32.mrb[0].mxu0
      %485 = vdwg.mxu0
      %v486 = vmul.f32 %v481, 0.35355338
      %v487 = vld [vmem:[%s386] sm:$0xf]
      %v488 = vld [vmem:[%s391] sm:$0xf]
      %v489 = vpack.c.bf16 %v486, %v486
      %vm490 = vcmask 64512
      %v492 = vsel %vm490, %v489, 0
      %v495 = vsel %vm490, %v487, 0
      %497 = vmatprep.subr.bf16.mxu0 0
      %498 = vmatpush1.bf16.xpose.msra.mxu0 %v495
      %499 = vmatprep.subr.bf16.mxu0 0
      %500 = vmatpush1.bf16.xpose.msra.mxu0 0
      %501 = vmatprep.subr.bf16.mxu0 0
      %502 = vmatpush1.bf16.xpose.msra.mxu0 0
      %503 = vmatprep.subr.bf16.mxu0 0
      %504 = vmatpush1.bf16.xpose.msra.mxu0 0
      %505 = vmatprep.subr.bf16.mxu0 0
      %506 = vmatpush1.bf16.xpose.msra.mxu0 0
      %507 = vmatprep.subr.bf16.mxu0 0
      %508 = vmatpush1.bf16.xpose.msra.mxu0 0
      %509 = vmatprep.subr.bf16.mxu0 0
      %510 = vmatpush1.bf16.xpose.msra.mxu0 0
      %511 = vmatprep.subr.bf16.mxu0 0
      %512 = vmatpush1.bf16.xpose.msra.mxu0 0
      %513 = vmatprep.subr.bf16.mxu0 0
      %514 = vmatpush1.bf16.xpose.msra.mxu0 0
      %515 = vmatprep.subr.bf16.mxu0 0
      %516 = vmatpush1.bf16.xpose.msra.mxu0 0
      %517 = vmatprep.subr.bf16.mxu0 0
      %518 = vmatpush1.bf16.xpose.msra.mxu0 0
      %519 = vmatprep.subr.bf16.mxu0 0
      %520 = vmatpush1.bf16.xpose.msra.mxu0 0
      %521 = vmatprep.subr.bf16.mxu0 0
      %522 = vmatpush1.bf16.xpose.msra.mxu0 0
      %523 = vmatprep.subr.bf16.mxu0 0
      %524 = vmatpush1.bf16.xpose.msra.mxu0 0
      %525 = vmatprep.subr.bf16.mxu0 0
      %526 = vmatpush1.bf16.xpose.msra.mxu0 0
      %527 = vmatprep.subr.bf16.mxu0 0
      %528 = vmatpush1.bf16.xpose.msra.mxu0 0
      %529 = vmatprep.mubr.bf16.mxu0 0
      %530 = vmatmul.mubr.bf16.gmra.mrb[0].mxu0 %v492
      %v531 = vpop.f32.mrb[0].mxu0
      %v532 = vadd.f32 %v410, %v531
      %v533 = vpop.f32.mrb[0].mxu0
      %v534 = vpop.f32.mrb[0].mxu0
      %v535 = vpop.f32.mrb[0].mxu0
      %536 = vdwg.mxu0
      %v537 = vsel %vm490, %v532, -inf
      %538 = vmax.xlane.f32.xlu0 %v537
      %v539 = vpop.xlane.xlu0 %538
      %v540 = vsub.f32 %v532, %v539
      %v541 = vmul.f32 %v540, 1.442695
      %v542 = vpow.pop %v541
      %v543 = vsel %vm490, %v542, 0.0
      %544 = vadd.xlane.f32.xlu0 %v543
      %v545 = vpop.xlane.xlu0 %544
      %v546 = vrcp.pop %v545
      %v547 = vmul.f32 %v542, %v546
      %v548 = vpack.c.bf16 %v547, %v547
      %v550 = vsel %vm490, %v548, 0
      %vm552 = vcmask 1043456
      %v554 = vsel %vm552, %v488, 0
      %556 = vmatprep.subr.bf16.mxu0 0
      %557 = vmatpush1.bf16.msra.mxu0 %v554
      %558 = vmatprep.subr.bf16.mxu0 0
      %559 = vmatpush1.bf16.msra.mxu0 0
      %560 = vmatprep.subr.bf16.mxu0 0
      %561 = vmatpush1.bf16.msra.mxu0 0
      %562 = vmatprep.subr.bf16.mxu0 0
      %563 = vmatpush1.bf16.msra.mxu0 0
      %564 = vmatprep.subr.bf16.mxu0 0
      %565 = vmatpush1.bf16.msra.mxu0 0
      %566 = vmatprep.subr.bf16.mxu0 0
      %567 = vmatpush1.bf16.msra.mxu0 0
      %568 = vmatprep.subr.bf16.mxu0 0
      %569 = vmatpush1.bf16.msra.mxu0 0
      %570 = vmatprep.subr.bf16.mxu0 0
      %571 = vmatpush1.bf16.msra.mxu0 0
      %572 = vmatprep.subr.bf16.mxu0 0
      %573 = vmatpush1.bf16.msra.mxu0 0
      %574 = vmatprep.subr.bf16.mxu0 0
      %575 = vmatpush1.bf16.msra.mxu0 0
      %576 = vmatprep.subr.bf16.mxu0 0
      %577 = vmatpush1.bf16.msra.mxu0 0
      %578 = vmatprep.subr.bf16.mxu0 0
      %579 = vmatpush1.bf16.msra.mxu0 0
      %580 = vmatprep.subr.bf16.mxu0 0
      %581 = vmatpush1.bf16.msra.mxu0 0
      %582 = vmatprep.subr.bf16.mxu0 0
      %583 = vmatpush1.bf16.msra.mxu0 0
      %584 = vmatprep.subr.bf16.mxu0 0
      %585 = vmatpush1.bf16.msra.mxu0 0
      %586 = vmatprep.subr.bf16.mxu0 0
      %587 = vmatpush1.bf16.msra.mxu0 0
      %588 = vmatprep.mubr.bf16.mxu0 0
      %589 = vmatmul.mubr.bf16.gmra.mrb[0].mxu0 %v550
      %v590 = vpop.f32.mrb[0].mxu0
      %v591 = vadd.f32 0.0, %v590
      %v592 = vpop.f32.mrb[0].mxu0
      %v593 = vpop.f32.mrb[0].mxu0
      %v594 = vpop.f32.mrb[0].mxu0
      %595 = vdwg.mxu0
      %v596 = vpack.c.bf16 %v591, %v591
      %v597 = vld [vmem:[%s5] sm:$0xf]
      %v599 = vsel %vm490, %v596, 0
      %v602 = vsel %vm552, %v597, 0
      %604 = vmatprep.subr.bf16.mxu0 0
      %605 = vmatpush1.bf16.msra.mxu0 %v602
      %606 = vmatprep.subr.bf16.mxu0 0
      %607 = vmatpush1.bf16.msra.mxu0 0
      %608 = vmatprep.subr.bf16.mxu0 0
      %609 = vmatpush1.bf16.msra.mxu0 0
      %610 = vmatprep.subr.bf16.mxu0 0
      %611 = vmatpush1.bf16.msra.mxu0 0
      %612 = vmatprep.subr.bf16.mxu0 0
      %613 = vmatpush1.bf16.msra.mxu0 0
      %614 = vmatprep.subr.bf16.mxu0 0
      %615 = vmatpush1.bf16.msra.mxu0 0
      %616 = vmatprep.subr.bf16.mxu0 0
      %617 = vmatpush1.bf16.msra.mxu0 0
      %618 = vmatprep.subr.bf16.mxu0 0
      %619 = vmatpush1.bf16.msra.mxu0 0
      %620 = vmatprep.subr.bf16.mxu0 0
      %621 = vmatpush1.bf16.msra.mxu0 0
      %622 = vmatprep.subr.bf16.mxu0 0
      %623 = vmatpush1.bf16.msra.mxu0 0
      %624 = vmatprep.subr.bf16.mxu0 0
      %625 = vmatpush1.bf16.msra.mxu0 0
      %626 = vmatprep.subr.bf16.mxu0 0
      %627 = vmatpush1.bf16.msra.mxu0 0
      %628 = vmatprep.subr.bf16.mxu0 0
      %629 = vmatpush1.bf16.msra.mxu0 0
      %630 = vmatprep.subr.bf16.mxu0 0
      %631 = vmatpush1.bf16.msra.mxu0 0
      %632 = vmatprep.subr.bf16.mxu0 0
      %633 = vmatpush1.bf16.msra.mxu0 0
      %634 = vmatprep.subr.bf16.mxu0 0
      %635 = vmatpush1.bf16.msra.mxu0 0
      %636 = vmatprep.mubr.bf16.mxu0 0
      %637 = vmatmul.mubr.bf16.gmra.mrb[0].mxu0 %v599
      %v638 = vpop.f32.mrb[0].mxu0
      %v639 = vadd.f32 0.0, %v638
      %v640 = vpop.f32.mrb[0].mxu0
      %v641 = vpop.f32.mrb[0].mxu0
      %v642 = vpop.f32.mrb[0].mxu0
      %643 = vdwg.mxu0
      %v644 = vadd.f32 %v418, %v639
      %s645 = scalar_lea.vmem %s3, 16
      %v646 = vld [vmem:[%s645] sm:$0xf]
      %v647 = vld [vmem:[%s645 + $0x4] sm:$0xf]
      %v648 = vld [vmem:[%s645 + $0x8] sm:$0xf]
      %v649 = vld [vmem:[%s645 + $0xc] sm:$0xf]
      %s650 = scalar_lea.vmem %s4, 1
      %v651 = vld [vmem:[%s650] sm:$0x1]
      %v653 = vlaneseq
      %v654 = vshrl.u32 %v653, 7
      %v655 = vsub.s32 0, %v654
      %v656 = vrot.slane %v651, %v655
      %v662 = vunpack.c.l.b16 %v646
      %v663 = vunpack.c.l.b16 %v647
      %v664 = vunpack.c.l.b16 %v648
      %v665 = vunpack.c.l.b16 %v649
      %v666 = vpack.c.b16 %v663, %v662
      %v667 = vpack.c.b16 %v665, %v664
      %670 = vmatprep.subr.bf16.mxu0 0
      %671 = vmatpush1.bf16.msra.mxu0 %v666
      %672 = vmatprep.subr.bf16.mxu0 0
      %673 = vmatpush1.bf16.msra.mxu0 %v667
      %674 = vmatprep.subr.bf16.mxu0 0
      %675 = vmatpush1.bf16.msra.mxu0 0
      %676 = vmatprep.subr.bf16.mxu0 0
      %677 = vmatpush1.bf16.msra.mxu0 0
      %678 = vmatprep.subr.bf16.mxu0 0
      %679 = vmatpush1.bf16.msra.mxu0 0
      %680 = vmatprep.subr.bf16.mxu0 0
      %681 = vmatpush1.bf16.msra.mxu0 0
      %682 = vmatprep.subr.bf16.mxu0 0
      %683 = vmatpush1.bf16.msra.mxu0 0
      %684 = vmatprep.subr.bf16.mxu0 0
      %685 = vmatpush1.bf16.msra.mxu0 0
      %686 = vmatprep.subr.bf16.mxu0 0
      %687 = vmatpush1.bf16.msra.mxu0 0
      %688 = vmatprep.subr.bf16.mxu0 0
      %689 = vmatpush1.bf16.msra.mxu0 0
      %690 = vmatprep.subr.bf16.mxu0 0
      %691 = vmatpush1.bf16.msra.mxu0 0
      %692 = vmatprep.subr.bf16.mxu0 0
      %693 = vmatpush1.bf16.msra.mxu0 0
      %694 = vmatprep.subr.bf16.mxu0 0
      %695 = vmatpush1.bf16.msra.mxu0 0
      %696 = vmatprep.subr.bf16.mxu0 0
      %697 = vmatpush1.bf16.msra.mxu0 0
      %698 = vmatprep.subr.bf16.mxu0 0
      %699 = vmatpush1.bf16.msra.mxu0 0
      %700 = vmatprep.subr.bf16.mxu0 0
      %701 = vmatpush1.bf16.msra.mxu0 0
      %702 = vmatprep.mubr.bf16.mxu0 0
      %703 = vmatmul.mubr.bf16.gmra.mrb[0].mxu0 %v444
      %v704 = vpop.f32.mrb[0].mxu0
      %v705 = vadd.f32 %v656, %v704
      %v706 = vpop.f32.mrb[0].mxu0
      %v707 = vpop.f32.mrb[0].mxu0
      %v708 = vpop.f32.mrb[0].mxu0
      %709 = vdwg.mxu0
      %v710 = vmul.f32 %v705, 0.35355338
      %s711 = scalar_lea.vmem %s386, 4
      %v712 = vld [vmem:[%s711] sm:$0xf]
      %s713 = scalar_lea.vmem %s391, 4
      %v714 = vld [vmem:[%s713] sm:$0xf]
      %v715 = vpack.c.bf16 %v710, %v710
      %v717 = vsel %vm490, %v715, 0
      %v720 = vsel %vm490, %v712, 0
      %722 = vmatprep.subr.bf16.mxu0 0
      %723 = vmatpush1.bf16.xpose.msra.mxu0 %v720
      %724 = vmatprep.subr.bf16.mxu0 0
      %725 = vmatpush1.bf16.xpose.msra.mxu0 0
      %726 = vmatprep.subr.bf16.mxu0 0
      %727 = vmatpush1.bf16.xpose.msra.mxu0 0
      %728 = vmatprep.subr.bf16.mxu0 0
      %729 = vmatpush1.bf16.xpose.msra.mxu0 0
      %730 = vmatprep.subr.bf16.mxu0 0
      %731 = vmatpush1.bf16.xpose.msra.mxu0 0
      %732 = vmatprep.subr.bf16.mxu0 0
      %733 = vmatpush1.bf16.xpose.msra.mxu0 0
      %734 = vmatprep.subr.bf16.mxu0 0
      %735 = vmatpush1.bf16.xpose.msra.mxu0 0
      %736 = vmatprep.subr.bf16.mxu0 0
      %737 = vmatpush1.bf16.xpose.msra.mxu0 0
      %738 = vmatprep.subr.bf16.mxu0 0
      %739 = vmatpush1.bf16.xpose.msra.mxu0 0
      %740 = vmatprep.subr.bf16.mxu0 0
      %741 = vmatpush1.bf16.xpose.msra.mxu0 0
      %742 = vmatprep.subr.bf16.mxu0 0
      %743 = vmatpush1.bf16.xpose.msra.mxu0 0
      %744 = vmatprep.subr.bf16.mxu0 0
      %745 = vmatpush1.bf16.xpose.msra.mxu0 0
      %746 = vmatprep.subr.bf16.mxu0 0
      %747 = vmatpush1.bf16.xpose.msra.mxu0 0
      %748 = vmatprep.subr.bf16.mxu0 0
      %749 = vmatpush1.bf16.xpose.msra.mxu0 0
      %750 = vmatprep.subr.bf16.mxu0 0
      %751 = vmatpush1.bf16.xpose.msra.mxu0 0
      %752 = vmatprep.subr.bf16.mxu0 0
      %753 = vmatpush1.bf16.xpose.msra.mxu0 0
      %754 = vmatprep.mubr.bf16.mxu0 0
      %755 = vmatmul.mubr.bf16.gmra.mrb[0].mxu0 %v717
      %v756 = vpop.f32.mrb[0].mxu0
      %v757 = vadd.f32 %v410, %v756
      %v758 = vpop.f32.mrb[0].mxu0
      %v759 = vpop.f32.mrb[0].mxu0
      %v760 = vpop.f32.mrb[0].mxu0
      %761 = vdwg.mxu0
      %v762 = vsel %vm490, %v757, -inf
      %763 = vmax.xlane.f32.xlu0 %v762
      %v764 = vpop.xlane.xlu0 %763
      %v765 = vsub.f32 %v757, %v764
      %v766 = vmul.f32 %v765, 1.442695
      %v767 = vpow.pop %v766
      %v768 = vsel %vm490, %v767, 0.0
      %769 = vadd.xlane.f32.xlu0 %v768
      %v770 = vpop.xlane.xlu0 %769
      %v771 = vrcp.pop %v770
      %v772 = vmul.f32 %v767, %v771
      %v773 = vpack.c.bf16 %v772, %v772
      %v775 = vsel %vm490, %v773, 0
      %v778 = vsel %vm552, %v714, 0
      %780 = vmatprep.subr.bf16.mxu0 0
      %781 = vmatpush1.bf16.msra.mxu0 %v778
      %782 = vmatprep.subr.bf16.mxu0 0
      %783 = vmatpush1.bf16.msra.mxu0 0
      %784 = vmatprep.subr.bf16.mxu0 0
      %785 = vmatpush1.bf16.msra.mxu0 0
      %786 = vmatprep.subr.bf16.mxu0 0
      %787 = vmatpush1.bf16.msra.mxu0 0
      %788 = vmatprep.subr.bf16.mxu0 0
      %789 = vmatpush1.bf16.msra.mxu0 0
      %790 = vmatprep.subr.bf16.mxu0 0
      %791 = vmatpush1.bf16.msra.mxu0 0
      %792 = vmatprep.subr.bf16.mxu0 0
      %793 = vmatpush1.bf16.msra.mxu0 0
      %794 = vmatprep.subr.bf16.mxu0 0
      %795 = vmatpush1.bf16.msra.mxu0 0
      %796 = vmatprep.subr.bf16.mxu0 0
      %797 = vmatpush1.bf16.msra.mxu0 0
      %798 = vmatprep.subr.bf16.mxu0 0
      %799 = vmatpush1.bf16.msra.mxu0 0
      %800 = vmatprep.subr.bf16.mxu0 0
      %801 = vmatpush1.bf16.msra.mxu0 0
      %802 = vmatprep.subr.bf16.mxu0 0
      %803 = vmatpush1.bf16.msra.mxu0 0
      %804 = vmatprep.subr.bf16.mxu0 0
      %805 = vmatpush1.bf16.msra.mxu0 0
      %806 = vmatprep.subr.bf16.mxu0 0
      %807 = vmatpush1.bf16.msra.mxu0 0
      %808 = vmatprep.subr.bf16.mxu0 0
      %809 = vmatpush1.bf16.msra.mxu0 0
      %810 = vmatprep.subr.bf16.mxu0 0
      %811 = vmatpush1.bf16.msra.mxu0 0
      %812 = vmatprep.mubr.bf16.mxu0 0
      %813 = vmatmul.mubr.bf16.gmra.mrb[0].mxu0 %v775
      %v814 = vpop.f32.mrb[0].mxu0
      %v815 = vadd.f32 0.0, %v814
      %v816 = vpop.f32.mrb[0].mxu0
      %v817 = vpop.f32.mrb[0].mxu0
      %v818 = vpop.f32.mrb[0].mxu0
      %819 = vdwg.mxu0
      %v820 = vpack.c.bf16 %v815, %v815
      %s821 = scalar_lea.vmem %s5, 4
      %v822 = vld [vmem:[%s821] sm:$0xf]
      %v824 = vsel %vm490, %v820, 0
      %v827 = vsel %vm552, %v822, 0
      %829 = vmatprep.subr.bf16.mxu0 0
      %830 = vmatpush1.bf16.msra.mxu0 %v827
      %831 = vmatprep.subr.bf16.mxu0 0
      %832 = vmatpush1.bf16.msra.mxu0 0
      %833 = vmatprep.subr.bf16.mxu0 0
      %834 = vmatpush1.bf16.msra.mxu0 0
      %835 = vmatprep.subr.bf16.mxu0 0
      %836 = vmatpush1.bf16.msra.mxu0 0
      %837 = vmatprep.subr.bf16.mxu0 0
      %838 = vmatpush1.bf16.msra.mxu0 0
      %839 = vmatprep.subr.bf16.mxu0 0
      %840 = vmatpush1.bf16.msra.mxu0 0
      %841 = vmatprep.subr.bf16.mxu0 0
      %842 = vmatpush1.bf16.msra.mxu0 0
      %843 = vmatprep.subr.bf16.mxu0 0
      %844 = vmatpush1.bf16.msra.mxu0 0
      %845 = vmatprep.subr.bf16.mxu0 0
      %846 = vmatpush1.bf16.msra.mxu0 0
      %847 = vmatprep.subr.bf16.mxu0 0
      %848 = vmatpush1.bf16.msra.mxu0 0
      %849 = vmatprep.subr.bf16.mxu0 0
      %850 = vmatpush1.bf16.msra.mxu0 0
      %851 = vmatprep.subr.bf16.mxu0 0
      %852 = vmatpush1.bf16.msra.mxu0 0
      %853 = vmatprep.subr.bf16.mxu0 0
      %854 = vmatpush1.bf16.msra.mxu0 0
      %855 = vmatprep.subr.bf16.mxu0 0
      %856 = vmatpush1.bf16.msra.mxu0 0
      %857 = vmatprep.subr.bf16.mxu0 0
      %858 = vmatpush1.bf16.msra.mxu0 0
      %859 = vmatprep.subr.bf16.mxu0 0
      %860 = vmatpush1.bf16.msra.mxu0 0
      %861 = vmatprep.mubr.bf16.mxu0 0
      %862 = vmatmul.mubr.bf16.gmra.mrb[0].mxu0 %v824
      %v863 = vpop.f32.mrb[0].mxu0
      %v864 = vadd.f32 0.0, %v863
      %v865 = vpop.f32.mrb[0].mxu0
      %v866 = vpop.f32.mrb[0].mxu0
      %v867 = vpop.f32.mrb[0].mxu0
      %868 = vdwg.mxu0
      %v869 = vadd.f32 %v644, %v864
      %s870 = scalar_lea.vmem %s3, 32
      %v871 = vld [vmem:[%s870] sm:$0xf]
      %v872 = vld [vmem:[%s870 + $0x4] sm:$0xf]
      %v873 = vld [vmem:[%s870 + $0x8] sm:$0xf]
      %v874 = vld [vmem:[%s870 + $0xc] sm:$0xf]
      %s875 = scalar_lea.vmem %s4, 2
      %v876 = vld [vmem:[%s875] sm:$0x1]
      %v878 = vlaneseq
      %v879 = vshrl.u32 %v878, 7
      %v880 = vsub.s32 0, %v879
      %v881 = vrot.slane %v876, %v880
      %v887 = vunpack.c.l.b16 %v871
      %v888 = vunpack.c.l.b16 %v872
      %v889 = vunpack.c.l.b16 %v873
      %v890 = vunpack.c.l.b16 %v874
      %v891 = vpack.c.b16 %v888, %v887
      %v892 = vpack.c.b16 %v890, %v889
      %895 = vmatprep.subr.bf16.mxu0 0
      %896 = vmatpush1.bf16.msra.mxu0 %v891
      %897 = vmatprep.subr.bf16.mxu0 0
      %898 = vmatpush1.bf16.msra.mxu0 %v892
      %899 = vmatprep.subr.bf16.mxu0 0
      %900 = vmatpush1.bf16.msra.mxu0 0
      %901 = vmatprep.subr.bf16.mxu0 0
      %902 = vmatpush1.bf16.msra.mxu0 0
      %903 = vmatprep.subr.bf16.mxu0 0
      %904 = vmatpush1.bf16.msra.mxu0 0
      %905 = vmatprep.subr.bf16.mxu0 0
      %906 = vmatpush1.bf16.msra.mxu0 0
      %907 = vmatprep.subr.bf16.mxu0 0
      %908 = vmatpush1.bf16.msra.mxu0 0
      %909 = vmatprep.subr.bf16.mxu0 0
      %910 = vmatpush1.bf16.msra.mxu0 0
      %911 = vmatprep.subr.bf16.mxu0 0
      %912 = vmatpush1.bf16.msra.mxu0 0
      %913 = vmatprep.subr.bf16.mxu0 0
      %914 = vmatpush1.bf16.msra.mxu0 0
      %915 = vmatprep.subr.bf16.mxu0 0
      %916 = vmatpush1.bf16.msra.mxu0 0
      %917 = vmatprep.subr.bf16.mxu0 0
      %918 = vmatpush1.bf16.msra.mxu0 0
      %919 = vmatprep.subr.bf16.mxu0 0
      %920 = vmatpush1.bf16.msra.mxu0 0
      %921 = vmatprep.subr.bf16.mxu0 0
      %922 = vmatpush1.bf16.msra.mxu0 0
      %923 = vmatprep.subr.bf16.mxu0 0
      %924 = vmatpush1.bf16.msra.mxu0 0
      %925 = vmatprep.subr.bf16.mxu0 0
      %926 = vmatpush1.bf16.msra.mxu0 0
      %927 = vmatprep.mubr.bf16.mxu0 0
      %928 = vmatmul.mubr.bf16.gmra.mrb[0].mxu0 %v444
      %v929 = vpop.f32.mrb[0].mxu0
      %v930 = vadd.f32 %v881, %v929
      %v931 = vpop.f32.mrb[0].mxu0
      %v932 = vpop.f32.mrb[0].mxu0
      %v933 = vpop.f32.mrb[0].mxu0
      %934 = vdwg.mxu0
      %v935 = vmul.f32 %v930, 0.35355338
      %s936 = scalar_lea.vmem %s386, 8
      %v937 = vld [vmem:[%s936] sm:$0xf]
      %s938 = scalar_lea.vmem %s391, 8
      %v939 = vld [vmem:[%s938] sm:$0xf]
      %v940 = vpack.c.bf16 %v935, %v935
      %v942 = vsel %vm490, %v940, 0
      %v945 = vsel %vm490, %v937, 0
      %947 = vmatprep.subr.bf16.mxu0 0
      %948 = vmatpush1.bf16.xpose.msra.mxu0 %v945
      %949 = vmatprep.subr.bf16.mxu0 0
      %950 = vmatpush1.bf16.xpose.msra.mxu0 0
      %951 = vmatprep.subr.bf16.mxu0 0
      %952 = vmatpush1.bf16.xpose.msra.mxu0 0
      %953 = vmatprep.subr.bf16.mxu0 0
      %954 = vmatpush1.bf16.xpose.msra.mxu0 0
      %955 = vmatprep.subr.bf16.mxu0 0
      %956 = vmatpush1.bf16.xpose.msra.mxu0 0
      %957 = vmatprep.subr.bf16.mxu0 0
      %958 = vmatpush1.bf16.xpose.msra.mxu0 0
      %959 = vmatprep.subr.bf16.mxu0 0
      %960 = vmatpush1.bf16.xpose.msra.mxu0 0
      %961 = vmatprep.subr.bf16.mxu0 0
      %962 = vmatpush1.bf16.xpose.msra.mxu0 0
      %963 = vmatprep.subr.bf16.mxu0 0
      %964 = vmatpush1.bf16.xpose.msra.mxu0 0
      %965 = vmatprep.subr.bf16.mxu0 0
      %966 = vmatpush1.bf16.xpose.msra.mxu0 0
      %967 = vmatprep.subr.bf16.mxu0 0
      %968 = vmatpush1.bf16.xpose.msra.mxu0 0
      %969 = vmatprep.subr.bf16.mxu0 0
      %970 = vmatpush1.bf16.xpose.msra.mxu0 0
      %971 = vmatprep.subr.bf16.mxu0 0
      %972 = vmatpush1.bf16.xpose.msra.mxu0 0
      %973 = vmatprep.subr.bf16.mxu0 0
      %974 = vmatpush1.bf16.xpose.msra.mxu0 0
      %975 = vmatprep.subr.bf16.mxu0 0
      %976 = vmatpush1.bf16.xpose.msra.mxu0 0
      %977 = vmatprep.subr.bf16.mxu0 0
      %978 = vmatpush1.bf16.xpose.msra.mxu0 0
      %979 = vmatprep.mubr.bf16.mxu0 0
      %980 = vmatmul.mubr.bf16.gmra.mrb[0].mxu0 %v942
      %v981 = vpop.f32.mrb[0].mxu0
      %v982 = vadd.f32 %v410, %v981
      %v983 = vpop.f32.mrb[0].mxu0
      %v984 = vpop.f32.mrb[0].mxu0
      %v985 = vpop.f32.mrb[0].mxu0
      %986 = vdwg.mxu0
      %v987 = vsel %vm490, %v982, -inf
      %988 = vmax.xlane.f32.xlu0 %v987
      %v989 = vpop.xlane.xlu0 %988
      %v990 = vsub.f32 %v982, %v989
      %v991 = vmul.f32 %v990, 1.442695
      %v992 = vpow.pop %v991
      %v993 = vsel %vm490, %v992, 0.0
      %994 = vadd.xlane.f32.xlu0 %v993
      %v995 = vpop.xlane.xlu0 %994
      %v996 = vrcp.pop %v995
      %v997 = vmul.f32 %v992, %v996
      %v998 = vpack.c.bf16 %v997, %v997
      %v1000 = vsel %vm490, %v998, 0
      %v1003 = vsel %vm552, %v939, 0
      %1005 = vmatprep.subr.bf16.mxu0 0
      %1006 = vmatpush1.bf16.msra.mxu0 %v1003
      %1007 = vmatprep.subr.bf16.mxu0 0
      %1008 = vmatpush1.bf16.msra.mxu0 0
      %1009 = vmatprep.subr.bf16.mxu0 0
      %1010 = vmatpush1.bf16.msra.mxu0 0
      %1011 = vmatprep.subr.bf16.mxu0 0
      %1012 = vmatpush1.bf16.msra.mxu0 0
      %1013 = vmatprep.subr.bf16.mxu0 0
      %1014 = vmatpush1.bf16.msra.mxu0 0
      %1015 = vmatprep.subr.bf16.mxu0 0
      %1016 = vmatpush1.bf16.msra.mxu0 0
      %1017 = vmatprep.subr.bf16.mxu0 0
      %1018 = vmatpush1.bf16.msra.mxu0 0
      %1019 = vmatprep.subr.bf16.mxu0 0
      %1020 = vmatpush1.bf16.msra.mxu0 0
      %1021 = vmatprep.subr.bf16.mxu0 0
      %1022 = vmatpush1.bf16.msra.mxu0 0
      %1023 = vmatprep.subr.bf16.mxu0 0
      %1024 = vmatpush1.bf16.msra.mxu0 0
      %1025 = vmatprep.subr.bf16.mxu0 0
      %1026 = vmatpush1.bf16.msra.mxu0 0
      %1027 = vmatprep.subr.bf16.mxu0 0
      %1028 = vmatpush1.bf16.msra.mxu0 0
      %1029 = vmatprep.subr.bf16.mxu0 0
      %1030 = vmatpush1.bf16.msra.mxu0 0
      %1031 = vmatprep.subr.bf16.mxu0 0
      %1032 = vmatpush1.bf16.msra.mxu0 0
      %1033 = vmatprep.subr.bf16.mxu0 0
      %1034 = vmatpush1.bf16.msra.mxu0 0
      %1035 = vmatprep.subr.bf16.mxu0 0
      %1036 = vmatpush1.bf16.msra.mxu0 0
      %1037 = vmatprep.mubr.bf16.mxu0 0
      %1038 = vmatmul.mubr.bf16.gmra.mrb[0].mxu0 %v1000
      %v1039 = vpop.f32.mrb[0].mxu0
      %v1040 = vadd.f32 0.0, %v1039
      %v1041 = vpop.f32.mrb[0].mxu0
      %v1042 = vpop.f32.mrb[0].mxu0
      %v1043 = vpop.f32.mrb[0].mxu0
      %1044 = vdwg.mxu0
      %v1045 = vpack.c.bf16 %v1040, %v1040
      %s1046 = scalar_lea.vmem %s5, 8
      %v1047 = vld [vmem:[%s1046] sm:$0xf]
      %v1049 = vsel %vm490, %v1045, 0
      %v1052 = vsel %vm552, %v1047, 0
      %1054 = vmatprep.subr.bf16.mxu0 0
      %1055 = vmatpush1.bf16.msra.mxu0 %v1052
      %1056 = vmatprep.subr.bf16.mxu0 0
      %1057 = vmatpush1.bf16.msra.mxu0 0
      %1058 = vmatprep.subr.bf16.mxu0 0
      %1059 = vmatpush1.bf16.msra.mxu0 0
      %1060 = vmatprep.subr.bf16.mxu0 0
      %1061 = vmatpush1.bf16.msra.mxu0 0
      %1062 = vmatprep.subr.bf16.mxu0 0
      %1063 = vmatpush1.bf16.msra.mxu0 0
      %1064 = vmatprep.subr.bf16.mxu0 0
      %1065 = vmatpush1.bf16.msra.mxu0 0
      %1066 = vmatprep.subr.bf16.mxu0 0
      %1067 = vmatpush1.bf16.msra.mxu0 0
      %1068 = vmatprep.subr.bf16.mxu0 0
      %1069 = vmatpush1.bf16.msra.mxu0 0
      %1070 = vmatprep.subr.bf16.mxu0 0
      %1071 = vmatpush1.bf16.msra.mxu0 0
      %1072 = vmatprep.subr.bf16.mxu0 0
      %1073 = vmatpush1.bf16.msra.mxu0 0
      %1074 = vmatprep.subr.bf16.mxu0 0
      %1075 = vmatpush1.bf16.msra.mxu0 0
      %1076 = vmatprep.subr.bf16.mxu0 0
      %1077 = vmatpush1.bf16.msra.mxu0 0
      %1078 = vmatprep.subr.bf16.mxu0 0
      %1079 = vmatpush1.bf16.msra.mxu0 0
      %1080 = vmatprep.subr.bf16.mxu0 0
      %1081 = vmatpush1.bf16.msra.mxu0 0
      %1082 = vmatprep.subr.bf16.mxu0 0
      %1083 = vmatpush1.bf16.msra.mxu0 0
      %1084 = vmatprep.subr.bf16.mxu0 0
      %1085 = vmatpush1.bf16.msra.mxu0 0
      %1086 = vmatprep.mubr.bf16.mxu0 0
      %1087 = vmatmul.mubr.bf16.gmra.mrb[0].mxu0 %v1049
      %v1088 = vpop.f32.mrb[0].mxu0
      %v1089 = vadd.f32 0.0, %v1088
      %v1090 = vpop.f32.mrb[0].mxu0
      %v1091 = vpop.f32.mrb[0].mxu0
      %v1092 = vpop.f32.mrb[0].mxu0
      %1093 = vdwg.mxu0
      %v1094 = vadd.f32 %v869, %v1089
      %s1095 = scalar_lea.vmem %s3, 48
      %v1096 = vld [vmem:[%s1095] sm:$0xf]
      %v1097 = vld [vmem:[%s1095 + $0x4] sm:$0xf]
      %v1098 = vld [vmem:[%s1095 + $0x8] sm:$0xf]
      %v1099 = vld [vmem:[%s1095 + $0xc] sm:$0xf]
      %s1100 = scalar_lea.vmem %s4, 3
      %v1101 = vld [vmem:[%s1100] sm:$0x1]
      %v1103 = vlaneseq
      %v1104 = vshrl.u32 %v1103, 7
      %v1105 = vsub.s32 0, %v1104
      %v1106 = vrot.slane %v1101, %v1105
      %v1112 = vunpack.c.l.b16 %v1096
      %v1113 = vunpack.c.l.b16 %v1097
      %v1114 = vunpack.c.l.b16 %v1098
      %v1115 = vunpack.c.l.b16 %v1099
      %v1116 = vpack.c.b16 %v1113, %v1112
      %v1117 = vpack.c.b16 %v1115, %v1114
      %1120 = vmatprep.subr.bf16.mxu0 0
      %1121 = vmatpush1.bf16.msra.mxu0 %v1116
      %1122 = vmatprep.subr.bf16.mxu0 0
      %1123 = vmatpush1.bf16.msra.mxu0 %v1117
      %1124 = vmatprep.subr.bf16.mxu0 0
      %1125 = vmatpush1.bf16.msra.mxu0 0
      %1126 = vmatprep.subr.bf16.mxu0 0
      %1127 = vmatpush1.bf16.msra.mxu0 0
      %1128 = vmatprep.subr.bf16.mxu0 0
      %1129 = vmatpush1.bf16.msra.mxu0 0
      %1130 = vmatprep.subr.bf16.mxu0 0
      %1131 = vmatpush1.bf16.msra.mxu0 0
      %1132 = vmatprep.subr.bf16.mxu0 0
      %1133 = vmatpush1.bf16.msra.mxu0 0
      %1134 = vmatprep.subr.bf16.mxu0 0
      %1135 = vmatpush1.bf16.msra.mxu0 0
      %1136 = vmatprep.subr.bf16.mxu0 0
      %1137 = vmatpush1.bf16.msra.mxu0 0
      %1138 = vmatprep.subr.bf16.mxu0 0
      %1139 = vmatpush1.bf16.msra.mxu0 0
      %1140 = vmatprep.subr.bf16.mxu0 0
      %1141 = vmatpush1.bf16.msra.mxu0 0
      %1142 = vmatprep.subr.bf16.mxu0 0
      %1143 = vmatpush1.bf16.msra.mxu0 0
      %1144 = vmatprep.subr.bf16.mxu0 0
      %1145 = vmatpush1.bf16.msra.mxu0 0
      %1146 = vmatprep.subr.bf16.mxu0 0
      %1147 = vmatpush1.bf16.msra.mxu0 0
      %1148 = vmatprep.subr.bf16.mxu0 0
      %1149 = vmatpush1.bf16.msra.mxu0 0
      %1150 = vmatprep.subr.bf16.mxu0 0
      %1151 = vmatpush1.bf16.msra.mxu0 0
      %1152 = vmatprep.mubr.bf16.mxu0 0
      %1153 = vmatmul.mubr.bf16.gmra.mrb[0].mxu0 %v444
      %v1154 = vpop.f32.mrb[0].mxu0
      %v1155 = vadd.f32 %v1106, %v1154
      %v1156 = vpop.f32.mrb[0].mxu0
      %v1157 = vpop.f32.mrb[0].mxu0
      %v1158 = vpop.f32.mrb[0].mxu0
      %1159 = vdwg.mxu0
      %v1160 = vmul.f32 %v1155, 0.35355338
      %s1161 = scalar_lea.vmem %s386, 12
      %v1162 = vld [vmem:[%s1161] sm:$0xf]
      %s1163 = scalar_lea.vmem %s391, 12
      %v1164 = vld [vmem:[%s1163] sm:$0xf]
      %v1165 = vpack.c.bf16 %v1160, %v1160
      %v1167 = vsel %vm490, %v1165, 0
      %v1170 = vsel %vm490, %v1162, 0
      %1172 = vmatprep.subr.bf16.mxu0 0
      %1173 = vmatpush1.bf16.xpose.msra.mxu0 %v1170
      %1174 = vmatprep.subr.bf16.mxu0 0
      %1175 = vmatpush1.bf16.xpose.msra.mxu0 0
      %1176 = vmatprep.subr.bf16.mxu0 0
      %1177 = vmatpush1.bf16.xpose.msra.mxu0 0
      %1178 = vmatprep.subr.bf16.mxu0 0
      %1179 = vmatpush1.bf16.xpose.msra.mxu0 0
      %1180 = vmatprep.subr.bf16.mxu0 0
      %1181 = vmatpush1.bf16.xpose.msra.mxu0 0
      %1182 = vmatprep.subr.bf16.mxu0 0
      %1183 = vmatpush1.bf16.xpose.msra.mxu0 0
      %1184 = vmatprep.subr.bf16.mxu0 0
      %1185 = vmatpush1.bf16.xpose.msra.mxu0 0
      %1186 = vmatprep.subr.bf16.mxu0 0
      %1187 = vmatpush1.bf16.xpose.msra.mxu0 0
      %1188 = vmatprep.subr.bf16.mxu0 0
      %1189 = vmatpush1.bf16.xpose.msra.mxu0 0
      %1190 = vmatprep.subr.bf16.mxu0 0
      %1191 = vmatpush1.bf16.xpose.msra.mxu0 0
      %1192 = vmatprep.subr.bf16.mxu0 0
      %1193 = vmatpush1.bf16.xpose.msra.mxu0 0
      %1194 = vmatprep.subr.bf16.mxu0 0
      %1195 = vmatpush1.bf16.xpose.msra.mxu0 0
      %1196 = vmatprep.subr.bf16.mxu0 0
      %1197 = vmatpush1.bf16.xpose.msra.mxu0 0
      %1198 = vmatprep.subr.bf16.mxu0 0
      %1199 = vmatpush1.bf16.xpose.msra.mxu0 0
      %1200 = vmatprep.subr.bf16.mxu0 0
      %1201 = vmatpush1.bf16.xpose.msra.mxu0 0
      %1202 = vmatprep.subr.bf16.mxu0 0
      %1203 = vmatpush1.bf16.xpose.msra.mxu0 0
      %1204 = vmatprep.mubr.bf16.mxu0 0
      %1205 = vmatmul.mubr.bf16.gmra.mrb[0].mxu0 %v1167
      %v1206 = vpop.f32.mrb[0].mxu0
      %v1207 = vadd.f32 %v410, %v1206
      %v1208 = vpop.f32.mrb[0].mxu0
      %v1209 = vpop.f32.mrb[0].mxu0
      %v1210 = vpop.f32.mrb[0].mxu0
      %1211 = vdwg.mxu0
      %v1212 = vsel %vm490, %v1207, -inf
      %1213 = vmax.xlane.f32.xlu0 %v1212
      %v1214 = vpop.xlane.xlu0 %1213
      %v1215 = vsub.f32 %v1207, %v1214
      %v1216 = vmul.f32 %v1215, 1.442695
      %v1217 = vpow.pop %v1216
      %v1218 = vsel %vm490, %v1217, 0.0
      %1219 = vadd.xlane.f32.xlu0 %v1218
      %v1220 = vpop.xlane.xlu0 %1219
      %v1221 = vrcp.pop %v1220
      %v1222 = vmul.f32 %v1217, %v1221
      %v1223 = vpack.c.bf16 %v1222, %v1222
      %v1225 = vsel %vm490, %v1223, 0
      %v1228 = vsel %vm552, %v1164, 0
      %1230 = vmatprep.subr.bf16.mxu0 0
      %1231 = vmatpush1.bf16.msra.mxu0 %v1228
      %1232 = vmatprep.subr.bf16.mxu0 0
      %1233 = vmatpush1.bf16.msra.mxu0 0
      %1234 = vmatprep.subr.bf16.mxu0 0
      %1235 = vmatpush1.bf16.msra.mxu0 0
      %1236 = vmatprep.subr.bf16.mxu0 0
      %1237 = vmatpush1.bf16.msra.mxu0 0
      %1238 = vmatprep.subr.bf16.mxu0 0
      %1239 = vmatpush1.bf16.msra.mxu0 0
      %1240 = vmatprep.subr.bf16.mxu0 0
      %1241 = vmatpush1.bf16.msra.mxu0 0
      %1242 = vmatprep.subr.bf16.mxu0 0
      %1243 = vmatpush1.bf16.msra.mxu0 0
      %1244 = vmatprep.subr.bf16.mxu0 0
      %1245 = vmatpush1.bf16.msra.mxu0 0
      %1246 = vmatprep.subr.bf16.mxu0 0
      %1247 = vmatpush1.bf16.msra.mxu0 0
      %1248 = vmatprep.subr.bf16.mxu0 0
      %1249 = vmatpush1.bf16.msra.mxu0 0
      %1250 = vmatprep.subr.bf16.mxu0 0
      %1251 = vmatpush1.bf16.msra.mxu0 0
      %1252 = vmatprep.subr.bf16.mxu0 0
      %1253 = vmatpush1.bf16.msra.mxu0 0
      %1254 = vmatprep.subr.bf16.mxu0 0
      %1255 = vmatpush1.bf16.msra.mxu0 0
      %1256 = vmatprep.subr.bf16.mxu0 0
      %1257 = vmatpush1.bf16.msra.mxu0 0
      %1258 = vmatprep.subr.bf16.mxu0 0
      %1259 = vmatpush1.bf16.msra.mxu0 0
      %1260 = vmatprep.subr.bf16.mxu0 0
      %1261 = vmatpush1.bf16.msra.mxu0 0
      %1262 = vmatprep.mubr.bf16.mxu0 0
      %1263 = vmatmul.mubr.bf16.gmra.mrb[0].mxu0 %v1225
      %v1264 = vpop.f32.mrb[0].mxu0
      %v1265 = vadd.f32 0.0, %v1264
      %v1266 = vpop.f32.mrb[0].mxu0
      %v1267 = vpop.f32.mrb[0].mxu0
      %v1268 = vpop.f32.mrb[0].mxu0
      %1269 = vdwg.mxu0
      %v1270 = vpack.c.bf16 %v1265, %v1265
      %s1271 = scalar_lea.vmem %s5, 12
      %v1272 = vld [vmem:[%s1271] sm:$0xf]
      %v1274 = vsel %vm490, %v1270, 0
      %v1277 = vsel %vm552, %v1272, 0
      %1279 = vmatprep.subr.bf16.mxu0 0
      %1280 = vmatpush1.bf16.msra.mxu0 %v1277
      %1281 = vmatprep.subr.bf16.mxu0 0
      %1282 = vmatpush1.bf16.msra.mxu0 0
      %1283 = vmatprep.subr.bf16.mxu0 0
      %1284 = vmatpush1.bf16.msra.mxu0 0
      %1285 = vmatprep.subr.bf16.mxu0 0
      %1286 = vmatpush1.bf16.msra.mxu0 0
      %1287 = vmatprep.subr.bf16.mxu0 0
      %1288 = vmatpush1.bf16.msra.mxu0 0
      %1289 = vmatprep.subr.bf16.mxu0 0
      %1290 = vmatpush1.bf16.msra.mxu0 0
      %1291 = vmatprep.subr.bf16.mxu0 0
      %1292 = vmatpush1.bf16.msra.mxu0 0
      %1293 = vmatprep.subr.bf16.mxu0 0
      %1294 = vmatpush1.bf16.msra.mxu0 0
      %1295 = vmatprep.subr.bf16.mxu0 0
      %1296 = vmatpush1.bf16.msra.mxu0 0
      %1297 = vmatprep.subr.bf16.mxu0 0
      %1298 = vmatpush1.bf16.msra.mxu0 0
      %1299 = vmatprep.subr.bf16.mxu0 0
      %1300 = vmatpush1.bf16.msra.mxu0 0
      %1301 = vmatprep.subr.bf16.mxu0 0
      %1302 = vmatpush1.bf16.msra.mxu0 0
      %1303 = vmatprep.subr.bf16.mxu0 0
      %1304 = vmatpush1.bf16.msra.mxu0 0
      %1305 = vmatprep.subr.bf16.mxu0 0
      %1306 = vmatpush1.bf16.msra.mxu0 0
      %1307 = vmatprep.subr.bf16.mxu0 0
      %1308 = vmatpush1.bf16.msra.mxu0 0
      %1309 = vmatprep.subr.bf16.mxu0 0
      %1310 = vmatpush1.bf16.msra.mxu0 0
      %1311 = vmatprep.mubr.bf16.mxu0 0
      %1312 = vmatmul.mubr.bf16.gmra.mrb[0].mxu0 %v1274
      %v1313 = vpop.f32.mrb[0].mxu0
      %v1314 = vadd.f32 0.0, %v1313
      %v1315 = vpop.f32.mrb[0].mxu0
      %v1316 = vpop.f32.mrb[0].mxu0
      %v1317 = vpop.f32.mrb[0].mxu0
      %1318 = vdwg.mxu0
      %v1319 = vadd.f32 %v1094, %v1314
      %v1320 = vld [vmem:[%s7] sm:$0x1]
      %v1321 = vld [vmem:[%s8] sm:$0x1]
      %v1322 = vsel %vm442, %v1319, 0.0
      %1323 = vadd.xlane.f32.xlu0 %v1322
      %v1324 = vpop.xlane.xlu0 %1323
      %v1325 = vrcp.pop 32.0
      %v1326 = vmul.f32 %v1324, %v1325
      %v1327 = vsub.f32 %v1319, %v1326
      %v1328 = vmul.f32 %v1327, %v1327
      %v1329 = vsel %vm442, %v1328, 0.0
      %1330 = vadd.xlane.f32.xlu0 %v1329
      %v1331 = vpop.xlane.xlu0 %1330
      %v1332 = vmul.f32 %v1331, %v1325
      %v1333 = vadd.f32 %v1332, 1e-05
      %v1334 = vrsqrt.pop %v1333
      %v1335 = vmul.f32 %v1327, %v1334
      %v1337 = vlaneseq
      %v1338 = vshrl.u32 %v1337, 7
      %v1339 = vsub.s32 0, %v1338
      %v1340 = vrot.slane %v1320, %v1339
      %v1342 = vmul.f32 %v1335, %v1340
      %v1344 = vlaneseq
      %v1345 = vshrl.u32 %v1344, 7
      %v1346 = vsub.s32 0, %v1345
      %v1347 = vrot.slane %v1321, %v1346
      %v1349 = vadd.f32 %v1342, %v1347
      %1350 = vst.msk [vmem:[%s398] sm:$0xff] %vm442, %v1349
      %p1351 = scmp.lt.s32.totalorder %s24, 1
      %s1352 = scalar_select %p1351, %s24, 1
      %p1353 = scmp.lt.s32.totalorder %s25, 0
      %s1354 = scalar_select %p1353, %s25, 0
      %s1355 = sadd.s32 %s1354, %s1352
      %s1356 = smul.addr %s1355, 8
      %s1357 = scalar_lea.vmem %s9, %s1356
      // Predicated region
      $region57: #{decoder_layer.6} parent=55 // pred_check
        %p1358 = pneg %p258
      $region58: #{decoder_layer.6} parent=55 // pred_check_branch
        %1360 = sbr.rel (%p1358) target = $region60
      $region59: #{decoder_layer.6} parent=55 // pred_region
        _
      $region60: #{decoder_layer.6} parent=55 // pred_fallthru
        _
    $region56: #{decoder_layer.6} parent=5 // pred_fallthru
      _
    %p1361 = scmp.le.s32.totalorder 2, %s15
    // Predicated region
    $region61: #{decoder_layer.6} parent=5 // pred_check
      %p1362 = pneg %p1361
    $region62: #{decoder_layer.6} parent=5 // pred_check_branch
      %1364 = sbr.rel (%p1362) target = $region64
    $region63: #{decoder_layer.6} parent=5 // pred_region
      %s1365 = ssub.s32 %s15, 2
      // Predicated region
      $region65: #{decoder_layer.6} parent=63 // pred_check
        %p1366 = pneg %p264
      $region66: #{decoder_layer.6} parent=63 // pred_check_branch
        %1368 = sbr.rel (%p1366) target = $region68
      $region67: #{decoder_layer.6} parent=63 // pred_region
        %p1369 = scmp.lt.s32.totalorder %s26, 1
        %s1370 = scalar_select %p1369, %s26, 1
        %p1371 = scmp.lt.s32.totalorder %s27, 0
        %s1372 = scalar_select %p1371, %s27, 0
        %s1373 = sadd.s32 %s1372, %s1370
        %s1374 = smul.addr %s1373, 8
        %s1375 = scalar_lea.vmem %s9, %s1374
      $region68: #{decoder_layer.6} parent=63 // pred_fallthru
        _
    $region64: #{decoder_layer.6} parent=5 // pred_fallthru
      _
  $region6: #{decoder_layer.6} parent=0 // loop_footer
    %s19 = sadd.s32 1, %s15
  $region7: #{decoder_layer.6} parent=0 // loop_footer_branch
    %14 = sbr.rel target = $region3
  $region8: #{decoder_layer.6} parent=0 // loop_exit
    _

// kernel: decoder_layer.9
$region0: #{decoder_layer.9}
  #allocation0 [shape = 'u32[]', space=smem, size = 0x4, offset = 0x4, fixed_abs, tag = 'smem constant byte address 0x4 - core index']
  #allocation1 [shape = 'u32[144,128]{1,0:T(1,128)}', space=vmem, size = 0x12000, scoped, tag = 'internal scratch']
  %s0 = inlined_call_operand.vmem [shape: f32[16,32], index: 0, kind: input, shape index: {}]
  %s1 = inlined_call_operand.vmem [shape: bf16[32,64], index: 1, kind: input, shape index: {}]
  %s2 = inlined_call_operand.vmem [shape: f32[1,64], index: 2, kind: input, shape index: {}]
  %s3 = inlined_call_operand.vmem [shape: bf16[64,32], index: 3, kind: input, shape index: {}]
  %s4 = inlined_call_operand.vmem [shape: f32[1,32], index: 4, kind: input, shape index: {}]
  %s5 = inlined_call_operand.vmem [shape: f32[1,32], index: 5, kind: input, shape index: {}]
  %s6 = inlined_call_operand.vmem [shape: f32[1,32], index: 6, kind: input, shape index: {}]
  %s7 = inlined_call_operand.hbm [shape: f32[16,32], index: 7, kind: output, shape index: {}]
  %s8 = sld [smem:[#allocation0]]
  $region38: #{decoder_layer.9} parent=0
    _
  %s10 = ssub.s32 1, %s8
  %s11 = scalar_select 0, %s10, %s8
  $region1: #{decoder_layer.9} parent=0
    #allocation2 [shape = 'u8[8192]{0}', space=vmem, size = 0x2000, scoped, tag = 'output window, operand 0, single buffered']
    #allocation3 [shape = 's32[1]{0}', space=sflag, size = 0x4, scoped, tag = 'scoped memory for decoder_layer.9']
    %12 = vsyncpa [#allocation3], 0
    // Predicated region
    $region2: #{decoder_layer.9} parent=1 // pred_check
      _
    $region3: #{decoder_layer.9} parent=1 // pred_check_branch
      %14 = sbr.rel (0) target = $region5
    $region4: #{decoder_layer.9} parent=1 // pred_region
      _
    $region5: #{decoder_layer.9} parent=1 // pred_fallthru
      _
    // Predicated region
    $region6: #{decoder_layer.9} parent=1 // pred_check
      _
    $region7: #{decoder_layer.9} parent=1 // pred_check_branch
      %16 = sbr.rel (0) target = $region9
    $region8: #{decoder_layer.9} parent=1 // pred_region
      _
    $region9: #{decoder_layer.9} parent=1 // pred_fallthru
      _
    // Predicated region
    $region10: #{decoder_layer.9} parent=1 // pred_check
      _
    $region11: #{decoder_layer.9} parent=1 // pred_check_branch
      %18 = sbr.rel (0) target = $region13
    $region12: #{decoder_layer.9} parent=1 // pred_region
      _
    $region13: #{decoder_layer.9} parent=1 // pred_fallthru
      _
    // Predicated region
    $region14: #{decoder_layer.9} parent=1 // pred_check
      _
    $region15: #{decoder_layer.9} parent=1 // pred_check_branch
      %20 = sbr.rel (0) target = $region17
    $region16: #{decoder_layer.9} parent=1 // pred_region
      _
    $region17: #{decoder_layer.9} parent=1 // pred_fallthru
      _
    // Predicated region
    $region18: #{decoder_layer.9} parent=1 // pred_check
      _
    $region19: #{decoder_layer.9} parent=1 // pred_check_branch
      %22 = sbr.rel (0) target = $region21
    $region20: #{decoder_layer.9} parent=1 // pred_region
      _
    $region21: #{decoder_layer.9} parent=1 // pred_fallthru
      _
    // Predicated region
    $region22: #{decoder_layer.9} parent=1 // pred_check
      _
    $region23: #{decoder_layer.9} parent=1 // pred_check_branch
      %24 = sbr.rel (0) target = $region25
    $region24: #{decoder_layer.9} parent=1 // pred_region
      _
    $region25: #{decoder_layer.9} parent=1 // pred_fallthru
      _
    // Predicated region
    $region26: #{decoder_layer.9} parent=1 // pred_check
      _
    $region27: #{decoder_layer.9} parent=1 // pred_check_branch
      %26 = sbr.rel (0) target = $region29
    $region28: #{decoder_layer.9} parent=1 // pred_region
      _
    $region29: #{decoder_layer.9} parent=1 // pred_fallthru
      _
    %v28 = vld [vmem:[%s0] sm:$0xff]
    %v29 = vld [vmem:[%s0 + $0x8] sm:$0xff]
    %v30 = vpack.c.bf16 %v29, %v28
    %v31 = vld [vmem:[%s1] sm:$0xf]
    %v32 = vld [vmem:[%s1 + $0x4] sm:$0xf]
    %v33 = vld [vmem:[%s1 + $0x8] sm:$0xf]
    %v34 = vld [vmem:[%s1 + $0xc] sm:$0xf]
    %v35 = vld [vmem:[%s2] sm:$0x1]
    %v37 = vlaneseq
    %v38 = vshrl.u32 %v37, 7
    %v39 = vsub.s32 0, %v38
    %v40 = vrot.slane %v35, %v39
    %v46 = vunpack.c.l.b16 %v31
    %v47 = vunpack.c.l.b16 %v32
    %v48 = vunpack.c.l.b16 %v33
    %v49 = vunpack.c.l.b16 %v34
    %v50 = vpack.c.b16 %v47, %v46
    %v51 = vpack.c.b16 %v49, %v48
    %vm54 = vcmask 261120
    %v56 = vsel %vm54, %v30, 0
    %58 = vmatprep.subr.bf16.mxu0 0
    %59 = vmatpush1.bf16.msra.mxu0 %v50
    %60 = vmatprep.subr.bf16.mxu0 0
    %61 = vmatpush1.bf16.msra.mxu0 %v51
    %62 = vmatprep.subr.bf16.mxu0 0
    %63 = vmatpush1.bf16.msra.mxu0 0
    %64 = vmatprep.subr.bf16.mxu0 0
    %65 = vmatpush1.bf16.msra.mxu0 0
    %66 = vmatprep.subr.bf16.mxu0 0
    %67 = vmatpush1.bf16.msra.mxu0 0
    %68 = vmatprep.subr.bf16.mxu0 0
    %69 = vmatpush1.bf16.msra.mxu0 0
    %70 = vmatprep.subr.bf16.mxu0 0
    %71 = vmatpush1.bf16.msra.mxu0 0
    %72 = vmatprep.subr.bf16.mxu0 0
    %73 = vmatpush1.bf16.msra.mxu0 0
    %74 = vmatprep.subr.bf16.mxu0 0
    %75 = vmatpush1.bf16.msra.mxu0 0
    %76 = vmatprep.subr.bf16.mxu0 0
    %77 = vmatpush1.bf16.msra.mxu0 0
    %78 = vmatprep.subr.bf16.mxu0 0
    %79 = vmatpush1.bf16.msra.mxu0 0
    %80 = vmatprep.subr.bf16.mxu0 0
    %81 = vmatpush1.bf16.msra.mxu0 0
    %82 = vmatprep.subr.bf16.mxu0 0
    %83 = vmatpush1.bf16.msra.mxu0 0
    %84 = vmatprep.subr.bf16.mxu0 0
    %85 = vmatpush1.bf16.msra.mxu0 0
    %86 = vmatprep.subr.bf16.mxu0 0
    %87 = vmatpush1.bf16.msra.mxu0 0
    %88 = vmatprep.subr.bf16.mxu0 0
    %89 = vmatpush1.bf16.msra.mxu0 0
    %90 = vmatprep.mubr.bf16.mxu0 0
    %91 = vmatmul.mubr.bf16.gmra.mrb[0].mxu0 %v56
    %v92 = vpop.f32.mrb[0].mxu0
    %v93 = vadd.f32 %v40, %v92
    %v94 = vpop.f32.mrb[0].mxu0
    %v95 = vpop.f32.mrb[0].mxu0
    %v96 = vadd.f32 %v40, %v95
    %v97 = vpop.f32.mrb[0].mxu0
    %98 = vdwg.mxu0
    %v99 = vmax.f32 %v93, 0.0
    %v100 = vmax.f32 %v96, 0.0
    %v101 = vpack.c.bf16 %v100, %v99
    %v102 = vld [vmem:[%s3] sm:$0xf]
    %v103 = vld [vmem:[%s3 + $0x4] sm:$0xf]
    %v104 = vld [vmem:[%s3 + $0x8] sm:$0xf]
    %v105 = vld [vmem:[%s3 + $0xc] sm:$0xf]
    %v106 = vld [vmem:[%s3 + $0x10] sm:$0xf]
    %v107 = vld [vmem:[%s3 + $0x14] sm:$0xf]
    %v108 = vld [vmem:[%s3 + $0x18] sm:$0xf]
    %v109 = vld [vmem:[%s3 + $0x1c] sm:$0xf]
    %v110 = vld [vmem:[%s4] sm:$0x1]
    %v112 = vlaneseq
    %v113 = vshrl.u32 %v112, 7
    %v114 = vsub.s32 0, %v113
    %v115 = vrot.slane %v110, %v114
    %v125 = vunpack.c.l.b16 %v102
    %v126 = vunpack.c.l.b16 %v103
    %v127 = vunpack.c.l.b16 %v104
    %v128 = vunpack.c.l.b16 %v105
    %v129 = vunpack.c.l.b16 %v106
    %v130 = vunpack.c.l.b16 %v107
    %v131 = vunpack.c.l.b16 %v108
    %v132 = vunpack.c.l.b16 %v109
    %v133 = vpack.c.b16 %v126, %v125
    %v134 = vpack.c.b16 %v128, %v127
    %v135 = vpack.c.b16 %v130, %v129
    %v136 = vpack.c.b16 %v132, %v131
    %vm141 = vcmask 523264
    %v143 = vsel %vm141, %v101, 0
    %145 = vmatprep.subr.bf16.mxu0 0
    %146 = vmatpush1.bf16.msra.mxu0 %v133
    %147 = vmatprep.subr.bf16.mxu0 0
    %148 = vmatpush1.bf16.msra.mxu0 %v134
    %149 = vmatprep.subr.bf16.mxu0 0
    %150 = vmatpush1.bf16.msra.mxu0 %v135
    %151 = vmatprep.subr.bf16.mxu0 0
    %152 = vmatpush1.bf16.msra.mxu0 %v136
    %153 = vmatprep.subr.bf16.mxu0 0
    %154 = vmatpush1.bf16.msra.mxu0 0
    %155 = vmatprep.subr.bf16.mxu0 0
    %156 = vmatpush1.bf16.msra.mxu0 0
    %157 = vmatprep.subr.bf16.mxu0 0
    %158 = vmatpush1.bf16.msra.mxu0 0
    %159 = vmatprep.subr.bf16.mxu0 0
    %160 = vmatpush1.bf16.msra.mxu0 0
    %161 = vmatprep.subr.bf16.mxu0 0
    %162 = vmatpush1.bf16.msra.mxu0 0
    %163 = vmatprep.subr.bf16.mxu0 0
    %164 = vmatpush1.bf16.msra.mxu0 0
    %165 = vmatprep.subr.bf16.mxu0 0
    %166 = vmatpush1.bf16.msra.mxu0 0
    %167 = vmatprep.subr.bf16.mxu0 0
    %168 = vmatpush1.bf16.msra.mxu0 0
    %169 = vmatprep.subr.bf16.mxu0 0
    %170 = vmatpush1.bf16.msra.mxu0 0
    %171 = vmatprep.subr.bf16.mxu0 0
    %172 = vmatpush1.bf16.msra.mxu0 0
    %173 = vmatprep.subr.bf16.mxu0 0
    %174 = vmatpush1.bf16.msra.mxu0 0
    %175 = vmatprep.subr.bf16.mxu0 0
    %176 = vmatpush1.bf16.msra.mxu0 0
    %177 = vmatprep.mubr.bf16.mxu0 0
    %178 = vmatmul.mubr.bf16.gmra.mrb[0].mxu0 %v143
    %v179 = vpop.f32.mrb[0].mxu0
    %v180 = vadd.f32 %v115, %v179
    %v181 = vpop.f32.mrb[0].mxu0
    %v182 = vpop.f32.mrb[0].mxu0
    %v183 = vadd.f32 %v115, %v182
    %v184 = vpop.f32.mrb[0].mxu0
    %185 = vdwg.mxu0
    %v186 = vadd.f32 %v180, %v28
    %v187 = vadd.f32 %v183, %v29
    %v188 = vld [vmem:[%s5] sm:$0x1]
    %v189 = vld [vmem:[%s6] sm:$0x1]
    %v190 = vsel %vm54, %v186, 0.0
    %191 = vadd.xlane.f32.xlu0 %v190
    %v192 = vpop.xlane.xlu0 %191
    %v193 = vsel %vm54, %v187, 0.0
    %194 = vadd.xlane.f32.xlu0 %v193
    %v195 = vpop.xlane.xlu0 %194
    %v196 = vrcp.pop 32.0
    %v197 = vmul.f32 %v192, %v196
    %v198 = vmul.f32 %v195, %v196
    %v199 = vsub.f32 %v186, %v197
    %v200 = vsub.f32 %v187, %v198
    %v201 = vmul.f32 %v199, %v199
    %v202 = vmul.f32 %v200, %v200
    %v203 = vsel %vm54, %v201, 0.0
    %204 = vadd.xlane.f32.xlu0 %v203
    %v205 = vpop.xlane.xlu0 %204
    %v206 = vsel %vm54, %v202, 0.0
    %207 = vadd.xlane.f32.xlu0 %v206
    %v208 = vpop.xlane.xlu0 %207
    %v209 = vmul.f32 %v205, %v196
    %v210 = vmul.f32 %v208, %v196
    %v211 = vadd.f32 %v209, 1e-05
    %v212 = vadd.f32 %v210, 1e-05
    %v213 = vrsqrt.pop %v211
    %v214 = vrsqrt.pop %v212
    %v215 = vmul.f32 %v199, %v213
    %v216 = vmul.f32 %v200, %v214
    %v218 = vlaneseq
    %v219 = vshrl.u32 %v218, 7
    %v220 = vsub.s32 0, %v219
    %v221 = vrot.slane %v188, %v220
    %v223 = vmul.f32 %v215, %v221
    %v224 = vmul.f32 %v216, %v221
    %v226 = vlaneseq
    %v227 = vshrl.u32 %v226, 7
    %v228 = vsub.s32 0, %v227
    %v229 = vrot.slane %v189, %v228
    %v231 = vadd.f32 %v223, %v229
    %v232 = vadd.f32 %v224, %v229
    %233 = vst.msk [vmem:[#allocation2] sm:$0xff] %vm54, %v231
    %234 = vst.msk [vmem:[#allocation2 + $0x8] sm:$0xff] %vm54, %v232
    // Predicated region
    $region30: #{decoder_layer.9} parent=1 // pred_check
      _
    $region31: #{decoder_layer.9} parent=1 // pred_check_branch
      %236 = sbr.rel (0) target = $region33
    $region32: #{decoder_layer.9} parent=1 // pred_region
      %s238 = ssub.s32 256, 256
      %239 = vsyncadd [#allocation3], %s238
      %s240 = sshll.u32 [#allocation2], 4
      %s241 = int_to_ptr.vmem [resolvable:$true] %s240
      %246 = dma.vmem_to_hbm [thread:$0]  %s241, 256, %s7, [#allocation3], 128, 128, 8
    $region33: #{decoder_layer.9} parent=1 // pred_fallthru
      _
    // Predicated region
    $region34: #{decoder_layer.9} parent=1 // pred_check
      _
    $region35: #{decoder_layer.9} parent=1 // pred_check_branch
      %248 = sbr.rel (0) target = $region37
    $region36: #{decoder_layer.9} parent=1 // pred_region
      %249 = dma.done [#allocation3], 256
    $region37: #{decoder_layer.9} parent=1 // pred_fallthru
      _
    %250 = vsyncpa [#allocation3], 1

</llo_original>
